<compile_context>
chip_gen: v6e
topology: v6e:2x2x1
jax: 0.10.0
libtpu: 0.0.40
codegen_flags: <defaults>
</compile_context>

<pallas_src>
import math

import jax
import jax.numpy as jnp
from jax.experimental import pallas as pl
from jax.experimental.pallas import tpu as pltpu


# ----------------------------------------------------------------------------
# Pallas kernels
# ----------------------------------------------------------------------------
def _silu(x):
    return x * jax.nn.sigmoid(x)          # sigmoid -> EUP, mul -> VPU


def _lc0_gather_kernel(snp_ref, w_ref, o_ref):
    """LCL0 applied to the one-hot input == gather/sum of weight rows selected
    by the SNP codes (no one-hot ever materialized).

    snp_ref: (1, m1, T) int32   SNP codes, window-position-major
    w_ref:   (m1*C, O, 1) f32   locally-connected weight
    o_ref:   (1, O, T) f32
    """
    snp = snp_ref[0]                                   # (m1, T)
    m1 = snp.shape[0]
    K = w_ref.shape[0]
    C = K // m1
    acc = jnp.zeros(o_ref.shape[1:], jnp.float32)
    for j in range(m1):
        code = snp[j:j + 1, :]                         # (1, T)
        for c in range(C):
            sel = (code == c).astype(jnp.float32)      # (1, T)
            acc = acc + sel * w_ref[j * C + c]         # (1,T)*(O,1) -> (O,T)
    o_ref[0] = acc


def _lc_bn_silu_mac_kernel(xg_ref, s_ref, t_ref, w_ref, o_ref):
    """Fused eval-BatchNorm + SiLU + locally-connected VPU MAC (lane-dense out).

    xg_ref: (1, K, T) f32   window-grouped activations (k = j*C + c)
    s/t:    (K, 1)  f32     per-k BN scale/shift (channel c = k % C)
    w_ref:  (K, O, 1) f32
    o_ref:  (1, O, T) f32
    """
    xg = xg_ref[0]                                     # (K, T)
    h = _silu(xg * s_ref[...] + t_ref[...])            # (K,1) lane-broadcast
    acc = jnp.zeros(o_ref.shape[1:], jnp.float32)
    for k in range(w_ref.shape[0]):
        acc = acc + h[k:k + 1, :] * w_ref[k]           # (1,T)*(O,1) -> (O,T)
    o_ref[0] = acc


def _lc_tail_ds_kernel(xg_ref, s_ref, t_ref, w_ref, id_ref, wd_ref, bd_ref, o_ref):
    """Second LC layer of an LCBlock fused with the identity-downsample Linear
    and the residual add:  out = LC(silu(bn(x))) + identity @ Wd + bd."""
    xg = xg_ref[0]
    h = _silu(xg * s_ref[...] + t_ref[...])
    acc = jnp.zeros(o_ref.shape[1:], jnp.float32)
    for k in range(w_ref.shape[0]):
        acc = acc + h[k:k + 1, :] * w_ref[k]
    res = jnp.dot(id_ref[0], wd_ref[...],
                  preferred_element_type=jnp.float32)  # (O,Lin)@(Lin,T)
    o_ref[0] = acc + res + bd_ref[...]                 # bd (1,T) broadcasts


def _lc_tail_nods_kernel(xg_ref, s_ref, t_ref, w_ref, id_ref, o_ref):
    """Same as above for the m == 1 case (no downsample Linear)."""
    xg = xg_ref[0]
    h = _silu(xg * s_ref[...] + t_ref[...])
    acc = jnp.zeros(o_ref.shape[1:], jnp.float32)
    for k in range(w_ref.shape[0]):
        acc = acc + h[k:k + 1, :] * w_ref[k]
    o_ref[0] = acc + id_ref[0]


def _linear_kernel(x_ref, w_ref, b_ref, o_ref):
    o_ref[...] = (jnp.dot(x_ref[...], w_ref[...],
                          preferred_element_type=jnp.float32) + b_ref[...])


def _make_fc_trunk_kernel(has_ds):
    """One kernel for the whole FC trunk: every FCBlock, bn_final + SiLU and the
    final Linear, on VMEM-resident activations (eval mode: dropout = identity).
    Matmuls use bf16 operands with f32 accumulation; BN/SiLU stays f32."""
    def kernel(*refs):
        refs = list(refs)
        o_ref = refs.pop()
        it = iter(refs)
        x = next(it)[...]                              # (bm, D) f32
        for ds in has_ds:
            s1 = next(it)[...]; t1 = next(it)[...]
            w1 = next(it)[...]; b1 = next(it)[...]
            s2 = next(it)[...]; t2 = next(it)[...]
            w2 = next(it)[...]; b2 = next(it)[...]
            if ds:
                wd = next(it)[...]; bd = next(it)[...]
            a = _silu(x * s1 + t1)
            h = jnp.dot(a.astype(jnp.bfloat16), w1,
                        preferred_element_type=jnp.float32) + b1
            a = _silu(h * s2 + t2)
            h = jnp.dot(a.astype(jnp.bfloat16), w2,
                        preferred_element_type=jnp.float32) + b2
            if ds:
                idn = jnp.dot(x.astype(jnp.bfloat16), wd,
                              preferred_element_type=jnp.float32) + bd
            else:
                idn = x
            x = h + idn
        sf = next(it)[...]; tf = next(it)[...]
        wl = next(it)[...]; bl = next(it)[...]
        a = _silu(x * sf + tf)
        o_ref[...] = jnp.dot(a.astype(jnp.bfloat16), wl,
                             preferred_element_type=jnp.float32) + bl
    return kernel


# ----------------------------------------------------------------------------
# Pallas wrappers
# ----------------------------------------------------------------------------
_PAR1 = pltpu.CompilerParams(dimension_semantics=("parallel",))
_PAR2 = pltpu.CompilerParams(dimension_semantics=("parallel", "parallel"))


def _lane_tiling(n, max_tile):
    """Lane-tile size (full dim if small, else a multiple of 128) and grid extent."""
    if n <= max_tile:
        return n, 1
    return max_tile, pl.cdiv(n, max_tile)


def _bn_scale_shift(bn, eps=1e-5):
    scale = bn["gamma"] / jnp.sqrt(bn["var"] + eps)
    shift = bn["beta"] - bn["mean"] * scale
    return scale, shift


def lcl0_gather(snp_g, weight, *, lane_tile=2048):
    """First locally-connected layer on the (implicit) one-hot input."""
    B, m1, Nw = snp_g.shape
    K, O = weight.shape
    tn, nt = _lane_tiling(Nw, lane_tile)
    w3 = weight.astype(jnp.float32).reshape(K, O, 1)
    return pl.pallas_call(
        _lc0_gather_kernel,
        out_shape=jax.ShapeDtypeStruct((B, O, Nw), jnp.float32),
        grid=(B, nt),
        in_specs=[pl.BlockSpec((1, m1, tn), lambda b, i: (b, 0, i)),
                  pl.BlockSpec((K, O, 1), lambda b, i: (0, 0, 0))],
        out_specs=pl.BlockSpec((1, O, tn), lambda b, i: (b, 0, i)),
        compiler_params=_PAR2,
    )(snp_g, w3)


def lc_bn_silu_lc(xg, scale_g, shift_g, weight, *, lane_tile=2048):
    """silu(bn(x)) fused into a locally-connected layer (lane-dense output)."""
    B, K, Nw = xg.shape
    O = weight.shape[1]
    tn, nt = _lane_tiling(Nw, lane_tile)
    return pl.pallas_call(
        _lc_bn_silu_mac_kernel,
        out_shape=jax.ShapeDtypeStruct((B, O, Nw), jnp.float32),
        grid=(B, nt),
        in_specs=[pl.BlockSpec((1, K, tn), lambda b, i: (b, 0, i)),
                  pl.BlockSpec((K, 1), lambda b, i: (0, 0)),
                  pl.BlockSpec((K, 1), lambda b, i: (0, 0)),
                  pl.BlockSpec((K, O, 1), lambda b, i: (0, 0, 0))],
        out_specs=pl.BlockSpec((1, O, tn), lambda b, i: (b, 0, i)),
        compiler_params=_PAR2,
    )(xg.astype(jnp.float32),
      scale_g.reshape(K, 1).astype(jnp.float32),
      shift_g.reshape(K, 1).astype(jnp.float32),
      weight.astype(jnp.float32).reshape(K, O, 1))


def lc_bn_silu_lc_residual(xg, scale_g, shift_g, weight, identity, wd, bd,
                           *, lane_tile=512):
    """silu(bn(x)) + LC + identity-downsample Linear + residual, one kernel."""
    B, K, Nw = xg.shape
    O = weight.shape[1]
    Lin = identity.shape[2]
    tn, nt = _lane_tiling(Nw, lane_tile)
    args = [xg.astype(jnp.float32),
            scale_g.reshape(K, 1).astype(jnp.float32),
            shift_g.reshape(K, 1).astype(jnp.float32),
            weight.astype(jnp.float32).reshape(K, O, 1),
            identity.astype(jnp.float32)]
    in_specs = [pl.BlockSpec((1, K, tn), lambda b, i: (b, 0, i)),
                pl.BlockSpec((K, 1), lambda b, i: (0, 0)),
                pl.BlockSpec((K, 1), lambda b, i: (0, 0)),
                pl.BlockSpec((K, O, 1), lambda b, i: (0, 0, 0))]
    if wd is not None:
        kernel = _lc_tail_ds_kernel
        in_specs += [pl.BlockSpec((1, O, Lin), lambda b, i: (b, 0, 0)),
                     pl.BlockSpec((Lin, tn), lambda b, i: (0, i)),
                     pl.BlockSpec((1, tn), lambda b, i: (0, i))]
        args += [wd.astype(jnp.float32), bd.reshape(1, -1).astype(jnp.float32)]
    else:
        kernel = _lc_tail_nods_kernel
        in_specs += [pl.BlockSpec((1, O, tn), lambda b, i: (b, 0, i))]
    return pl.pallas_call(
        kernel,
        out_shape=jax.ShapeDtypeStruct((B, O, Nw), jnp.float32),
        grid=(B, nt),
        in_specs=in_specs,
        out_specs=pl.BlockSpec((1, O, tn), lambda b, i: (b, 0, i)),
        compiler_params=_PAR2,
    )(*args)


def pallas_linear(x, w, b):
    """y = x @ w + b (TabLayer). Single block per row-tile; no N tiling."""
    x = x.astype(jnp.float32)
    B, K = x.shape
    N = w.shape[1]
    bm = B if B <= 256 else 256
    return pl.pallas_call(
        _linear_kernel,
        out_shape=jax.ShapeDtypeStruct((B, N), jnp.float32),
        grid=(pl.cdiv(B, bm),),
        in_specs=[pl.BlockSpec((bm, K), lambda r: (r, 0)),
                  pl.BlockSpec((K, N), lambda r: (0, 0)),
                  pl.BlockSpec((1, N), lambda r: (0, 0))],
        out_specs=pl.BlockSpec((bm, N), lambda r: (r, 0)),
        compiler_params=_PAR1,
    )(x, w.astype(jnp.float32), b.reshape(1, -1).astype(jnp.float32))


def fc_trunk(x, fc_blocks, bn_final, final_linear):
    """All FCBlocks + bn_final + SiLU + final Linear in one pallas_call."""
    x = x.astype(jnp.float32)
    B, D0 = x.shape
    nout = final_linear["w"].shape[1]

    def vec(a):
        return a.reshape(1, -1).astype(jnp.float32)

    args = [x]
    has_ds = []
    for blk in fc_blocks:
        s1, t1 = _bn_scale_shift(blk["bn1"])
        s2, t2 = _bn_scale_shift(blk["bn2"])
        args += [vec(s1), vec(t1),
                 blk["FCL1"]["w"].astype(jnp.bfloat16), vec(blk["FCL1"]["b"]),
                 vec(s2), vec(t2),
                 blk["FCL2"]["w"].astype(jnp.bfloat16), vec(blk["FCL2"]["b"])]
        if blk["ds"] is not None:
            args += [blk["ds"]["w"].astype(jnp.bfloat16), vec(blk["ds"]["b"])]
            has_ds.append(True)
        else:
            has_ds.append(False)
    sf, tf = _bn_scale_shift(bn_final)
    args += [vec(sf), vec(tf),
             final_linear["w"].astype(jnp.bfloat16), vec(final_linear["b"])]

    bm = B if B <= 256 else 256
    in_specs = [pl.BlockSpec((bm, D0), lambda r: (r, 0))]
    for a in args[1:]:
        zeros = (0,) * a.ndim
        in_specs.append(pl.BlockSpec(a.shape, lambda r, z=zeros: z))

    return pl.pallas_call(
        _make_fc_trunk_kernel(tuple(has_ds)),
        out_shape=jax.ShapeDtypeStruct((B, nout), jnp.float32),
        grid=(pl.cdiv(B, bm),),
        in_specs=in_specs,
        out_specs=pl.BlockSpec((bm, nout), lambda r: (r, 0)),
        compiler_params=_PAR1,
    )(*args)


# ----------------------------------------------------------------------------
# Module-level glue (mirrors the PyTorch forward passes)
# ----------------------------------------------------------------------------
def _group_windows(x, m, scale=None, shift=None):
    """(B, C, L) -> (B, m*C, Nw) with k = j*C + c, i.e. the contiguous-unfold of
    the PyTorch LocallyConnectedLayer.  When padding is needed, pad with the
    per-channel value that the fused eval-BN+SiLU maps to exactly 0 (matching
    PyTorch's zero-pad *after* the activation).  (Degenerate gamma==0 channels
    would break this; they do not occur with these parameters.)"""
    B, C, L = x.shape
    Nw = -(-L // m)
    pad = Nw * m - L
    if pad:
        if scale is not None:
            pad_val = jnp.where(scale == 0, 0.0, -shift / scale).reshape(1, C, 1)
        else:
            pad_val = jnp.zeros((1, C, 1), x.dtype)
        x = jnp.concatenate(
            [x, jnp.broadcast_to(pad_val, (B, C, pad)).astype(x.dtype)], axis=2)
    x = x.reshape(B, C, Nw, m)
    x = jnp.transpose(x, (0, 3, 1, 2))      # (B, m, C, Nw)
    return x.reshape(B, m * C, Nw)


def lc_block(x, p, m, C=4):
    """LCBlock.forward (eval mode: dropout p=0.0 is identity). x: (B, 4, L)."""
    scale, shift = _bn_scale_shift(p["bn"])
    scale_g, shift_g = jnp.tile(scale, m), jnp.tile(shift, m)
    # silu(bn(x)) fused into the first locally-connected layer
    xg1 = _group_windows(x, m, scale, shift)
    h1 = lc_bn_silu_lc(xg1, scale_g, shift_g, p["LCL1"]["weight"])
    # silu(bn(h1)) + LCL2 + identity downsample + residual add, one kernel
    # (same BN module reused on the LCL1 output, exactly as in PyTorch)
    xg2 = _group_windows(h1, m, scale, shift)
    ds = p["ds"]
    return lc_bn_silu_lc_residual(
        xg2, scale_g, shift_g, p["LCL2"]["weight"], x,
        None if ds is None else ds["w"], None if ds is None else ds["b"])


def gln_forward(params, SNP, env, m1=2, m2=2, C=4):
    B, F = SNP.shape
    # LCL0 on the one-hot input == weight-row gather (one-hot never materialized)
    Nw0 = -(-F // m1)
    pad = Nw0 * m1 - F
    snp = SNP.astype(jnp.int32)
    if pad:
        snp = jnp.pad(snp, ((0, 0), (0, pad)), constant_values=C)  # code C selects nothing
    snp_g = jnp.transpose(snp.reshape(B, Nw0, m1), (0, 2, 1))       # (B, m1, Nw0)
    x = lcl0_gather(snp_g, params["LCL0"]["weight"])                # (B, 4, Nw0)
    for blk in params["LCBlocks"]:
        x = lc_block(x, blk, m=m2, C=C)
    x = x.reshape(B, -1)                                            # == flatten(1)
    y = pallas_linear(env, params["TabLayer"]["w"], params["TabLayer"]["b"])
    x = jnp.concatenate([x, y], axis=1)
    # Whole FC trunk (FCBlocks + bn_final + SiLU + final Linear) in ONE kernel.
    # TODO(synk): dropout (p=0.5 / p=0.2) is identity here (eval-mode semantics).
    return fc_trunk(x, params["FCBlocks"], params["bn_final"], params["Linear"])


# ----------------------------------------------------------------------------
# Deterministic parameter construction (mirrors GLN.__init__ shapes)
# ----------------------------------------------------------------------------
class KeyGen:
    def __init__(self, key):
        self.key = key

    def __call__(self):
        self.key, k = jax.random.split(self.key)
        return k


def make_bn(kg, n):
    return {
        "gamma": 1.0 + 0.1 * jax.random.normal(kg(), (n,), jnp.float32),
        "beta": 0.1 * jax.random.normal(kg(), (n,), jnp.float32),
        "mean": jnp.zeros((n,), jnp.float32),
        "var": jnp.ones((n,), jnp.float32),
    }


def make_linear(kg, fin, fout):
    return {
        "w": jax.random.normal(kg(), (fin, fout), jnp.float32) / math.sqrt(fin),
        "b": 0.01 * jax.random.normal(kg(), (fout,), jnp.float32),
    }


def make_lcl(kg, kernel_size, out_sets=4):
    return {"weight": jax.random.normal(kg(), (kernel_size, out_sets),
                                        jnp.float32) / math.sqrt(kernel_size)}


def make_fcblock(kg, fin, fout):
    return {
        "bn1": make_bn(kg, fin),
        "bn2": make_bn(kg, fout),
        "FCL1": make_linear(kg, fin, fout),
        "FCL2": make_linear(kg, fout, fout),
        "ds": make_linear(kg, fin, fout) if fin != fout else None,
    }


def init_gln_params(key, in_features, in_envs, num_classes,
                    num_residual_blocks=2, m1=2, m2=2, C=4,
                    num_predictor_blocks=4):
    kg = KeyGen(key)
    p = {}
    p["LCL0"] = make_lcl(kg, m1 * C)
    out1 = math.ceil(in_features / m1)

    lc_blocks = []
    fin = out1
    for _ in range(num_residual_blocks):
        lc_blocks.append({
            "bn": make_bn(kg, 4),
            "LCL1": make_lcl(kg, m2 * C),
            "LCL2": make_lcl(kg, m2 * C),
            "ds": make_linear(kg, fin, math.ceil(fin / m2 ** 2)) if m2 != 1 else None,
        })
        fin = math.ceil(fin / m2 ** 2)
    p["LCBlocks"] = lc_blocks

    out2 = math.ceil(out1 / (2 * m2) ** num_residual_blocks) * C
    out_envs = min(in_envs, 10)
    out3 = out2 + out_envs
    p["TabLayer"] = make_linear(kg, in_envs, out_envs)

    # NOTE: the PyTorch module overwrites num_predictor_blocks with
    # num_residual_blocks in __init__; we reproduce that exactly.
    n_pred = num_residual_blocks
    fc_blocks = [make_fcblock(kg, out3, 256)]
    for _ in range(n_pred):
        fc_blocks.append(make_fcblock(kg, 256, 256))
    p["FCBlocks"] = fc_blocks

    p["bn_final"] = make_bn(kg, 256)
    p["Linear"] = make_linear(kg, 256, num_classes)
    return p


# ----------------------------------------------------------------------------
if __name__ == "__main__":
    IN_FEATURES = 64     # number of SNP positions
    IN_ENVS = 8
    NUM_CLASSES = 3
    BATCH = 4
    M1, M2, C = 2, 2, 4

    key = jax.random.PRNGKey(0)
    k_params, k_snp, k_env = jax.random.split(key, 3)

    params = init_gln_params(k_params, IN_FEATURES, IN_ENVS, NUM_CLASSES,
                             num_residual_blocks=2, m1=M1, m2=M2, C=C)

    SNP = jax.random.randint(k_snp, (BATCH, IN_FEATURES), 0, 4, dtype=jnp.int32)
    env = jax.random.normal(k_env, (BATCH, IN_ENVS), jnp.float32)

    fwd = jax.jit(lambda p, s, e: gln_forward(p, s, e, m1=M1, m2=M2, C=C))
    out = fwd(params, SNP, env)
    out = jax.block_until_ready(out)

    assert out.shape == (BATCH, NUM_CLASSES), out.shape
    assert bool(jnp.all(jnp.isfinite(out)))
    print("KERNEL_OK")
</pallas_src>

<mosaic_0001>
module attributes {stable_mosaic.version = 11 : i64} {
  func.func @_linear_kernel(%arg0: i32, %arg1: memref<4x8xf32, #tpu.memory_space<vmem>>, %arg2: memref<8x8xf32, #tpu.memory_space<vmem>>, %arg3: memref<1x8xf32, #tpu.memory_space<vmem>>, %arg4: memref<4x8xf32, #tpu.memory_space<vmem>>) attributes {dimension_semantics = [#tpu.dimension_semantics<parallel>], iteration_bounds = array<i64: 1>, scalar_prefetch = 0 : i64, scratch_operands = 0 : i64, tpu.core_type = #tpu.core_type<tc>, window_params = [{transform_indices = @transform_0, window_bounds = array<i64: 4, 8>}, {pipeline_mode = #tpu.pipeline_mode<synchronous>, transform_indices = @transform_1, window_bounds = array<i64: 8, 8>}, {pipeline_mode = #tpu.pipeline_mode<synchronous>, transform_indices = @transform_2, window_bounds = array<i64: 1, 8>}, {transform_indices = @transform_3, window_bounds = array<i64: 4, 8>}]} {
    %c0 = arith.constant 0 : index
    %c0_0 = arith.constant 0 : index
    %0 = vector.load %arg1[%c0, %c0_0] : memref<4x8xf32, #tpu.memory_space<vmem>>, vector<4x8xf32>
    %c0_1 = arith.constant 0 : index
    %c0_2 = arith.constant 0 : index
    %1 = vector.load %arg2[%c0_1, %c0_2] : memref<8x8xf32, #tpu.memory_space<vmem>>, vector<8x8xf32>
    %cst = arith.constant dense<0.000000e+00> : vector<4x8xf32>
    %2 = tpu.matmul %0, %1, %cst {dimension_numbers = #tpu.dot_dimension_numbers<[1], [0], [0], [1], [0, 0, 1, 1], [], []>} : vector<4x8xf32>, vector<8x8xf32>, vector<4x8xf32> -> vector<4x8xf32>
    %c0_3 = arith.constant 0 : index
    %c0_4 = arith.constant 0 : index
    %3 = vector.load %arg3[%c0_3, %c0_4] : memref<1x8xf32, #tpu.memory_space<vmem>>, vector<1x8xf32>
    %4 = vector.broadcast %3 : vector<1x8xf32> to vector<4x8xf32>
    %5 = arith.addf %2, %4 : vector<4x8xf32>
    %c0_5 = arith.constant 0 : index
    %c0_6 = arith.constant 0 : index
    %6 = vector.load %arg4[%c0_5, %c0_6] : memref<4x8xf32, #tpu.memory_space<vmem>>, vector<4x8xf32>
    tpu.vector_store %arg4[%c0_5, %c0_6], %5 {strides = array<i32>} : memref<4x8xf32, #tpu.memory_space<vmem>>, vector<4x8xf32>,
    return
  }
  func.func @transform_0(%arg0: i32) -> (i32, i32) {
    %c0_i32 = arith.constant 0 : i32
    %c0_i32_0 = arith.constant 0 : i32
    return %arg0, %c0_i32 : i32, i32
  }
  func.func @transform_1(%arg0: i32) -> (i32, i32) {
    %c0_i32 = arith.constant 0 : i32
    %c0_i32_0 = arith.constant 0 : i32
    %c0_i32_1 = arith.constant 0 : i32
    return %c0_i32, %c0_i32_0 : i32, i32
  }
  func.func @transform_2(%arg0: i32) -> (i32, i32) {
    %c0_i32 = arith.constant 0 : i32
    %c0_i32_0 = arith.constant 0 : i32
    %c0_i32_1 = arith.constant 0 : i32
    return %c0_i32, %c0_i32_0 : i32, i32
  }
  func.func @transform_3(%arg0: i32) -> (i32, i32) {
    %c0_i32 = arith.constant 0 : i32
    %c0_i32_0 = arith.constant 0 : i32
    return %arg0, %c0_i32 : i32, i32
  }
}

module attributes {stable_mosaic.version = 11 : i64} {
  func.func @_lc0_gather_kernel(%arg0: i32, %arg1: i32, %arg2: memref<1x2x32xi32, #tpu.memory_space<vmem>>, %arg3: memref<8x4x1xf32, #tpu.memory_space<vmem>>, %arg4: memref<1x4x32xf32, #tpu.memory_space<vmem>>) attributes {dimension_semantics = [#tpu.dimension_semantics<parallel>, #tpu.dimension_semantics<parallel>], iteration_bounds = array<i64: 4, 1>, scalar_prefetch = 0 : i64, scratch_operands = 0 : i64, tpu.core_type = #tpu.core_type<tc>, window_params = [{transform_indices = @transform_0, window_bounds = array<i64: 1, 2, 32>}, {pipeline_mode = #tpu.pipeline_mode<synchronous>, transform_indices = @transform_1, window_bounds = array<i64: 8, 4, 1>}, {transform_indices = @transform_2, window_bounds = array<i64: 1, 4, 32>}]} {
    %c0 = arith.constant 0 : index
    %c0_0 = arith.constant 0 : index
    %c0_1 = arith.constant 0 : index
    %0 = vector.load %arg2[%c0, %c0_0, %c0_1] : memref<1x2x32xi32, #tpu.memory_space<vmem>>, vector<1x2x32xi32>
    %1 = vector.shape_cast %0 : vector<1x2x32xi32> to vector<2x32xi32>
    %cst = arith.constant 0.000000e+00 : f32
    %2 = vector.broadcast %cst : f32 to vector<4x32xf32>
    %3 = vector.extract_strided_slice %1 {offsets = [0, 0], sizes = [1, 32], strides = [1, 1]} : vector<2x32xi32> to vector<1x32xi32>
    %c0_i32 = arith.constant 0 : i32
    %4 = vector.broadcast %c0_i32 : i32 to vector<1x32xi32>
    %5 = arith.cmpi eq, %3, %4 : vector<1x32xi32>
    %6 = arith.extui %5 : vector<1x32xi1> to vector<1x32xi32>
    %7 = arith.sitofp %6 : vector<1x32xi32> to vector<1x32xf32>
    %c0_2 = arith.constant 0 : index
    %c0_3 = arith.constant 0 : index
    %c0_4 = arith.constant 0 : index
    %8 = vector.load %arg3[%c0_2, %c0_3, %c0_4] : memref<8x4x1xf32, #tpu.memory_space<vmem>>, vector<1x4x1xf32>
    %9 = vector.shape_cast %8 : vector<1x4x1xf32> to vector<4x1xf32>
    %10 = vector.broadcast %7 : vector<1x32xf32> to vector<4x32xf32>
    %11 = vector.broadcast %9 : vector<4x1xf32> to vector<4x32xf32>
    %12 = arith.mulf %10, %11 : vector<4x32xf32>
    %13 = arith.addf %2, %12 : vector<4x32xf32>
    %c1_i32 = arith.constant 1 : i32
    %14 = vector.broadcast %c1_i32 : i32 to vector<1x32xi32>
    %15 = arith.cmpi eq, %3, %14 : vector<1x32xi32>
    %16 = arith.extui %15 : vector<1x32xi1> to vector<1x32xi32>
    %17 = arith.sitofp %16 : vector<1x32xi32> to vector<1x32xf32>
    %c1 = arith.constant 1 : index
    %c0_5 = arith.constant 0 : index
    %c0_6 = arith.constant 0 : index
    %18 = vector.load %arg3[%c1, %c0_5, %c0_6] : memref<8x4x1xf32, #tpu.memory_space<vmem>>, vector<1x4x1xf32>
    %19 = vector.shape_cast %18 : vector<1x4x1xf32> to vector<4x1xf32>
    %20 = vector.broadcast %17 : vector<1x32xf32> to vector<4x32xf32>
    %21 = vector.broadcast %19 : vector<4x1xf32> to vector<4x32xf32>
    %22 = arith.mulf %20, %21 : vector<4x32xf32>
    %23 = arith.addf %13, %22 : vector<4x32xf32>
    %c2_i32 = arith.constant 2 : i32
    %24 = vector.broadcast %c2_i32 : i32 to vector<1x32xi32>
    %25 = arith.cmpi eq, %3, %24 : vector<1x32xi32>
    %26 = arith.extui %25 : vector<1x32xi1> to vector<1x32xi32>
    %27 = arith.sitofp %26 : vector<1x32xi32> to vector<1x32xf32>
    %c2 = arith.constant 2 : index
    %c0_7 = arith.constant 0 : index
    %c0_8 = arith.constant 0 : index
    %28 = vector.load %arg3[%c2, %c0_7, %c0_8] : memref<8x4x1xf32, #tpu.memory_space<vmem>>, vector<1x4x1xf32>
    %29 = vector.shape_cast %28 : vector<1x4x1xf32> to vector<4x1xf32>
    %30 = vector.broadcast %27 : vector<1x32xf32> to vector<4x32xf32>
    %31 = vector.broadcast %29 : vector<4x1xf32> to vector<4x32xf32>
    %32 = arith.mulf %30, %31 : vector<4x32xf32>
    %33 = arith.addf %23, %32 : vector<4x32xf32>
    %c3_i32 = arith.constant 3 : i32
    %34 = vector.broadcast %c3_i32 : i32 to vector<1x32xi32>
    %35 = arith.cmpi eq, %3, %34 : vector<1x32xi32>
    %36 = arith.extui %35 : vector<1x32xi1> to vector<1x32xi32>
    %37 = arith.sitofp %36 : vector<1x32xi32> to vector<1x32xf32>
    %c3 = arith.constant 3 : index
    %c0_9 = arith.constant 0 : index
    %c0_10 = arith.constant 0 : index
    %38 = vector.load %arg3[%c3, %c0_9, %c0_10] : memref<8x4x1xf32, #tpu.memory_space<vmem>>, vector<1x4x1xf32>
    %39 = vector.shape_cast %38 : vector<1x4x1xf32> to vector<4x1xf32>
    %40 = vector.broadcast %37 : vector<1x32xf32> to vector<4x32xf32>
    %41 = vector.broadcast %39 : vector<4x1xf32> to vector<4x32xf32>
    %42 = arith.mulf %40, %41 : vector<4x32xf32>
    %43 = arith.addf %33, %42 : vector<4x32xf32>
    %44 = vector.extract_strided_slice %1 {offsets = [1, 0], sizes = [1, 32], strides = [1, 1]} : vector<2x32xi32> to vector<1x32xi32>
    %c0_i32_11 = arith.constant 0 : i32
    %45 = vector.broadcast %c0_i32_11 : i32 to vector<1x32xi32>
    %46 = arith.cmpi eq, %44, %45 : vector<1x32xi32>
    %47 = arith.extui %46 : vector<1x32xi1> to vector<1x32xi32>
    %48 = arith.sitofp %47 : vector<1x32xi32> to vector<1x32xf32>
    %c4 = arith.constant 4 : index
    %c0_12 = arith.constant 0 : index
    %c0_13 = arith.constant 0 : index
    %49 = vector.load %arg3[%c4, %c0_12, %c0_13] : memref<8x4x1xf32, #tpu.memory_space<vmem>>, vector<1x4x1xf32>
    %50 = vector.shape_cast %49 : vector<1x4x1xf32> to vector<4x1xf32>
    %51 = vector.broadcast %48 : vector<1x32xf32> to vector<4x32xf32>
    %52 = vector.broadcast %50 : vector<4x1xf32> to vector<4x32xf32>
    %53 = arith.mulf %51, %52 : vector<4x32xf32>
    %54 = arith.addf %43, %53 : vector<4x32xf32>
    %c1_i32_14 = arith.constant 1 : i32
    %55 = vector.broadcast %c1_i32_14 : i32 to vector<1x32xi32>
    %56 = arith.cmpi eq, %44, %55 : vector<1x32xi32>
    %57 = arith.extui %56 : vector<1x32xi1> to vector<1x32xi32>
    %58 = arith.sitofp %57 : vector<1x32xi32> to vector<1x32xf32>
    %c5 = arith.constant 5 : index
    %c0_15 = arith.constant 0 : index
    %c0_16 = arith.constant 0 : index
    %59 = vector.load %arg3[%c5, %c0_15, %c0_16] : memref<8x4x1xf32, #tpu.memory_space<vmem>>, vector<1x4x1xf32>
    %60 = vector.shape_cast %59 : vector<1x4x1xf32> to vector<4x1xf32>
    %61 = vector.broadcast %58 : vector<1x32xf32> to vector<4x32xf32>
    %62 = vector.broadcast %60 : vector<4x1xf32> to vector<4x32xf32>
    %63 = arith.mulf %61, %62 : vector<4x32xf32>
    %64 = arith.addf %54, %63 : vector<4x32xf32>
    %c2_i32_17 = arith.constant 2 : i32
    %65 = vector.broadcast %c2_i32_17 : i32 to vector<1x32xi32>
    %66 = arith.cmpi eq, %44, %65 : vector<1x32xi32>
    %67 = arith.extui %66 : vector<1x32xi1> to vector<1x32xi32>
    %68 = arith.sitofp %67 : vector<1x32xi32> to vector<1x32xf32>
    %c6 = arith.constant 6 : index
    %c0_18 = arith.constant 0 : index
    %c0_19 = arith.constant 0 : index
    %69 = vector.load %arg3[%c6, %c0_18, %c0_19] : memref<8x4x1xf32, #tpu.memory_space<vmem>>, vector<1x4x1xf32>
    %70 = vector.shape_cast %69 : vector<1x4x1xf32> to vector<4x1xf32>
    %71 = vector.broadcast %68 : vector<1x32xf32> to vector<4x32xf32>
    %72 = vector.broadcast %70 : vector<4x1xf32> to vector<4x32xf32>
    %73 = arith.mulf %71, %72 : vector<4x32xf32>
    %74 = arith.addf %64, %73 : vector<4x32xf32>
    %c3_i32_20 = arith.constant 3 : i32
    %75 = vector.broadcast %c3_i32_20 : i32 to vector<1x32xi32>
    %76 = arith.cmpi eq, %44, %75 : vector<1x32xi32>
    %77 = arith.extui %76 : vector<1x32xi1> to vector<1x32xi32>
    %78 = arith.sitofp %77 : vector<1x32xi32> to vector<1x32xf32>
    %c7 = arith.constant 7 : index
    %c0_21 = arith.constant 0 : index
    %c0_22 = arith.constant 0 : index
    %79 = vector.load %arg3[%c7, %c0_21, %c0_22] : memref<8x4x1xf32, #tpu.memory_space<vmem>>, vector<1x4x1xf32>
    %80 = vector.shape_cast %79 : vector<1x4x1xf32> to vector<4x1xf32>
    %81 = vector.broadcast %78 : vector<1x32xf32> to vector<4x32xf32>
    %82 = vector.broadcast %80 : vector<4x1xf32> to vector<4x32xf32>
    %83 = arith.mulf %81, %82 : vector<4x32xf32>
    %84 = arith.addf %74, %83 : vector<4x32xf32>
    %c0_23 = arith.constant 0 : index
    %c0_24 = arith.constant 0 : index
    %c0_25 = arith.constant 0 : index
    %85 = vector.load %arg4[%c0_23, %c0_24, %c0_25] : memref<1x4x32xf32, #tpu.memory_space<vmem>>, vector<1x4x32xf32>
    %86 = vector.shape_cast %85 : vector<1x4x32xf32> to vector<4x32xf32>
    %87 = vector.shape_cast %84 : vector<4x32xf32> to vector<1x4x32xf32>
    tpu.vector_store %arg4[%c0_23, %c0_24, %c0_25], %87 {strides = array<i32>} : memref<1x4x32xf32, #tpu.memory_space<vmem>>, vector<1x4x32xf32>,
    return
  }
  func.func @transform_0(%arg0: i32, %arg1: i32) -> (i32, i32, i32) {
    %c0_i32 = arith.constant 0 : i32
    %c0_i32_0 = arith.constant 0 : i32
    return %arg0, %c0_i32, %arg1 : i32, i32, i32
  }
  func.func @transform_1(%arg0: i32, %arg1: i32) -> (i32, i32, i32) {
    %c0_i32 = arith.constant 0 : i32
    %c0_i32_0 = arith.constant 0 : i32
    %c0_i32_1 = arith.constant 0 : i32
    %c0_i32_2 = arith.constant 0 : i32
    return %c0_i32, %c0_i32_0, %c0_i32_1 : i32, i32, i32
  }
  func.func @transform_2(%arg0: i32, %arg1: i32) -> (i32, i32, i32) {
    %c0_i32 = arith.constant 0 : i32
    %c0_i32_0 = arith.constant 0 : i32
    return %arg0, %c0_i32, %arg1 : i32, i32, i32
  }
}

module attributes {stable_mosaic.version = 11 : i64} {
  func.func @_lc_bn_silu_mac_kernel(%arg0: i32, %arg1: i32, %arg2: memref<1x8x16xf32, #tpu.memory_space<vmem>>, %arg3: memref<8x1xf32, #tpu.memory_space<vmem>>, %arg4: memref<8x1xf32, #tpu.memory_space<vmem>>, %arg5: memref<8x4x1xf32, #tpu.memory_space<vmem>>, %arg6: memref<1x4x16xf32, #tpu.memory_space<vmem>>) attributes {dimension_semantics = [#tpu.dimension_semantics<parallel>, #tpu.dimension_semantics<parallel>], iteration_bounds = array<i64: 4, 1>, scalar_prefetch = 0 : i64, scratch_operands = 0 : i64, tpu.core_type = #tpu.core_type<tc>, window_params = [{transform_indices = @transform_0, window_bounds = array<i64: 1, 8, 16>}, {pipeline_mode = #tpu.pipeline_mode<synchronous>, transform_indices = @transform_1, window_bounds = array<i64: 8, 1>}, {pipeline_mode = #tpu.pipeline_mode<synchronous>, transform_indices = @transform_2, window_bounds = array<i64: 8, 1>}, {pipeline_mode = #tpu.pipeline_mode<synchronous>, transform_indices = @transform_3, window_bounds = array<i64: 8, 4, 1>}, {transform_indices = @transform_4, window_bounds = array<i64: 1, 4, 16>}]} {
    %c0 = arith.constant 0 : index
    %c0_0 = arith.constant 0 : index
    %c0_1 = arith.constant 0 : index
    %0 = vector.load %arg2[%c0, %c0_0, %c0_1] : memref<1x8x16xf32, #tpu.memory_space<vmem>>, vector<1x8x16xf32>
    %1 = vector.shape_cast %0 : vector<1x8x16xf32> to vector<8x16xf32>
    %c0_2 = arith.constant 0 : index
    %c0_3 = arith.constant 0 : index
    %2 = vector.load %arg3[%c0_2, %c0_3] : memref<8x1xf32, #tpu.memory_space<vmem>>, vector<8x1xf32>
    %3 = vector.broadcast %2 : vector<8x1xf32> to vector<8x16xf32>
    %4 = arith.mulf %1, %3 : vector<8x16xf32>
    %c0_4 = arith.constant 0 : index
    %c0_5 = arith.constant 0 : index
    %5 = vector.load %arg4[%c0_4, %c0_5] : memref<8x1xf32, #tpu.memory_space<vmem>>, vector<8x1xf32>
    %6 = vector.broadcast %5 : vector<8x1xf32> to vector<8x16xf32>
    %7 = arith.addf %4, %6 : vector<8x16xf32>
    %8 = arith.negf %7 : vector<8x16xf32>
    %9 = math.exp %8 : vector<8x16xf32>
    %cst = arith.constant 1.000000e+00 : f32
    %10 = vector.broadcast %cst : f32 to vector<8x16xf32>
    %11 = arith.addf %10, %9 : vector<8x16xf32>
    %12 = arith.divf %10, %11 : vector<8x16xf32>
    %13 = arith.mulf %7, %12 : vector<8x16xf32>
    %cst_6 = arith.constant 0.000000e+00 : f32
    %14 = vector.broadcast %cst_6 : f32 to vector<4x16xf32>
    %15 = vector.extract_strided_slice %13 {offsets = [0, 0], sizes = [1, 16], strides = [1, 1]} : vector<8x16xf32> to vector<1x16xf32>
    %c0_7 = arith.constant 0 : index
    %c0_8 = arith.constant 0 : index
    %c0_9 = arith.constant 0 : index
    %16 = vector.load %arg5[%c0_7, %c0_8, %c0_9] : memref<8x4x1xf32, #tpu.memory_space<vmem>>, vector<1x4x1xf32>
    %17 = vector.shape_cast %16 : vector<1x4x1xf32> to vector<4x1xf32>
    %18 = vector.broadcast %15 : vector<1x16xf32> to vector<4x16xf32>
    %19 = vector.broadcast %17 : vector<4x1xf32> to vector<4x16xf32>
    %20 = arith.mulf %18, %19 : vector<4x16xf32>
    %21 = arith.addf %14, %20 : vector<4x16xf32>
    %22 = vector.extract_strided_slice %13 {offsets = [1, 0], sizes = [1, 16], strides = [1, 1]} : vector<8x16xf32> to vector<1x16xf32>
    %c1 = arith.constant 1 : index
    %c0_10 = arith.constant 0 : index
    %c0_11 = arith.constant 0 : index
    %23 = vector.load %arg5[%c1, %c0_10, %c0_11] : memref<8x4x1xf32, #tpu.memory_space<vmem>>, vector<1x4x1xf32>
    %24 = vector.shape_cast %23 : vector<1x4x1xf32> to vector<4x1xf32>
    %25 = vector.broadcast %22 : vector<1x16xf32> to vector<4x16xf32>
    %26 = vector.broadcast %24 : vector<4x1xf32> to vector<4x16xf32>
    %27 = arith.mulf %25, %26 : vector<4x16xf32>
    %28 = arith.addf %21, %27 : vector<4x16xf32>
    %29 = vector.extract_strided_slice %13 {offsets = [2, 0], sizes = [1, 16], strides = [1, 1]} : vector<8x16xf32> to vector<1x16xf32>
    %c2 = arith.constant 2 : index
    %c0_12 = arith.constant 0 : index
    %c0_13 = arith.constant 0 : index
    %30 = vector.load %arg5[%c2, %c0_12, %c0_13] : memref<8x4x1xf32, #tpu.memory_space<vmem>>, vector<1x4x1xf32>
    %31 = vector.shape_cast %30 : vector<1x4x1xf32> to vector<4x1xf32>
    %32 = vector.broadcast %29 : vector<1x16xf32> to vector<4x16xf32>
    %33 = vector.broadcast %31 : vector<4x1xf32> to vector<4x16xf32>
    %34 = arith.mulf %32, %33 : vector<4x16xf32>
    %35 = arith.addf %28, %34 : vector<4x16xf32>
    %36 = vector.extract_strided_slice %13 {offsets = [3, 0], sizes = [1, 16], strides = [1, 1]} : vector<8x16xf32> to vector<1x16xf32>
    %c3 = arith.constant 3 : index
    %c0_14 = arith.constant 0 : index
    %c0_15 = arith.constant 0 : index
    %37 = vector.load %arg5[%c3, %c0_14, %c0_15] : memref<8x4x1xf32, #tpu.memory_space<vmem>>, vector<1x4x1xf32>
    %38 = vector.shape_cast %37 : vector<1x4x1xf32> to vector<4x1xf32>
    %39 = vector.broadcast %36 : vector<1x16xf32> to vector<4x16xf32>
    %40 = vector.broadcast %38 : vector<4x1xf32> to vector<4x16xf32>
    %41 = arith.mulf %39, %40 : vector<4x16xf32>
    %42 = arith.addf %35, %41 : vector<4x16xf32>
    %43 = vector.extract_strided_slice %13 {offsets = [4, 0], sizes = [1, 16], strides = [1, 1]} : vector<8x16xf32> to vector<1x16xf32>
    %c4 = arith.constant 4 : index
    %c0_16 = arith.constant 0 : index
    %c0_17 = arith.constant 0 : index
    %44 = vector.load %arg5[%c4, %c0_16, %c0_17] : memref<8x4x1xf32, #tpu.memory_space<vmem>>, vector<1x4x1xf32>
    %45 = vector.shape_cast %44 : vector<1x4x1xf32> to vector<4x1xf32>
    %46 = vector.broadcast %43 : vector<1x16xf32> to vector<4x16xf32>
    %47 = vector.broadcast %45 : vector<4x1xf32> to vector<4x16xf32>
    %48 = arith.mulf %46, %47 : vector<4x16xf32>
    %49 = arith.addf %42, %48 : vector<4x16xf32>
    %50 = vector.extract_strided_slice %13 {offsets = [5, 0], sizes = [1, 16], strides = [1, 1]} : vector<8x16xf32> to vector<1x16xf32>
    %c5 = arith.constant 5 : index
    %c0_18 = arith.constant 0 : index
    %c0_19 = arith.constant 0 : index
    %51 = vector.load %arg5[%c5, %c0_18, %c0_19] : memref<8x4x1xf32, #tpu.memory_space<vmem>>, vector<1x4x1xf32>
    %52 = vector.shape_cast %51 : vector<1x4x1xf32> to vector<4x1xf32>
    %53 = vector.broadcast %50 : vector<1x16xf32> to vector<4x16xf32>
    %54 = vector.broadcast %52 : vector<4x1xf32> to vector<4x16xf32>
    %55 = arith.mulf %53, %54 : vector<4x16xf32>
    %56 = arith.addf %49, %55 : vector<4x16xf32>
    %57 = vector.extract_strided_slice %13 {offsets = [6, 0], sizes = [1, 16], strides = [1, 1]} : vector<8x16xf32> to vector<1x16xf32>
    %c6 = arith.constant 6 : index
    %c0_20 = arith.constant 0 : index
    %c0_21 = arith.constant 0 : index
    %58 = vector.load %arg5[%c6, %c0_20, %c0_21] : memref<8x4x1xf32, #tpu.memory_space<vmem>>, vector<1x4x1xf32>
    %59 = vector.shape_cast %58 : vector<1x4x1xf32> to vector<4x1xf32>
    %60 = vector.broadcast %57 : vector<1x16xf32> to vector<4x16xf32>
    %61 = vector.broadcast %59 : vector<4x1xf32> to vector<4x16xf32>
    %62 = arith.mulf %60, %61 : vector<4x16xf32>
    %63 = arith.addf %56, %62 : vector<4x16xf32>
    %64 = vector.extract_strided_slice %13 {offsets = [7, 0], sizes = [1, 16], strides = [1, 1]} : vector<8x16xf32> to vector<1x16xf32>
    %c7 = arith.constant 7 : index
    %c0_22 = arith.constant 0 : index
    %c0_23 = arith.constant 0 : index
    %65 = vector.load %arg5[%c7, %c0_22, %c0_23] : memref<8x4x1xf32, #tpu.memory_space<vmem>>, vector<1x4x1xf32>
    %66 = vector.shape_cast %65 : vector<1x4x1xf32> to vector<4x1xf32>
    %67 = vector.broadcast %64 : vector<1x16xf32> to vector<4x16xf32>
    %68 = vector.broadcast %66 : vector<4x1xf32> to vector<4x16xf32>
    %69 = arith.mulf %67, %68 : vector<4x16xf32>
    %70 = arith.addf %63, %69 : vector<4x16xf32>
    %c0_24 = arith.constant 0 : index
    %c0_25 = arith.constant 0 : index
    %c0_26 = arith.constant 0 : index
    %71 = vector.load %arg6[%c0_24, %c0_25, %c0_26] : memref<1x4x16xf32, #tpu.memory_space<vmem>>, vector<1x4x16xf32>
    %72 = vector.shape_cast %71 : vector<1x4x16xf32> to vector<4x16xf32>
    %73 = vector.shape_cast %70 : vector<4x16xf32> to vector<1x4x16xf32>
    tpu.vector_store %arg6[%c0_24, %c0_25, %c0_26], %73 {strides = array<i32>} : memref<1x4x16xf32, #tpu.memory_space<vmem>>, vector<1x4x16xf32>,
    return
  }
  func.func @transform_0(%arg0: i32, %arg1: i32) -> (i32, i32, i32) {
    %c0_i32 = arith.constant 0 : i32
    %c0_i32_0 = arith.constant 0 : i32
    return %arg0, %c0_i32, %arg1 : i32, i32, i32
  }
  func.func @transform_1(%arg0: i32, %arg1: i32) -> (i32, i32) {
    %c0_i32 = arith.constant 0 : i32
    %c0_i32_0 = arith.constant 0 : i32
    %c0_i32_1 = arith.constant 0 : i32
    return %c0_i32, %c0_i32_0 : i32, i32
  }
  func.func @transform_2(%arg0: i32, %arg1: i32) -> (i32, i32) {
    %c0_i32 = arith.constant 0 : i32
    %c0_i32_0 = arith.constant 0 : i32
    %c0_i32_1 = arith.constant 0 : i32
    return %c0_i32, %c0_i32_0 : i32, i32
  }
  func.func @transform_3(%arg0: i32, %arg1: i32) -> (i32, i32, i32) {
    %c0_i32 = arith.constant 0 : i32
    %c0_i32_0 = arith.constant 0 : i32
    %c0_i32_1 = arith.constant 0 : i32
    %c0_i32_2 = arith.constant 0 : i32
    return %c0_i32, %c0_i32_0, %c0_i32_1 : i32, i32, i32
  }
  func.func @transform_4(%arg0: i32, %arg1: i32) -> (i32, i32, i32) {
    %c0_i32 = arith.constant 0 : i32
    %c0_i32_0 = arith.constant 0 : i32
    return %arg0, %c0_i32, %arg1 : i32, i32, i32
  }
}

module attributes {stable_mosaic.version = 11 : i64} {
  func.func @_lc_tail_ds_kernel(%arg0: i32, %arg1: i32, %arg2: memref<1x8x8xf32, #tpu.memory_space<vmem>>, %arg3: memref<8x1xf32, #tpu.memory_space<vmem>>, %arg4: memref<8x1xf32, #tpu.memory_space<vmem>>, %arg5: memref<8x4x1xf32, #tpu.memory_space<vmem>>, %arg6: memref<1x4x32xf32, #tpu.memory_space<vmem>>, %arg7: memref<32x8xf32, #tpu.memory_space<vmem>>, %arg8: memref<1x8xf32, #tpu.memory_space<vmem>>, %arg9: memref<1x4x8xf32, #tpu.memory_space<vmem>>) attributes {dimension_semantics = [#tpu.dimension_semantics<parallel>, #tpu.dimension_semantics<parallel>], iteration_bounds = array<i64: 4, 1>, scalar_prefetch = 0 : i64, scratch_operands = 0 : i64, tpu.core_type = #tpu.core_type<tc>, window_params = [{transform_indices = @transform_0, window_bounds = array<i64: 1, 8, 8>}, {pipeline_mode = #tpu.pipeline_mode<synchronous>, transform_indices = @transform_1, window_bounds = array<i64: 8, 1>}, {pipeline_mode = #tpu.pipeline_mode<synchronous>, transform_indices = @transform_2, window_bounds = array<i64: 8, 1>}, {pipeline_mode = #tpu.pipeline_mode<synchronous>, transform_indices = @transform_3, window_bounds = array<i64: 8, 4, 1>}, {transform_indices = @transform_4, window_bounds = array<i64: 1, 4, 32>}, {transform_indices = @transform_5, window_bounds = array<i64: 32, 8>}, {transform_indices = @transform_6, window_bounds = array<i64: 1, 8>}, {transform_indices = @transform_7, window_bounds = array<i64: 1, 4, 8>}]} {
    %c0 = arith.constant 0 : index
    %c0_0 = arith.constant 0 : index
    %c0_1 = arith.constant 0 : index
    %0 = vector.load %arg2[%c0, %c0_0, %c0_1] : memref<1x8x8xf32, #tpu.memory_space<vmem>>, vector<1x8x8xf32>
    %1 = vector.shape_cast %0 : vector<1x8x8xf32> to vector<8x8xf32>
    %c0_2 = arith.constant 0 : index
    %c0_3 = arith.constant 0 : index
    %2 = vector.load %arg3[%c0_2, %c0_3] : memref<8x1xf32, #tpu.memory_space<vmem>>, vector<8x1xf32>
    %3 = vector.broadcast %2 : vector<8x1xf32> to vector<8x8xf32>
    %4 = arith.mulf %1, %3 : vector<8x8xf32>
    %c0_4 = arith.constant 0 : index
    %c0_5 = arith.constant 0 : index
    %5 = vector.load %arg4[%c0_4, %c0_5] : memref<8x1xf32, #tpu.memory_space<vmem>>, vector<8x1xf32>
    %6 = vector.broadcast %5 : vector<8x1xf32> to vector<8x8xf32>
    %7 = arith.addf %4, %6 : vector<8x8xf32>
    %8 = arith.negf %7 : vector<8x8xf32>
    %9 = math.exp %8 : vector<8x8xf32>
    %cst = arith.constant 1.000000e+00 : f32
    %10 = vector.broadcast %cst : f32 to vector<8x8xf32>
    %11 = arith.addf %10, %9 : vector<8x8xf32>
    %12 = arith.divf %10, %11 : vector<8x8xf32>
    %13 = arith.mulf %7, %12 : vector<8x8xf32>
    %cst_6 = arith.constant 0.000000e+00 : f32
    %14 = vector.broadcast %cst_6 : f32 to vector<4x8xf32>
    %15 = vector.extract_strided_slice %13 {offsets = [0, 0], sizes = [1, 8], strides = [1, 1]} : vector<8x8xf32> to vector<1x8xf32>
    %c0_7 = arith.constant 0 : index
    %c0_8 = arith.constant 0 : index
    %c0_9 = arith.constant 0 : index
    %16 = vector.load %arg5[%c0_7, %c0_8, %c0_9] : memref<8x4x1xf32, #tpu.memory_space<vmem>>, vector<1x4x1xf32>
    %17 = vector.shape_cast %16 : vector<1x4x1xf32> to vector<4x1xf32>
    %18 = vector.broadcast %15 : vector<1x8xf32> to vector<4x8xf32>
    %19 = vector.broadcast %17 : vector<4x1xf32> to vector<4x8xf32>
    %20 = arith.mulf %18, %19 : vector<4x8xf32>
    %21 = arith.addf %14, %20 : vector<4x8xf32>
    %22 = vector.extract_strided_slice %13 {offsets = [1, 0], sizes = [1, 8], strides = [1, 1]} : vector<8x8xf32> to vector<1x8xf32>
    %c1 = arith.constant 1 : index
    %c0_10 = arith.constant 0 : index
    %c0_11 = arith.constant 0 : index
    %23 = vector.load %arg5[%c1, %c0_10, %c0_11] : memref<8x4x1xf32, #tpu.memory_space<vmem>>, vector<1x4x1xf32>
    %24 = vector.shape_cast %23 : vector<1x4x1xf32> to vector<4x1xf32>
    %25 = vector.broadcast %22 : vector<1x8xf32> to vector<4x8xf32>
    %26 = vector.broadcast %24 : vector<4x1xf32> to vector<4x8xf32>
    %27 = arith.mulf %25, %26 : vector<4x8xf32>
    %28 = arith.addf %21, %27 : vector<4x8xf32>
    %29 = vector.extract_strided_slice %13 {offsets = [2, 0], sizes = [1, 8], strides = [1, 1]} : vector<8x8xf32> to vector<1x8xf32>
    %c2 = arith.constant 2 : index
    %c0_12 = arith.constant 0 : index
    %c0_13 = arith.constant 0 : index
    %30 = vector.load %arg5[%c2, %c0_12, %c0_13] : memref<8x4x1xf32, #tpu.memory_space<vmem>>, vector<1x4x1xf32>
    %31 = vector.shape_cast %30 : vector<1x4x1xf32> to vector<4x1xf32>
    %32 = vector.broadcast %29 : vector<1x8xf32> to vector<4x8xf32>
    %33 = vector.broadcast %31 : vector<4x1xf32> to vector<4x8xf32>
    %34 = arith.mulf %32, %33 : vector<4x8xf32>
    %35 = arith.addf %28, %34 : vector<4x8xf32>
    %36 = vector.extract_strided_slice %13 {offsets = [3, 0], sizes = [1, 8], strides = [1, 1]} : vector<8x8xf32> to vector<1x8xf32>
    %c3 = arith.constant 3 : index
    %c0_14 = arith.constant 0 : index
    %c0_15 = arith.constant 0 : index
    %37 = vector.load %arg5[%c3, %c0_14, %c0_15] : memref<8x4x1xf32, #tpu.memory_space<vmem>>, vector<1x4x1xf32>
    %38 = vector.shape_cast %37 : vector<1x4x1xf32> to vector<4x1xf32>
    %39 = vector.broadcast %36 : vector<1x8xf32> to vector<4x8xf32>
    %40 = vector.broadcast %38 : vector<4x1xf32> to vector<4x8xf32>
    %41 = arith.mulf %39, %40 : vector<4x8xf32>
    %42 = arith.addf %35, %41 : vector<4x8xf32>
    %43 = vector.extract_strided_slice %13 {offsets = [4, 0], sizes = [1, 8], strides = [1, 1]} : vector<8x8xf32> to vector<1x8xf32>
    %c4 = arith.constant 4 : index
    %c0_16 = arith.constant 0 : index
    %c0_17 = arith.constant 0 : index
    %44 = vector.load %arg5[%c4, %c0_16, %c0_17] : memref<8x4x1xf32, #tpu.memory_space<vmem>>, vector<1x4x1xf32>
    %45 = vector.shape_cast %44 : vector<1x4x1xf32> to vector<4x1xf32>
    %46 = vector.broadcast %43 : vector<1x8xf32> to vector<4x8xf32>
    %47 = vector.broadcast %45 : vector<4x1xf32> to vector<4x8xf32>
    %48 = arith.mulf %46, %47 : vector<4x8xf32>
    %49 = arith.addf %42, %48 : vector<4x8xf32>
    %50 = vector.extract_strided_slice %13 {offsets = [5, 0], sizes = [1, 8], strides = [1, 1]} : vector<8x8xf32> to vector<1x8xf32>
    %c5 = arith.constant 5 : index
    %c0_18 = arith.constant 0 : index
    %c0_19 = arith.constant 0 : index
    %51 = vector.load %arg5[%c5, %c0_18, %c0_19] : memref<8x4x1xf32, #tpu.memory_space<vmem>>, vector<1x4x1xf32>
    %52 = vector.shape_cast %51 : vector<1x4x1xf32> to vector<4x1xf32>
    %53 = vector.broadcast %50 : vector<1x8xf32> to vector<4x8xf32>
    %54 = vector.broadcast %52 : vector<4x1xf32> to vector<4x8xf32>
    %55 = arith.mulf %53, %54 : vector<4x8xf32>
    %56 = arith.addf %49, %55 : vector<4x8xf32>
    %57 = vector.extract_strided_slice %13 {offsets = [6, 0], sizes = [1, 8], strides = [1, 1]} : vector<8x8xf32> to vector<1x8xf32>
    %c6 = arith.constant 6 : index
    %c0_20 = arith.constant 0 : index
    %c0_21 = arith.constant 0 : index
    %58 = vector.load %arg5[%c6, %c0_20, %c0_21] : memref<8x4x1xf32, #tpu.memory_space<vmem>>, vector<1x4x1xf32>
    %59 = vector.shape_cast %58 : vector<1x4x1xf32> to vector<4x1xf32>
    %60 = vector.broadcast %57 : vector<1x8xf32> to vector<4x8xf32>
    %61 = vector.broadcast %59 : vector<4x1xf32> to vector<4x8xf32>
    %62 = arith.mulf %60, %61 : vector<4x8xf32>
    %63 = arith.addf %56, %62 : vector<4x8xf32>
    %64 = vector.extract_strided_slice %13 {offsets = [7, 0], sizes = [1, 8], strides = [1, 1]} : vector<8x8xf32> to vector<1x8xf32>
    %c7 = arith.constant 7 : index
    %c0_22 = arith.constant 0 : index
    %c0_23 = arith.constant 0 : index
    %65 = vector.load %arg5[%c7, %c0_22, %c0_23] : memref<8x4x1xf32, #tpu.memory_space<vmem>>, vector<1x4x1xf32>
    %66 = vector.shape_cast %65 : vector<1x4x1xf32> to vector<4x1xf32>
    %67 = vector.broadcast %64 : vector<1x8xf32> to vector<4x8xf32>
    %68 = vector.broadcast %66 : vector<4x1xf32> to vector<4x8xf32>
    %69 = arith.mulf %67, %68 : vector<4x8xf32>
    %70 = arith.addf %63, %69 : vector<4x8xf32>
    %c0_24 = arith.constant 0 : index
    %c0_25 = arith.constant 0 : index
    %c0_26 = arith.constant 0 : index
    %71 = vector.load %arg6[%c0_24, %c0_25, %c0_26] : memref<1x4x32xf32, #tpu.memory_space<vmem>>, vector<1x4x32xf32>
    %72 = vector.shape_cast %71 : vector<1x4x32xf32> to vector<4x32xf32>
    %c0_27 = arith.constant 0 : index
    %c0_28 = arith.constant 0 : index
    %73 = vector.load %arg7[%c0_27, %c0_28] : memref<32x8xf32, #tpu.memory_space<vmem>>, vector<32x8xf32>
    %cst_29 = arith.constant dense<0.000000e+00> : vector<4x8xf32>
    %74 = tpu.matmul %72, %73, %cst_29 {dimension_numbers = #tpu.dot_dimension_numbers<[1], [0], [0], [1], [0, 0, 1, 1], [], []>} : vector<4x32xf32>, vector<32x8xf32>, vector<4x8xf32> -> vector<4x8xf32>
    %75 = arith.addf %70, %74 : vector<4x8xf32>
    %c0_30 = arith.constant 0 : index
    %c0_31 = arith.constant 0 : index
    %76 = vector.load %arg8[%c0_30, %c0_31] : memref<1x8xf32, #tpu.memory_space<vmem>>, vector<1x8xf32>
    %77 = vector.broadcast %76 : vector<1x8xf32> to vector<4x8xf32>
    %78 = arith.addf %75, %77 : vector<4x8xf32>
    %c0_32 = arith.constant 0 : index
    %c0_33 = arith.constant 0 : index
    %c0_34 = arith.constant 0 : index
    %79 = vector.load %arg9[%c0_32, %c0_33, %c0_34] : memref<1x4x8xf32, #tpu.memory_space<vmem>>, vector<1x4x8xf32>
    %80 = vector.shape_cast %79 : vector<1x4x8xf32> to vector<4x8xf32>
    %81 = vector.shape_cast %78 : vector<4x8xf32> to vector<1x4x8xf32>
    tpu.vector_store %arg9[%c0_32, %c0_33, %c0_34], %81 {strides = array<i32>} : memref<1x4x8xf32, #tpu.memory_space<vmem>>, vector<1x4x8xf32>,
    return
  }
  func.func @transform_0(%arg0: i32, %arg1: i32) -> (i32, i32, i32) {
    %c0_i32 = arith.constant 0 : i32
    %c0_i32_0 = arith.constant 0 : i32
    return %arg0, %c0_i32, %arg1 : i32, i32, i32
  }
  func.func @transform_1(%arg0: i32, %arg1: i32) -> (i32, i32) {
    %c0_i32 = arith.constant 0 : i32
    %c0_i32_0 = arith.constant 0 : i32
    %c0_i32_1 = arith.constant 0 : i32
    return %c0_i32, %c0_i32_0 : i32, i32
  }
  func.func @transform_2(%arg0: i32, %arg1: i32) -> (i32, i32) {
    %c0_i32 = arith.constant 0 : i32
    %c0_i32_0 = arith.constant 0 : i32
    %c0_i32_1 = arith.constant 0 : i32
    return %c0_i32, %c0_i32_0 : i32, i32
  }
  func.func @transform_3(%arg0: i32, %arg1: i32) -> (i32, i32, i32) {
    %c0_i32 = arith.constant 0 : i32
    %c0_i32_0 = arith.constant 0 : i32
    %c0_i32_1 = arith.constant 0 : i32
    %c0_i32_2 = arith.constant 0 : i32
    return %c0_i32, %c0_i32_0, %c0_i32_1 : i32, i32, i32
  }
  func.func @transform_4(%arg0: i32, %arg1: i32) -> (i32, i32, i32) {
    %c0_i32 = arith.constant 0 : i32
    %c0_i32_0 = arith.constant 0 : i32
    %c0_i32_1 = arith.constant 0 : i32
    return %arg0, %c0_i32, %c0_i32_0 : i32, i32, i32
  }
  func.func @transform_5(%arg0: i32, %arg1: i32) -> (i32, i32) {
    %c0_i32 = arith.constant 0 : i32
    %c0_i32_0 = arith.constant 0 : i32
    return %c0_i32, %arg1 : i32, i32
  }
  func.func @transform_6(%arg0: i32, %arg1: i32) -> (i32, i32) {
    %c0_i32 = arith.constant 0 : i32
    %c0_i32_0 = arith.constant 0 : i32
    return %c0_i32, %arg1 : i32, i32
  }
  func.func @transform_7(%arg0: i32, %arg1: i32) -> (i32, i32, i32) {
    %c0_i32 = arith.constant 0 : i32
    %c0_i32_0 = arith.constant 0 : i32
    return %arg0, %c0_i32, %arg1 : i32, i32, i32
  }
}

module attributes {stable_mosaic.version = 11 : i64} {
  func.func @_lc_bn_silu_mac_kernel(%arg0: i32, %arg1: i32, %arg2: memref<1x8x4xf32, #tpu.memory_space<vmem>>, %arg3: memref<8x1xf32, #tpu.memory_space<vmem>>, %arg4: memref<8x1xf32, #tpu.memory_space<vmem>>, %arg5: memref<8x4x1xf32, #tpu.memory_space<vmem>>, %arg6: memref<1x4x4xf32, #tpu.memory_space<vmem>>) attributes {dimension_semantics = [#tpu.dimension_semantics<parallel>, #tpu.dimension_semantics<parallel>], iteration_bounds = array<i64: 4, 1>, scalar_prefetch = 0 : i64, scratch_operands = 0 : i64, tpu.core_type = #tpu.core_type<tc>, window_params = [{transform_indices = @transform_0, window_bounds = array<i64: 1, 8, 4>}, {pipeline_mode = #tpu.pipeline_mode<synchronous>, transform_indices = @transform_1, window_bounds = array<i64: 8, 1>}, {pipeline_mode = #tpu.pipeline_mode<synchronous>, transform_indices = @transform_2, window_bounds = array<i64: 8, 1>}, {pipeline_mode = #tpu.pipeline_mode<synchronous>, transform_indices = @transform_3, window_bounds = array<i64: 8, 4, 1>}, {transform_indices = @transform_4, window_bounds = array<i64: 1, 4, 4>}]} {
    %c0 = arith.constant 0 : index
    %c0_0 = arith.constant 0 : index
    %c0_1 = arith.constant 0 : index
    %0 = vector.load %arg2[%c0, %c0_0, %c0_1] : memref<1x8x4xf32, #tpu.memory_space<vmem>>, vector<1x8x4xf32>
    %1 = vector.shape_cast %0 : vector<1x8x4xf32> to vector<8x4xf32>
    %c0_2 = arith.constant 0 : index
    %c0_3 = arith.constant 0 : index
    %2 = vector.load %arg3[%c0_2, %c0_3] : memref<8x1xf32, #tpu.memory_space<vmem>>, vector<8x1xf32>
    %3 = vector.broadcast %2 : vector<8x1xf32> to vector<8x4xf32>
    %4 = arith.mulf %1, %3 : vector<8x4xf32>
    %c0_4 = arith.constant 0 : index
    %c0_5 = arith.constant 0 : index
    %5 = vector.load %arg4[%c0_4, %c0_5] : memref<8x1xf32, #tpu.memory_space<vmem>>, vector<8x1xf32>
    %6 = vector.broadcast %5 : vector<8x1xf32> to vector<8x4xf32>
    %7 = arith.addf %4, %6 : vector<8x4xf32>
    %8 = arith.negf %7 : vector<8x4xf32>
    %9 = math.exp %8 : vector<8x4xf32>
    %cst = arith.constant 1.000000e+00 : f32
    %10 = vector.broadcast %cst : f32 to vector<8x4xf32>
    %11 = arith.addf %10, %9 : vector<8x4xf32>
    %12 = arith.divf %10, %11 : vector<8x4xf32>
    %13 = arith.mulf %7, %12 : vector<8x4xf32>
    %cst_6 = arith.constant 0.000000e+00 : f32
    %14 = vector.broadcast %cst_6 : f32 to vector<4x4xf32>
    %15 = vector.extract_strided_slice %13 {offsets = [0, 0], sizes = [1, 4], strides = [1, 1]} : vector<8x4xf32> to vector<1x4xf32>
    %c0_7 = arith.constant 0 : index
    %c0_8 = arith.constant 0 : index
    %c0_9 = arith.constant 0 : index
    %16 = vector.load %arg5[%c0_7, %c0_8, %c0_9] : memref<8x4x1xf32, #tpu.memory_space<vmem>>, vector<1x4x1xf32>
    %17 = vector.shape_cast %16 : vector<1x4x1xf32> to vector<4x1xf32>
    %18 = vector.broadcast %15 : vector<1x4xf32> to vector<4x4xf32>
    %19 = vector.broadcast %17 : vector<4x1xf32> to vector<4x4xf32>
    %20 = arith.mulf %18, %19 : vector<4x4xf32>
    %21 = arith.addf %14, %20 : vector<4x4xf32>
    %22 = vector.extract_strided_slice %13 {offsets = [1, 0], sizes = [1, 4], strides = [1, 1]} : vector<8x4xf32> to vector<1x4xf32>
    %c1 = arith.constant 1 : index
    %c0_10 = arith.constant 0 : index
    %c0_11 = arith.constant 0 : index
    %23 = vector.load %arg5[%c1, %c0_10, %c0_11] : memref<8x4x1xf32, #tpu.memory_space<vmem>>, vector<1x4x1xf32>
    %24 = vector.shape_cast %23 : vector<1x4x1xf32> to vector<4x1xf32>
    %25 = vector.broadcast %22 : vector<1x4xf32> to vector<4x4xf32>
    %26 = vector.broadcast %24 : vector<4x1xf32> to vector<4x4xf32>
    %27 = arith.mulf %25, %26 : vector<4x4xf32>
    %28 = arith.addf %21, %27 : vector<4x4xf32>
    %29 = vector.extract_strided_slice %13 {offsets = [2, 0], sizes = [1, 4], strides = [1, 1]} : vector<8x4xf32> to vector<1x4xf32>
    %c2 = arith.constant 2 : index
    %c0_12 = arith.constant 0 : index
    %c0_13 = arith.constant 0 : index
    %30 = vector.load %arg5[%c2, %c0_12, %c0_13] : memref<8x4x1xf32, #tpu.memory_space<vmem>>, vector<1x4x1xf32>
    %31 = vector.shape_cast %30 : vector<1x4x1xf32> to vector<4x1xf32>
    %32 = vector.broadcast %29 : vector<1x4xf32> to vector<4x4xf32>
    %33 = vector.broadcast %31 : vector<4x1xf32> to vector<4x4xf32>
    %34 = arith.mulf %32, %33 : vector<4x4xf32>
    %35 = arith.addf %28, %34 : vector<4x4xf32>
    %36 = vector.extract_strided_slice %13 {offsets = [3, 0], sizes = [1, 4], strides = [1, 1]} : vector<8x4xf32> to vector<1x4xf32>
    %c3 = arith.constant 3 : index
    %c0_14 = arith.constant 0 : index
    %c0_15 = arith.constant 0 : index
    %37 = vector.load %arg5[%c3, %c0_14, %c0_15] : memref<8x4x1xf32, #tpu.memory_space<vmem>>, vector<1x4x1xf32>
    %38 = vector.shape_cast %37 : vector<1x4x1xf32> to vector<4x1xf32>
    %39 = vector.broadcast %36 : vector<1x4xf32> to vector<4x4xf32>
    %40 = vector.broadcast %38 : vector<4x1xf32> to vector<4x4xf32>
    %41 = arith.mulf %39, %40 : vector<4x4xf32>
    %42 = arith.addf %35, %41 : vector<4x4xf32>
    %43 = vector.extract_strided_slice %13 {offsets = [4, 0], sizes = [1, 4], strides = [1, 1]} : vector<8x4xf32> to vector<1x4xf32>
    %c4 = arith.constant 4 : index
    %c0_16 = arith.constant 0 : index
    %c0_17 = arith.constant 0 : index
    %44 = vector.load %arg5[%c4, %c0_16, %c0_17] : memref<8x4x1xf32, #tpu.memory_space<vmem>>, vector<1x4x1xf32>
    %45 = vector.shape_cast %44 : vector<1x4x1xf32> to vector<4x1xf32>
    %46 = vector.broadcast %43 : vector<1x4xf32> to vector<4x4xf32>
    %47 = vector.broadcast %45 : vector<4x1xf32> to vector<4x4xf32>
    %48 = arith.mulf %46, %47 : vector<4x4xf32>
    %49 = arith.addf %42, %48 : vector<4x4xf32>
    %50 = vector.extract_strided_slice %13 {offsets = [5, 0], sizes = [1, 4], strides = [1, 1]} : vector<8x4xf32> to vector<1x4xf32>
    %c5 = arith.constant 5 : index
    %c0_18 = arith.constant 0 : index
    %c0_19 = arith.constant 0 : index
    %51 = vector.load %arg5[%c5, %c0_18, %c0_19] : memref<8x4x1xf32, #tpu.memory_space<vmem>>, vector<1x4x1xf32>
    %52 = vector.shape_cast %51 : vector<1x4x1xf32> to vector<4x1xf32>
    %53 = vector.broadcast %50 : vector<1x4xf32> to vector<4x4xf32>
    %54 = vector.broadcast %52 : vector<4x1xf32> to vector<4x4xf32>
    %55 = arith.mulf %53, %54 : vector<4x4xf32>
    %56 = arith.addf %49, %55 : vector<4x4xf32>
    %57 = vector.extract_strided_slice %13 {offsets = [6, 0], sizes = [1, 4], strides = [1, 1]} : vector<8x4xf32> to vector<1x4xf32>
    %c6 = arith.constant 6 : index
    %c0_20 = arith.constant 0 : index
    %c0_21 = arith.constant 0 : index
    %58 = vector.load %arg5[%c6, %c0_20, %c0_21] : memref<8x4x1xf32, #tpu.memory_space<vmem>>, vector<1x4x1xf32>
    %59 = vector.shape_cast %58 : vector<1x4x1xf32> to vector<4x1xf32>
    %60 = vector.broadcast %57 : vector<1x4xf32> to vector<4x4xf32>
    %61 = vector.broadcast %59 : vector<4x1xf32> to vector<4x4xf32>
    %62 = arith.mulf %60, %61 : vector<4x4xf32>
    %63 = arith.addf %56, %62 : vector<4x4xf32>
    %64 = vector.extract_strided_slice %13 {offsets = [7, 0], sizes = [1, 4], strides = [1, 1]} : vector<8x4xf32> to vector<1x4xf32>
    %c7 = arith.constant 7 : index
    %c0_22 = arith.constant 0 : index
    %c0_23 = arith.constant 0 : index
    %65 = vector.load %arg5[%c7, %c0_22, %c0_23] : memref<8x4x1xf32, #tpu.memory_space<vmem>>, vector<1x4x1xf32>
    %66 = vector.shape_cast %65 : vector<1x4x1xf32> to vector<4x1xf32>
    %67 = vector.broadcast %64 : vector<1x4xf32> to vector<4x4xf32>
    %68 = vector.broadcast %66 : vector<4x1xf32> to vector<4x4xf32>
    %69 = arith.mulf %67, %68 : vector<4x4xf32>
    %70 = arith.addf %63, %69 : vector<4x4xf32>
    %c0_24 = arith.constant 0 : index
    %c0_25 = arith.constant 0 : index
    %c0_26 = arith.constant 0 : index
    %71 = vector.load %arg6[%c0_24, %c0_25, %c0_26] : memref<1x4x4xf32, #tpu.memory_space<vmem>>, vector<1x4x4xf32>
    %72 = vector.shape_cast %71 : vector<1x4x4xf32> to vector<4x4xf32>
    %73 = vector.shape_cast %70 : vector<4x4xf32> to vector<1x4x4xf32>
    tpu.vector_store %arg6[%c0_24, %c0_25, %c0_26], %73 {strides = array<i32>} : memref<1x4x4xf32, #tpu.memory_space<vmem>>, vector<1x4x4xf32>,
    return
  }
  func.func @transform_0(%arg0: i32, %arg1: i32) -> (i32, i32, i32) {
    %c0_i32 = arith.constant 0 : i32
    %c0_i32_0 = arith.constant 0 : i32
    return %arg0, %c0_i32, %arg1 : i32, i32, i32
  }
  func.func @transform_1(%arg0: i32, %arg1: i32) -> (i32, i32) {
    %c0_i32 = arith.constant 0 : i32
    %c0_i32_0 = arith.constant 0 : i32
    %c0_i32_1 = arith.constant 0 : i32
    return %c0_i32, %c0_i32_0 : i32, i32
  }
  func.func @transform_2(%arg0: i32, %arg1: i32) -> (i32, i32) {
    %c0_i32 = arith.constant 0 : i32
    %c0_i32_0 = arith.constant 0 : i32
    %c0_i32_1 = arith.constant 0 : i32
    return %c0_i32, %c0_i32_0 : i32, i32
  }
  func.func @transform_3(%arg0: i32, %arg1: i32) -> (i32, i32, i32) {
    %c0_i32 = arith.constant 0 : i32
    %c0_i32_0 = arith.constant 0 : i32
    %c0_i32_1 = arith.constant 0 : i32
    %c0_i32_2 = arith.constant 0 : i32
    return %c0_i32, %c0_i32_0, %c0_i32_1 : i32, i32, i32
  }
  func.func @transform_4(%arg0: i32, %arg1: i32) -> (i32, i32, i32) {
    %c0_i32 = arith.constant 0 : i32
    %c0_i32_0 = arith.constant 0 : i32
    return %arg0, %c0_i32, %arg1 : i32, i32, i32
  }
}

module attributes {stable_mosaic.version = 11 : i64} {
  func.func @_lc_tail_ds_kernel(%arg0: i32, %arg1: i32, %arg2: memref<1x8x2xf32, #tpu.memory_space<vmem>>, %arg3: memref<8x1xf32, #tpu.memory_space<vmem>>, %arg4: memref<8x1xf32, #tpu.memory_space<vmem>>, %arg5: memref<8x4x1xf32, #tpu.memory_space<vmem>>, %arg6: memref<1x4x8xf32, #tpu.memory_space<vmem>>, %arg7: memref<8x2xf32, #tpu.memory_space<vmem>>, %arg8: memref<1x2xf32, #tpu.memory_space<vmem>>, %arg9: memref<1x4x2xf32, #tpu.memory_space<vmem>>) attributes {dimension_semantics = [#tpu.dimension_semantics<parallel>, #tpu.dimension_semantics<parallel>], iteration_bounds = array<i64: 4, 1>, scalar_prefetch = 0 : i64, scratch_operands = 0 : i64, tpu.core_type = #tpu.core_type<tc>, window_params = [{transform_indices = @transform_0, window_bounds = array<i64: 1, 8, 2>}, {pipeline_mode = #tpu.pipeline_mode<synchronous>, transform_indices = @transform_1, window_bounds = array<i64: 8, 1>}, {pipeline_mode = #tpu.pipeline_mode<synchronous>, transform_indices = @transform_2, window_bounds = array<i64: 8, 1>}, {pipeline_mode = #tpu.pipeline_mode<synchronous>, transform_indices = @transform_3, window_bounds = array<i64: 8, 4, 1>}, {transform_indices = @transform_4, window_bounds = array<i64: 1, 4, 8>}, {transform_indices = @transform_5, window_bounds = array<i64: 8, 2>}, {transform_indices = @transform_6, window_bounds = array<i64: 1, 2>}, {transform_indices = @transform_7, window_bounds = array<i64: 1, 4, 2>}]} {
    %c0 = arith.constant 0 : index
    %c0_0 = arith.constant 0 : index
    %c0_1 = arith.constant 0 : index
    %0 = vector.load %arg2[%c0, %c0_0, %c0_1] : memref<1x8x2xf32, #tpu.memory_space<vmem>>, vector<1x8x2xf32>
    %1 = vector.shape_cast %0 : vector<1x8x2xf32> to vector<8x2xf32>
    %c0_2 = arith.constant 0 : index
    %c0_3 = arith.constant 0 : index
    %2 = vector.load %arg3[%c0_2, %c0_3] : memref<8x1xf32, #tpu.memory_space<vmem>>, vector<8x1xf32>
    %3 = vector.broadcast %2 : vector<8x1xf32> to vector<8x2xf32>
    %4 = arith.mulf %1, %3 : vector<8x2xf32>
    %c0_4 = arith.constant 0 : index
    %c0_5 = arith.constant 0 : index
    %5 = vector.load %arg4[%c0_4, %c0_5] : memref<8x1xf32, #tpu.memory_space<vmem>>, vector<8x1xf32>
    %6 = vector.broadcast %5 : vector<8x1xf32> to vector<8x2xf32>
    %7 = arith.addf %4, %6 : vector<8x2xf32>
    %8 = arith.negf %7 : vector<8x2xf32>
    %9 = math.exp %8 : vector<8x2xf32>
    %cst = arith.constant 1.000000e+00 : f32
    %10 = vector.broadcast %cst : f32 to vector<8x2xf32>
    %11 = arith.addf %10, %9 : vector<8x2xf32>
    %12 = arith.divf %10, %11 : vector<8x2xf32>
    %13 = arith.mulf %7, %12 : vector<8x2xf32>
    %cst_6 = arith.constant 0.000000e+00 : f32
    %14 = vector.broadcast %cst_6 : f32 to vector<4x2xf32>
    %15 = vector.extract_strided_slice %13 {offsets = [0, 0], sizes = [1, 2], strides = [1, 1]} : vector<8x2xf32> to vector<1x2xf32>
    %c0_7 = arith.constant 0 : index
    %c0_8 = arith.constant 0 : index
    %c0_9 = arith.constant 0 : index
    %16 = vector.load %arg5[%c0_7, %c0_8, %c0_9] : memref<8x4x1xf32, #tpu.memory_space<vmem>>, vector<1x4x1xf32>
    %17 = vector.shape_cast %16 : vector<1x4x1xf32> to vector<4x1xf32>
    %18 = vector.broadcast %15 : vector<1x2xf32> to vector<4x2xf32>
    %19 = vector.broadcast %17 : vector<4x1xf32> to vector<4x2xf32>
    %20 = arith.mulf %18, %19 : vector<4x2xf32>
    %21 = arith.addf %14, %20 : vector<4x2xf32>
    %22 = vector.extract_strided_slice %13 {offsets = [1, 0], sizes = [1, 2], strides = [1, 1]} : vector<8x2xf32> to vector<1x2xf32>
    %c1 = arith.constant 1 : index
    %c0_10 = arith.constant 0 : index
    %c0_11 = arith.constant 0 : index
    %23 = vector.load %arg5[%c1, %c0_10, %c0_11] : memref<8x4x1xf32, #tpu.memory_space<vmem>>, vector<1x4x1xf32>
    %24 = vector.shape_cast %23 : vector<1x4x1xf32> to vector<4x1xf32>
    %25 = vector.broadcast %22 : vector<1x2xf32> to vector<4x2xf32>
    %26 = vector.broadcast %24 : vector<4x1xf32> to vector<4x2xf32>
    %27 = arith.mulf %25, %26 : vector<4x2xf32>
    %28 = arith.addf %21, %27 : vector<4x2xf32>
    %29 = vector.extract_strided_slice %13 {offsets = [2, 0], sizes = [1, 2], strides = [1, 1]} : vector<8x2xf32> to vector<1x2xf32>
    %c2 = arith.constant 2 : index
    %c0_12 = arith.constant 0 : index
    %c0_13 = arith.constant 0 : index
    %30 = vector.load %arg5[%c2, %c0_12, %c0_13] : memref<8x4x1xf32, #tpu.memory_space<vmem>>, vector<1x4x1xf32>
    %31 = vector.shape_cast %30 : vector<1x4x1xf32> to vector<4x1xf32>
    %32 = vector.broadcast %29 : vector<1x2xf32> to vector<4x2xf32>
    %33 = vector.broadcast %31 : vector<4x1xf32> to vector<4x2xf32>
    %34 = arith.mulf %32, %33 : vector<4x2xf32>
    %35 = arith.addf %28, %34 : vector<4x2xf32>
    %36 = vector.extract_strided_slice %13 {offsets = [3, 0], sizes = [1, 2], strides = [1, 1]} : vector<8x2xf32> to vector<1x2xf32>
    %c3 = arith.constant 3 : index
    %c0_14 = arith.constant 0 : index
    %c0_15 = arith.constant 0 : index
    %37 = vector.load %arg5[%c3, %c0_14, %c0_15] : memref<8x4x1xf32, #tpu.memory_space<vmem>>, vector<1x4x1xf32>
    %38 = vector.shape_cast %37 : vector<1x4x1xf32> to vector<4x1xf32>
    %39 = vector.broadcast %36 : vector<1x2xf32> to vector<4x2xf32>
    %40 = vector.broadcast %38 : vector<4x1xf32> to vector<4x2xf32>
    %41 = arith.mulf %39, %40 : vector<4x2xf32>
    %42 = arith.addf %35, %41 : vector<4x2xf32>
    %43 = vector.extract_strided_slice %13 {offsets = [4, 0], sizes = [1, 2], strides = [1, 1]} : vector<8x2xf32> to vector<1x2xf32>
    %c4 = arith.constant 4 : index
    %c0_16 = arith.constant 0 : index
    %c0_17 = arith.constant 0 : index
    %44 = vector.load %arg5[%c4, %c0_16, %c0_17] : memref<8x4x1xf32, #tpu.memory_space<vmem>>, vector<1x4x1xf32>
    %45 = vector.shape_cast %44 : vector<1x4x1xf32> to vector<4x1xf32>
    %46 = vector.broadcast %43 : vector<1x2xf32> to vector<4x2xf32>
    %47 = vector.broadcast %45 : vector<4x1xf32> to vector<4x2xf32>
    %48 = arith.mulf %46, %47 : vector<4x2xf32>
    %49 = arith.addf %42, %48 : vector<4x2xf32>
    %50 = vector.extract_strided_slice %13 {offsets = [5, 0], sizes = [1, 2], strides = [1, 1]} : vector<8x2xf32> to vector<1x2xf32>
    %c5 = arith.constant 5 : index
    %c0_18 = arith.constant 0 : index
    %c0_19 = arith.constant 0 : index
    %51 = vector.load %arg5[%c5, %c0_18, %c0_19] : memref<8x4x1xf32, #tpu.memory_space<vmem>>, vector<1x4x1xf32>
    %52 = vector.shape_cast %51 : vector<1x4x1xf32> to vector<4x1xf32>
    %53 = vector.broadcast %50 : vector<1x2xf32> to vector<4x2xf32>
    %54 = vector.broadcast %52 : vector<4x1xf32> to vector<4x2xf32>
    %55 = arith.mulf %53, %54 : vector<4x2xf32>
    %56 = arith.addf %49, %55 : vector<4x2xf32>
    %57 = vector.extract_strided_slice %13 {offsets = [6, 0], sizes = [1, 2], strides = [1, 1]} : vector<8x2xf32> to vector<1x2xf32>
    %c6 = arith.constant 6 : index
    %c0_20 = arith.constant 0 : index
    %c0_21 = arith.constant 0 : index
    %58 = vector.load %arg5[%c6, %c0_20, %c0_21] : memref<8x4x1xf32, #tpu.memory_space<vmem>>, vector<1x4x1xf32>
    %59 = vector.shape_cast %58 : vector<1x4x1xf32> to vector<4x1xf32>
    %60 = vector.broadcast %57 : vector<1x2xf32> to vector<4x2xf32>
    %61 = vector.broadcast %59 : vector<4x1xf32> to vector<4x2xf32>
    %62 = arith.mulf %60, %61 : vector<4x2xf32>
    %63 = arith.addf %56, %62 : vector<4x2xf32>
    %64 = vector.extract_strided_slice %13 {offsets = [7, 0], sizes = [1, 2], strides = [1, 1]} : vector<8x2xf32> to vector<1x2xf32>
    %c7 = arith.constant 7 : index
    %c0_22 = arith.constant 0 : index
    %c0_23 = arith.constant 0 : index
    %65 = vector.load %arg5[%c7, %c0_22, %c0_23] : memref<8x4x1xf32, #tpu.memory_space<vmem>>, vector<1x4x1xf32>
    %66 = vector.shape_cast %65 : vector<1x4x1xf32> to vector<4x1xf32>
    %67 = vector.broadcast %64 : vector<1x2xf32> to vector<4x2xf32>
    %68 = vector.broadcast %66 : vector<4x1xf32> to vector<4x2xf32>
    %69 = arith.mulf %67, %68 : vector<4x2xf32>
    %70 = arith.addf %63, %69 : vector<4x2xf32>
    %c0_24 = arith.constant 0 : index
    %c0_25 = arith.constant 0 : index
    %c0_26 = arith.constant 0 : index
    %71 = vector.load %arg6[%c0_24, %c0_25, %c0_26] : memref<1x4x8xf32, #tpu.memory_space<vmem>>, vector<1x4x8xf32>
    %72 = vector.shape_cast %71 : vector<1x4x8xf32> to vector<4x8xf32>
    %c0_27 = arith.constant 0 : index
    %c0_28 = arith.constant 0 : index
    %73 = vector.load %arg7[%c0_27, %c0_28] : memref<8x2xf32, #tpu.memory_space<vmem>>, vector<8x2xf32>
    %cst_29 = arith.constant dense<0.000000e+00> : vector<4x2xf32>
    %74 = tpu.matmul %72, %73, %cst_29 {dimension_numbers = #tpu.dot_dimension_numbers<[1], [0], [0], [1], [0, 0, 1, 1], [], []>} : vector<4x8xf32>, vector<8x2xf32>, vector<4x2xf32> -> vector<4x2xf32>
    %75 = arith.addf %70, %74 : vector<4x2xf32>
    %c0_30 = arith.constant 0 : index
    %c0_31 = arith.constant 0 : index
    %76 = vector.load %arg8[%c0_30, %c0_31] : memref<1x2xf32, #tpu.memory_space<vmem>>, vector<1x2xf32>
    %77 = vector.broadcast %76 : vector<1x2xf32> to vector<4x2xf32>
    %78 = arith.addf %75, %77 : vector<4x2xf32>
    %c0_32 = arith.constant 0 : index
    %c0_33 = arith.constant 0 : index
    %c0_34 = arith.constant 0 : index
    %79 = vector.load %arg9[%c0_32, %c0_33, %c0_34] : memref<1x4x2xf32, #tpu.memory_space<vmem>>, vector<1x4x2xf32>
    %80 = vector.shape_cast %79 : vector<1x4x2xf32> to vector<4x2xf32>
    %81 = vector.shape_cast %78 : vector<4x2xf32> to vector<1x4x2xf32>
    tpu.vector_store %arg9[%c0_32, %c0_33, %c0_34], %81 {strides = array<i32>} : memref<1x4x2xf32, #tpu.memory_space<vmem>>, vector<1x4x2xf32>,
    return
  }
  func.func @transform_0(%arg0: i32, %arg1: i32) -> (i32, i32, i32) {
    %c0_i32 = arith.constant 0 : i32
    %c0_i32_0 = arith.constant 0 : i32
    return %arg0, %c0_i32, %arg1 : i32, i32, i32
  }
  func.func @transform_1(%arg0: i32, %arg1: i32) -> (i32, i32) {
    %c0_i32 = arith.constant 0 : i32
    %c0_i32_0 = arith.constant 0 : i32
    %c0_i32_1 = arith.constant 0 : i32
    return %c0_i32, %c0_i32_0 : i32, i32
  }
  func.func @transform_2(%arg0: i32, %arg1: i32) -> (i32, i32) {
    %c0_i32 = arith.constant 0 : i32
    %c0_i32_0 = arith.constant 0 : i32
    %c0_i32_1 = arith.constant 0 : i32
    return %c0_i32, %c0_i32_0 : i32, i32
  }
  func.func @transform_3(%arg0: i32, %arg1: i32) -> (i32, i32, i32) {
    %c0_i32 = arith.constant 0 : i32
    %c0_i32_0 = arith.constant 0 : i32
    %c0_i32_1 = arith.constant 0 : i32
    %c0_i32_2 = arith.constant 0 : i32
    return %c0_i32, %c0_i32_0, %c0_i32_1 : i32, i32, i32
  }
  func.func @transform_4(%arg0: i32, %arg1: i32) -> (i32, i32, i32) {
    %c0_i32 = arith.constant 0 : i32
    %c0_i32_0 = arith.constant 0 : i32
    %c0_i32_1 = arith.constant 0 : i32
    return %arg0, %c0_i32, %c0_i32_0 : i32, i32, i32
  }
  func.func @transform_5(%arg0: i32, %arg1: i32) -> (i32, i32) {
    %c0_i32 = arith.constant 0 : i32
    %c0_i32_0 = arith.constant 0 : i32
    return %c0_i32, %arg1 : i32, i32
  }
  func.func @transform_6(%arg0: i32, %arg1: i32) -> (i32, i32) {
    %c0_i32 = arith.constant 0 : i32
    %c0_i32_0 = arith.constant 0 : i32
    return %c0_i32, %arg1 : i32, i32
  }
  func.func @transform_7(%arg0: i32, %arg1: i32) -> (i32, i32, i32) {
    %c0_i32 = arith.constant 0 : i32
    %c0_i32_0 = arith.constant 0 : i32
    return %arg0, %c0_i32, %arg1 : i32, i32, i32
  }
}

module attributes {stable_mosaic.version = 11 : i64} {
  func.func @kernel(%arg0: i32, %arg1: memref<4x16xf32, #tpu.memory_space<vmem>>, %arg2: memref<1x16xf32, #tpu.memory_space<vmem>>, %arg3: memref<1x16xf32, #tpu.memory_space<vmem>>, %arg4: memref<16x256xbf16, #tpu.memory_space<vmem>>, %arg5: memref<1x256xf32, #tpu.memory_space<vmem>>, %arg6: memref<1x256xf32, #tpu.memory_space<vmem>>, %arg7: memref<1x256xf32, #tpu.memory_space<vmem>>, %arg8: memref<256x256xbf16, #tpu.memory_space<vmem>>, %arg9: memref<1x256xf32, #tpu.memory_space<vmem>>, %arg10: memref<16x256xbf16, #tpu.memory_space<vmem>>, %arg11: memref<1x256xf32, #tpu.memory_space<vmem>>, %arg12: memref<1x256xf32, #tpu.memory_space<vmem>>, %arg13: memref<1x256xf32, #tpu.memory_space<vmem>>, %arg14: memref<256x256xbf16, #tpu.memory_space<vmem>>, %arg15: memref<1x256xf32, #tpu.memory_space<vmem>>, %arg16: memref<1x256xf32, #tpu.memory_space<vmem>>, %arg17: memref<1x256xf32, #tpu.memory_space<vmem>>, %arg18: memref<256x256xbf16, #tpu.memory_space<vmem>>, %arg19: memref<1x256xf32, #tpu.memory_space<vmem>>, %arg20: memref<1x256xf32, #tpu.memory_space<vmem>>, %arg21: memref<1x256xf32, #tpu.memory_space<vmem>>, %arg22: memref<256x256xbf16, #tpu.memory_space<vmem>>, %arg23: memref<1x256xf32, #tpu.memory_space<vmem>>, %arg24: memref<1x256xf32, #tpu.memory_space<vmem>>, %arg25: memref<1x256xf32, #tpu.memory_space<vmem>>, %arg26: memref<256x256xbf16, #tpu.memory_space<vmem>>, %arg27: memref<1x256xf32, #tpu.memory_space<vmem>>, %arg28: memref<1x256xf32, #tpu.memory_space<vmem>>, %arg29: memref<1x256xf32, #tpu.memory_space<vmem>>, %arg30: memref<256x3xbf16, #tpu.memory_space<vmem>>, %arg31: memref<1x3xf32, #tpu.memory_space<vmem>>, %arg32: memref<4x3xf32, #tpu.memory_space<vmem>>) attributes {dimension_semantics = [#tpu.dimension_semantics<parallel>], iteration_bounds = array<i64: 1>, scalar_prefetch = 0 : i64, scratch_operands = 0 : i64, tpu.core_type = #tpu.core_type<tc>, window_params = [{transform_indices = @transform_0, window_bounds = array<i64: 4, 16>}, {pipeline_mode = #tpu.pipeline_mode<synchronous>, transform_indices = @transform_1, window_bounds = array<i64: 1, 16>}, {pipeline_mode = #tpu.pipeline_mode<synchronous>, transform_indices = @transform_2, window_bounds = array<i64: 1, 16>}, {pipeline_mode = #tpu.pipeline_mode<synchronous>, transform_indices = @transform_3, window_bounds = array<i64: 16, 256>}, {pipeline_mode = #tpu.pipeline_mode<synchronous>, transform_indices = @transform_4, window_bounds = array<i64: 1, 256>}, {pipeline_mode = #tpu.pipeline_mode<synchronous>, transform_indices = @transform_5, window_bounds = array<i64: 1, 256>}, {pipeline_mode = #tpu.pipeline_mode<synchronous>, transform_indices = @transform_6, window_bounds = array<i64: 1, 256>}, {pipeline_mode = #tpu.pipeline_mode<synchronous>, transform_indices = @transform_7, window_bounds = array<i64: 256, 256>}, {pipeline_mode = #tpu.pipeline_mode<synchronous>, transform_indices = @transform_8, window_bounds = array<i64: 1, 256>}, {pipeline_mode = #tpu.pipeline_mode<synchronous>, transform_indices = @transform_9, window_bounds = array<i64: 16, 256>}, {pipeline_mode = #tpu.pipeline_mode<synchronous>, transform_indices = @transform_10, window_bounds = array<i64: 1, 256>}, {pipeline_mode = #tpu.pipeline_mode<synchronous>, transform_indices = @transform_11, window_bounds = array<i64: 1, 256>}, {pipeline_mode = #tpu.pipeline_mode<synchronous>, transform_indices = @transform_12, window_bounds = array<i64: 1, 256>}, {pipeline_mode = #tpu.pipeline_mode<synchronous>, transform_indices = @transform_13, window_bounds = array<i64: 256, 256>}, {pipeline_mode = #tpu.pipeline_mode<synchronous>, transform_indices = @transform_14, window_bounds = array<i64: 1, 256>}, {pipeline_mode = #tpu.pipeline_mode<synchronous>, transform_indices = @transform_15, window_bounds = array<i64: 1, 256>}, {pipeline_mode = #tpu.pipeline_mode<synchronous>, transform_indices = @transform_16, window_bounds = array<i64: 1, 256>}, {pipeline_mode = #tpu.pipeline_mode<synchronous>, transform_indices = @transform_17, window_bounds = array<i64: 256, 256>}, {pipeline_mode = #tpu.pipeline_mode<synchronous>, transform_indices = @transform_18, window_bounds = array<i64: 1, 256>}, {pipeline_mode = #tpu.pipeline_mode<synchronous>, transform_indices = @transform_19, window_bounds = array<i64: 1, 256>}, {pipeline_mode = #tpu.pipeline_mode<synchronous>, transform_indices = @transform_20, window_bounds = array<i64: 1, 256>}, {pipeline_mode = #tpu.pipeline_mode<synchronous>, transform_indices = @transform_21, window_bounds = array<i64: 256, 256>}, {pipeline_mode = #tpu.pipeline_mode<synchronous>, transform_indices = @transform_22, window_bounds = array<i64: 1, 256>}, {pipeline_mode = #tpu.pipeline_mode<synchronous>, transform_indices = @transform_23, window_bounds = array<i64: 1, 256>}, {pipeline_mode = #tpu.pipeline_mode<synchronous>, transform_indices = @transform_24, window_bounds = array<i64: 1, 256>}, {pipeline_mode = #tpu.pipeline_mode<synchronous>, transform_indices = @transform_25, window_bounds = array<i64: 256, 256>}, {pipeline_mode = #tpu.pipeline_mode<synchronous>, transform_indices = @transform_26, window_bounds = array<i64: 1, 256>}, {pipeline_mode = #tpu.pipeline_mode<synchronous>, transform_indices = @transform_27, window_bounds = array<i64: 1, 256>}, {pipeline_mode = #tpu.pipeline_mode<synchronous>, transform_indices = @transform_28, window_bounds = array<i64: 1, 256>}, {pipeline_mode = #tpu.pipeline_mode<synchronous>, transform_indices = @transform_29, window_bounds = array<i64: 256, 3>}, {pipeline_mode = #tpu.pipeline_mode<synchronous>, transform_indices = @transform_30, window_bounds = array<i64: 1, 3>}, {transform_indices = @transform_31, window_bounds = array<i64: 4, 3>}]} {
    %c0 = arith.constant 0 : index
    %c0_0 = arith.constant 0 : index
    %0 = vector.load %arg1[%c0, %c0_0] : memref<4x16xf32, #tpu.memory_space<vmem>>, vector<4x16xf32>
    %c0_1 = arith.constant 0 : index
    %c0_2 = arith.constant 0 : index
    %1 = vector.load %arg2[%c0_1, %c0_2] : memref<1x16xf32, #tpu.memory_space<vmem>>, vector<1x16xf32>
    %c0_3 = arith.constant 0 : index
    %c0_4 = arith.constant 0 : index
    %2 = vector.load %arg3[%c0_3, %c0_4] : memref<1x16xf32, #tpu.memory_space<vmem>>, vector<1x16xf32>
    %c0_5 = arith.constant 0 : index
    %c0_6 = arith.constant 0 : index
    %3 = vector.load %arg4[%c0_5, %c0_6] : memref<16x256xbf16, #tpu.memory_space<vmem>>, vector<16x256xbf16>
    %c0_7 = arith.constant 0 : index
    %c0_8 = arith.constant 0 : index
    %4 = vector.load %arg5[%c0_7, %c0_8] : memref<1x256xf32, #tpu.memory_space<vmem>>, vector<1x256xf32>
    %c0_9 = arith.constant 0 : index
    %c0_10 = arith.constant 0 : index
    %5 = vector.load %arg6[%c0_9, %c0_10] : memref<1x256xf32, #tpu.memory_space<vmem>>, vector<1x256xf32>
    %c0_11 = arith.constant 0 : index
    %c0_12 = arith.constant 0 : index
    %6 = vector.load %arg7[%c0_11, %c0_12] : memref<1x256xf32, #tpu.memory_space<vmem>>, vector<1x256xf32>
    %c0_13 = arith.constant 0 : index
    %c0_14 = arith.constant 0 : index
    %7 = vector.load %arg8[%c0_13, %c0_14] : memref<256x256xbf16, #tpu.memory_space<vmem>>, vector<256x256xbf16>
    %c0_15 = arith.constant 0 : index
    %c0_16 = arith.constant 0 : index
    %8 = vector.load %arg9[%c0_15, %c0_16] : memref<1x256xf32, #tpu.memory_space<vmem>>, vector<1x256xf32>
    %c0_17 = arith.constant 0 : index
    %c0_18 = arith.constant 0 : index
    %9 = vector.load %arg10[%c0_17, %c0_18] : memref<16x256xbf16, #tpu.memory_space<vmem>>, vector<16x256xbf16>
    %c0_19 = arith.constant 0 : index
    %c0_20 = arith.constant 0 : index
    %10 = vector.load %arg11[%c0_19, %c0_20] : memref<1x256xf32, #tpu.memory_space<vmem>>, vector<1x256xf32>
    %11 = vector.broadcast %1 : vector<1x16xf32> to vector<4x16xf32>
    %12 = arith.mulf %0, %11 : vector<4x16xf32>
    %13 = vector.broadcast %2 : vector<1x16xf32> to vector<4x16xf32>
    %14 = arith.addf %12, %13 : vector<4x16xf32>
    %15 = arith.negf %14 : vector<4x16xf32>
    %16 = math.exp %15 : vector<4x16xf32>
    %cst = arith.constant 1.000000e+00 : f32
    %17 = vector.broadcast %cst : f32 to vector<4x16xf32>
    %18 = arith.addf %17, %16 : vector<4x16xf32>
    %19 = arith.divf %17, %18 : vector<4x16xf32>
    %20 = arith.mulf %14, %19 : vector<4x16xf32>
    %21 = arith.truncf %20 : vector<4x16xf32> to vector<4x16xbf16>
    %cst_21 = arith.constant dense<0.000000e+00> : vector<4x256xf32>
    %22 = tpu.matmul %21, %3, %cst_21 {dimension_numbers = #tpu.dot_dimension_numbers<[1], [0], [0], [1], [0, 0, 1, 1], [], []>} : vector<4x16xbf16>, vector<16x256xbf16>, vector<4x256xf32> -> vector<4x256xf32>
    %23 = vector.broadcast %4 : vector<1x256xf32> to vector<4x256xf32>
    %24 = arith.addf %22, %23 : vector<4x256xf32>
    %25 = vector.broadcast %5 : vector<1x256xf32> to vector<4x256xf32>
    %26 = arith.mulf %24, %25 : vector<4x256xf32>
    %27 = vector.broadcast %6 : vector<1x256xf32> to vector<4x256xf32>
    %28 = arith.addf %26, %27 : vector<4x256xf32>
    %29 = arith.negf %28 : vector<4x256xf32>
    %30 = math.exp %29 : vector<4x256xf32>
    %cst_22 = arith.constant 1.000000e+00 : f32
    %31 = vector.broadcast %cst_22 : f32 to vector<4x256xf32>
    %32 = arith.addf %31, %30 : vector<4x256xf32>
    %33 = arith.divf %31, %32 : vector<4x256xf32>
    %34 = arith.mulf %28, %33 : vector<4x256xf32>
    %35 = arith.truncf %34 : vector<4x256xf32> to vector<4x256xbf16>
    %cst_23 = arith.constant dense<0.000000e+00> : vector<4x256xf32>
    %36 = tpu.matmul %35, %7, %cst_23 {dimension_numbers = #tpu.dot_dimension_numbers<[1], [0], [0], [1], [0, 0, 1, 1], [], []>} : vector<4x256xbf16>, vector<256x256xbf16>, vector<4x256xf32> -> vector<4x256xf32>
    %37 = vector.broadcast %8 : vector<1x256xf32> to vector<4x256xf32>
    %38 = arith.addf %36, %37 : vector<4x256xf32>
    %39 = arith.truncf %0 : vector<4x16xf32> to vector<4x16xbf16>
    %cst_24 = arith.constant dense<0.000000e+00> : vector<4x256xf32>
    %40 = tpu.matmul %39, %9, %cst_24 {dimension_numbers = #tpu.dot_dimension_numbers<[1], [0], [0], [1], [0, 0, 1, 1], [], []>} : vector<4x16xbf16>, vector<16x256xbf16>, vector<4x256xf32> -> vector<4x256xf32>
    %41 = vector.broadcast %10 : vector<1x256xf32> to vector<4x256xf32>
    %42 = arith.addf %40, %41 : vector<4x256xf32>
    %43 = arith.addf %38, %42 : vector<4x256xf32>
    %c0_25 = arith.constant 0 : index
    %c0_26 = arith.constant 0 : index
    %44 = vector.load %arg12[%c0_25, %c0_26] : memref<1x256xf32, #tpu.memory_space<vmem>>, vector<1x256xf32>
    %c0_27 = arith.constant 0 : index
    %c0_28 = arith.constant 0 : index
    %45 = vector.load %arg13[%c0_27, %c0_28] : memref<1x256xf32, #tpu.memory_space<vmem>>, vector<1x256xf32>
    %c0_29 = arith.constant 0 : index
    %c0_30 = arith.constant 0 : index
    %46 = vector.load %arg14[%c0_29, %c0_30] : memref<256x256xbf16, #tpu.memory_space<vmem>>, vector<256x256xbf16>
    %c0_31 = arith.constant 0 : index
    %c0_32 = arith.constant 0 : index
    %47 = vector.load %arg15[%c0_31, %c0_32] : memref<1x256xf32, #tpu.memory_space<vmem>>, vector<1x256xf32>
    %c0_33 = arith.constant 0 : index
    %c0_34 = arith.constant 0 : index
    %48 = vector.load %arg16[%c0_33, %c0_34] : memref<1x256xf32, #tpu.memory_space<vmem>>, vector<1x256xf32>
    %c0_35 = arith.constant 0 : index
    %c0_36 = arith.constant 0 : index
    %49 = vector.load %arg17[%c0_35, %c0_36] : memref<1x256xf32, #tpu.memory_space<vmem>>, vector<1x256xf32>
    %c0_37 = arith.constant 0 : index
    %c0_38 = arith.constant 0 : index
    %50 = vector.load %arg18[%c0_37, %c0_38] : memref<256x256xbf16, #tpu.memory_space<vmem>>, vector<256x256xbf16>
    %c0_39 = arith.constant 0 : index
    %c0_40 = arith.constant 0 : index
    %51 = vector.load %arg19[%c0_39, %c0_40] : memref<1x256xf32, #tpu.memory_space<vmem>>, vector<1x256xf32>
    %52 = vector.broadcast %44 : vector<1x256xf32> to vector<4x256xf32>
    %53 = arith.mulf %43, %52 : vector<4x256xf32>
    %54 = vector.broadcast %45 : vector<1x256xf32> to vector<4x256xf32>
    %55 = arith.addf %53, %54 : vector<4x256xf32>
    %56 = arith.negf %55 : vector<4x256xf32>
    %57 = math.exp %56 : vector<4x256xf32>
    %cst_41 = arith.constant 1.000000e+00 : f32
    %58 = vector.broadcast %cst_41 : f32 to vector<4x256xf32>
    %59 = arith.addf %58, %57 : vector<4x256xf32>
    %60 = arith.divf %58, %59 : vector<4x256xf32>
    %61 = arith.mulf %55, %60 : vector<4x256xf32>
    %62 = arith.truncf %61 : vector<4x256xf32> to vector<4x256xbf16>
    %cst_42 = arith.constant dense<0.000000e+00> : vector<4x256xf32>
    %63 = tpu.matmul %62, %46, %cst_42 {dimension_numbers = #tpu.dot_dimension_numbers<[1], [0], [0], [1], [0, 0, 1, 1], [], []>} : vector<4x256xbf16>, vector<256x256xbf16>, vector<4x256xf32> -> vector<4x256xf32>
    %64 = vector.broadcast %47 : vector<1x256xf32> to vector<4x256xf32>
    %65 = arith.addf %63, %64 : vector<4x256xf32>
    %66 = vector.broadcast %48 : vector<1x256xf32> to vector<4x256xf32>
    %67 = arith.mulf %65, %66 : vector<4x256xf32>
    %68 = vector.broadcast %49 : vector<1x256xf32> to vector<4x256xf32>
    %69 = arith.addf %67, %68 : vector<4x256xf32>
    %70 = arith.negf %69 : vector<4x256xf32>
    %71 = math.exp %70 : vector<4x256xf32>
    %cst_43 = arith.constant 1.000000e+00 : f32
    %72 = vector.broadcast %cst_43 : f32 to vector<4x256xf32>
    %73 = arith.addf %72, %71 : vector<4x256xf32>
    %74 = arith.divf %72, %73 : vector<4x256xf32>
    %75 = arith.mulf %69, %74 : vector<4x256xf32>
    %76 = arith.truncf %75 : vector<4x256xf32> to vector<4x256xbf16>
    %cst_44 = arith.constant dense<0.000000e+00> : vector<4x256xf32>
    %77 = tpu.matmul %76, %50, %cst_44 {dimension_numbers = #tpu.dot_dimension_numbers<[1], [0], [0], [1], [0, 0, 1, 1], [], []>} : vector<4x256xbf16>, vector<256x256xbf16>, vector<4x256xf32> -> vector<4x256xf32>
    %78 = vector.broadcast %51 : vector<1x256xf32> to vector<4x256xf32>
    %79 = arith.addf %77, %78 : vector<4x256xf32>
    %80 = arith.addf %79, %43 : vector<4x256xf32>
    %c0_45 = arith.constant 0 : index
    %c0_46 = arith.constant 0 : index
    %81 = vector.load %arg20[%c0_45, %c0_46] : memref<1x256xf32, #tpu.memory_space<vmem>>, vector<1x256xf32>
    %c0_47 = arith.constant 0 : index
    %c0_48 = arith.constant 0 : index
    %82 = vector.load %arg21[%c0_47, %c0_48] : memref<1x256xf32, #tpu.memory_space<vmem>>, vector<1x256xf32>
    %c0_49 = arith.constant 0 : index
    %c0_50 = arith.constant 0 : index
    %83 = vector.load %arg22[%c0_49, %c0_50] : memref<256x256xbf16, #tpu.memory_space<vmem>>, vector<256x256xbf16>
    %c0_51 = arith.constant 0 : index
    %c0_52 = arith.constant 0 : index
    %84 = vector.load %arg23[%c0_51, %c0_52] : memref<1x256xf32, #tpu.memory_space<vmem>>, vector<1x256xf32>
    %c0_53 = arith.constant 0 : index
    %c0_54 = arith.constant 0 : index
    %85 = vector.load %arg24[%c0_53, %c0_54] : memref<1x256xf32, #tpu.memory_space<vmem>>, vector<1x256xf32>
    %c0_55 = arith.constant 0 : index
    %c0_56 = arith.constant 0 : index
    %86 = vector.load %arg25[%c0_55, %c0_56] : memref<1x256xf32, #tpu.memory_space<vmem>>, vector<1x256xf32>
    %c0_57 = arith.constant 0 : index
    %c0_58 = arith.constant 0 : index
    %87 = vector.load %arg26[%c0_57, %c0_58] : memref<256x256xbf16, #tpu.memory_space<vmem>>, vector<256x256xbf16>
    %c0_59 = arith.constant 0 : index
    %c0_60 = arith.constant 0 : index
    %88 = vector.load %arg27[%c0_59, %c0_60] : memref<1x256xf32, #tpu.memory_space<vmem>>, vector<1x256xf32>
    %89 = vector.broadcast %81 : vector<1x256xf32> to vector<4x256xf32>
    %90 = arith.mulf %80, %89 : vector<4x256xf32>
    %91 = vector.broadcast %82 : vector<1x256xf32> to vector<4x256xf32>
    %92 = arith.addf %90, %91 : vector<4x256xf32>
    %93 = arith.negf %92 : vector<4x256xf32>
    %94 = math.exp %93 : vector<4x256xf32>
    %cst_61 = arith.constant 1.000000e+00 : f32
    %95 = vector.broadcast %cst_61 : f32 to vector<4x256xf32>
    %96 = arith.addf %95, %94 : vector<4x256xf32>
    %97 = arith.divf %95, %96 : vector<4x256xf32>
    %98 = arith.mulf %92, %97 : vector<4x256xf32>
    %99 = arith.truncf %98 : vector<4x256xf32> to vector<4x256xbf16>
    %cst_62 = arith.constant dense<0.000000e+00> : vector<4x256xf32>
    %100 = tpu.matmul %99, %83, %cst_62 {dimension_numbers = #tpu.dot_dimension_numbers<[1], [0], [0], [1], [0, 0, 1, 1], [], []>} : vector<4x256xbf16>, vector<256x256xbf16>, vector<4x256xf32> -> vector<4x256xf32>
    %101 = vector.broadcast %84 : vector<1x256xf32> to vector<4x256xf32>
    %102 = arith.addf %100, %101 : vector<4x256xf32>
    %103 = vector.broadcast %85 : vector<1x256xf32> to vector<4x256xf32>
    %104 = arith.mulf %102, %103 : vector<4x256xf32>
    %105 = vector.broadcast %86 : vector<1x256xf32> to vector<4x256xf32>
    %106 = arith.addf %104, %105 : vector<4x256xf32>
    %107 = arith.negf %106 : vector<4x256xf32>
    %108 = math.exp %107 : vector<4x256xf32>
    %cst_63 = arith.constant 1.000000e+00 : f32
    %109 = vector.broadcast %cst_63 : f32 to vector<4x256xf32>
    %110 = arith.addf %109, %108 : vector<4x256xf32>
    %111 = arith.divf %109, %110 : vector<4x256xf32>
    %112 = arith.mulf %106, %111 : vector<4x256xf32>
    %113 = arith.truncf %112 : vector<4x256xf32> to vector<4x256xbf16>
    %cst_64 = arith.constant dense<0.000000e+00> : vector<4x256xf32>
    %114 = tpu.matmul %113, %87, %cst_64 {dimension_numbers = #tpu.dot_dimension_numbers<[1], [0], [0], [1], [0, 0, 1, 1], [], []>} : vector<4x256xbf16>, vector<256x256xbf16>, vector<4x256xf32> -> vector<4x256xf32>
    %115 = vector.broadcast %88 : vector<1x256xf32> to vector<4x256xf32>
    %116 = arith.addf %114, %115 : vector<4x256xf32>
    %117 = arith.addf %116, %80 : vector<4x256xf32>
    %c0_65 = arith.constant 0 : index
    %c0_66 = arith.constant 0 : index
    %118 = vector.load %arg28[%c0_65, %c0_66] : memref<1x256xf32, #tpu.memory_space<vmem>>, vector<1x256xf32>
    %c0_67 = arith.constant 0 : index
    %c0_68 = arith.constant 0 : index
    %119 = vector.load %arg29[%c0_67, %c0_68] : memref<1x256xf32, #tpu.memory_space<vmem>>, vector<1x256xf32>
    %c0_69 = arith.constant 0 : index
    %c0_70 = arith.constant 0 : index
    %120 = vector.load %arg30[%c0_69, %c0_70] : memref<256x3xbf16, #tpu.memory_space<vmem>>, vector<256x3xbf16>
    %c0_71 = arith.constant 0 : index
    %c0_72 = arith.constant 0 : index
    %121 = vector.load %arg31[%c0_71, %c0_72] : memref<1x3xf32, #tpu.memory_space<vmem>>, vector<1x3xf32>
    %122 = vector.broadcast %118 : vector<1x256xf32> to vector<4x256xf32>
    %123 = arith.mulf %117, %122 : vector<4x256xf32>
    %124 = vector.broadcast %119 : vector<1x256xf32> to vector<4x256xf32>
    %125 = arith.addf %123, %124 : vector<4x256xf32>
    %126 = arith.negf %125 : vector<4x256xf32>
    %127 = math.exp %126 : vector<4x256xf32>
    %cst_73 = arith.constant 1.000000e+00 : f32
    %128 = vector.broadcast %cst_73 : f32 to vector<4x256xf32>
    %129 = arith.addf %128, %127 : vector<4x256xf32>
    %130 = arith.divf %128, %129 : vector<4x256xf32>
    %131 = arith.mulf %125, %130 : vector<4x256xf32>
    %132 = arith.truncf %131 : vector<4x256xf32> to vector<4x256xbf16>
    %cst_74 = arith.constant dense<0.000000e+00> : vector<4x3xf32>
    %133 = tpu.matmul %132, %120, %cst_74 {dimension_numbers = #tpu.dot_dimension_numbers<[1], [0], [0], [1], [0, 0, 1, 1], [], []>} : vector<4x256xbf16>, vector<256x3xbf16>, vector<4x3xf32> -> vector<4x3xf32>
    %134 = vector.broadcast %121 : vector<1x3xf32> to vector<4x3xf32>
    %135 = arith.addf %133, %134 : vector<4x3xf32>
    %c0_75 = arith.constant 0 : index
    %c0_76 = arith.constant 0 : index
    %136 = vector.load %arg32[%c0_75, %c0_76] : memref<4x3xf32, #tpu.memory_space<vmem>>, vector<4x3xf32>
    tpu.vector_store %arg32[%c0_75, %c0_76], %135 {strides = array<i32>} : memref<4x3xf32, #tpu.memory_space<vmem>>, vector<4x3xf32>,
    return
  }
  func.func @transform_0(%arg0: i32) -> (i32, i32) {
    %c0_i32 = arith.constant 0 : i32
    %c0_i32_0 = arith.constant 0 : i32
    return %arg0, %c0_i32 : i32, i32
  }
  func.func @transform_1(%arg0: i32) -> (i32, i32) {
    %c0_i32 = arith.constant 0 : i32
    %c0_i32_0 = arith.constant 0 : i32
    %c0_i32_1 = arith.constant 0 : i32
    return %c0_i32, %c0_i32_0 : i32, i32
  }
  func.func @transform_2(%arg0: i32) -> (i32, i32) {
    %c0_i32 = arith.constant 0 : i32
    %c0_i32_0 = arith.constant 0 : i32
    %c0_i32_1 = arith.constant 0 : i32
    return %c0_i32, %c0_i32_0 : i32, i32
  }
  func.func @transform_3(%arg0: i32) -> (i32, i32) {
    %c0_i32 = arith.constant 0 : i32
    %c0_i32_0 = arith.constant 0 : i32
    %c0_i32_1 = arith.constant 0 : i32
    return %c0_i32, %c0_i32_0 : i32, i32
  }
  func.func @transform_4(%arg0: i32) -> (i32, i32) {
    %c0_i32 = arith.constant 0 : i32
    %c0_i32_0 = arith.constant 0 : i32
    %c0_i32_1 = arith.constant 0 : i32
    return %c0_i32, %c0_i32_0 : i32, i32
  }
  func.func @transform_5(%arg0: i32) -> (i32, i32) {
    %c0_i32 = arith.constant 0 : i32
    %c0_i32_0 = arith.constant 0 : i32
    %c0_i32_1 = arith.constant 0 : i32
    return %c0_i32, %c0_i32_0 : i32, i32
  }
  func.func @transform_6(%arg0: i32) -> (i32, i32) {
    %c0_i32 = arith.constant 0 : i32
    %c0_i32_0 = arith.constant 0 : i32
    %c0_i32_1 = arith.constant 0 : i32
    return %c0_i32, %c0_i32_0 : i32, i32
  }
  func.func @transform_7(%arg0: i32) -> (i32, i32) {
    %c0_i32 = arith.constant 0 : i32
    %c0_i32_0 = arith.constant 0 : i32
    %c0_i32_1 = arith.constant 0 : i32
    return %c0_i32, %c0_i32_0 : i32, i32
  }
  func.func @transform_8(%arg0: i32) -> (i32, i32) {
    %c0_i32 = arith.constant 0 : i32
    %c0_i32_0 = arith.constant 0 : i32
    %c0_i32_1 = arith.constant 0 : i32
    return %c0_i32, %c0_i32_0 : i32, i32
  }
  func.func @transform_9(%arg0: i32) -> (i32, i32) {
    %c0_i32 = arith.constant 0 : i32
    %c0_i32_0 = arith.constant 0 : i32
    %c0_i32_1 = arith.constant 0 : i32
    return %c0_i32, %c0_i32_0 : i32, i32
  }
  func.func @transform_10(%arg0: i32) -> (i32, i32) {
    %c0_i32 = arith.constant 0 : i32
    %c0_i32_0 = arith.constant 0 : i32
    %c0_i32_1 = arith.constant 0 : i32
    return %c0_i32, %c0_i32_0 : i32, i32
  }
  func.func @transform_11(%arg0: i32) -> (i32, i32) {
    %c0_i32 = arith.constant 0 : i32
    %c0_i32_0 = arith.constant 0 : i32
    %c0_i32_1 = arith.constant 0 : i32
    return %c0_i32, %c0_i32_0 : i32, i32
  }
  func.func @transform_12(%arg0: i32) -> (i32, i32) {
    %c0_i32 = arith.constant 0 : i32
    %c0_i32_0 = arith.constant 0 : i32
    %c0_i32_1 = arith.constant 0 : i32
    return %c0_i32, %c0_i32_0 : i32, i32
  }
  func.func @transform_13(%arg0: i32) -> (i32, i32) {
    %c0_i32 = arith.constant 0 : i32
    %c0_i32_0 = arith.constant 0 : i32
    %c0_i32_1 = arith.constant 0 : i32
    return %c0_i32, %c0_i32_0 : i32, i32
  }
  func.func @transform_14(%arg0: i32) -> (i32, i32) {
    %c0_i32 = arith.constant 0 : i32
    %c0_i32_0 = arith.constant 0 : i32
    %c0_i32_1 = arith.constant 0 : i32
    return %c0_i32, %c0_i32_0 : i32, i32
  }
  func.func @transform_15(%arg0: i32) -> (i32, i32) {
    %c0_i32 = arith.constant 0 : i32
    %c0_i32_0 = arith.constant 0 : i32
    %c0_i32_1 = arith.constant 0 : i32
    return %c0_i32, %c0_i32_0 : i32, i32
  }
  func.func @transform_16(%arg0: i32) -> (i32, i32) {
    %c0_i32 = arith.constant 0 : i32
    %c0_i32_0 = arith.constant 0 : i32
    %c0_i32_1 = arith.constant 0 : i32
    return %c0_i32, %c0_i32_0 : i32, i32
  }
  func.func @transform_17(%arg0: i32) -> (i32, i32) {
    %c0_i32 = arith.constant 0 : i32
    %c0_i32_0 = arith.constant 0 : i32
    %c0_i32_1 = arith.constant 0 : i32
    return %c0_i32, %c0_i32_0 : i32, i32
  }
  func.func @transform_18(%arg0: i32) -> (i32, i32) {
    %c0_i32 = arith.constant 0 : i32
    %c0_i32_0 = arith.constant 0 : i32
    %c0_i32_1 = arith.constant 0 : i32
    return %c0_i32, %c0_i32_0 : i32, i32
  }
  func.func @transform_19(%arg0: i32) -> (i32, i32) {
    %c0_i32 = arith.constant 0 : i32
    %c0_i32_0 = arith.constant 0 : i32
    %c0_i32_1 = arith.constant 0 : i32
    return %c0_i32, %c0_i32_0 : i32, i32
  }
  func.func @transform_20(%arg0: i32) -> (i32, i32) {
    %c0_i32 = arith.constant 0 : i32
    %c0_i32_0 = arith.constant 0 : i32
    %c0_i32_1 = arith.constant 0 : i32
    return %c0_i32, %c0_i32_0 : i32, i32
  }
  func.func @transform_21(%arg0: i32) -> (i32, i32) {
    %c0_i32 = arith.constant 0 : i32
    %c0_i32_0 = arith.constant 0 : i32
    %c0_i32_1 = arith.constant 0 : i32
    return %c0_i32, %c0_i32_0 : i32, i32
  }
  func.func @transform_22(%arg0: i32) -> (i32, i32) {
    %c0_i32 = arith.constant 0 : i32
    %c0_i32_0 = arith.constant 0 : i32
    %c0_i32_1 = arith.constant 0 : i32
    return %c0_i32, %c0_i32_0 : i32, i32
  }
  func.func @transform_23(%arg0: i32) -> (i32, i32) {
    %c0_i32 = arith.constant 0 : i32
    %c0_i32_0 = arith.constant 0 : i32
    %c0_i32_1 = arith.constant 0 : i32
    return %c0_i32, %c0_i32_0 : i32, i32
  }
  func.func @transform_24(%arg0: i32) -> (i32, i32) {
    %c0_i32 = arith.constant 0 : i32
    %c0_i32_0 = arith.constant 0 : i32
    %c0_i32_1 = arith.constant 0 : i32
    return %c0_i32, %c0_i32_0 : i32, i32
  }
  func.func @transform_25(%arg0: i32) -> (i32, i32) {
    %c0_i32 = arith.constant 0 : i32
    %c0_i32_0 = arith.constant 0 : i32
    %c0_i32_1 = arith.constant 0 : i32
    return %c0_i32, %c0_i32_0 : i32, i32
  }
  func.func @transform_26(%arg0: i32) -> (i32, i32) {
    %c0_i32 = arith.constant 0 : i32
    %c0_i32_0 = arith.constant 0 : i32
    %c0_i32_1 = arith.constant 0 : i32
    return %c0_i32, %c0_i32_0 : i32, i32
  }
  func.func @transform_27(%arg0: i32) -> (i32, i32) {
    %c0_i32 = arith.constant 0 : i32
    %c0_i32_0 = arith.constant 0 : i32
    %c0_i32_1 = arith.constant 0 : i32
    return %c0_i32, %c0_i32_0 : i32, i32
  }
  func.func @transform_28(%arg0: i32) -> (i32, i32) {
    %c0_i32 = arith.constant 0 : i32
    %c0_i32_0 = arith.constant 0 : i32
    %c0_i32_1 = arith.constant 0 : i32
    return %c0_i32, %c0_i32_0 : i32, i32
  }
  func.func @transform_29(%arg0: i32) -> (i32, i32) {
    %c0_i32 = arith.constant 0 : i32
    %c0_i32_0 = arith.constant 0 : i32
    %c0_i32_1 = arith.constant 0 : i32
    return %c0_i32, %c0_i32_0 : i32, i32
  }
  func.func @transform_30(%arg0: i32) -> (i32, i32) {
    %c0_i32 = arith.constant 0 : i32
    %c0_i32_0 = arith.constant 0 : i32
    %c0_i32_1 = arith.constant 0 : i32
    return %c0_i32, %c0_i32_0 : i32, i32
  }
  func.func @transform_31(%arg0: i32) -> (i32, i32) {
    %c0_i32 = arith.constant 0 : i32
    %c0_i32_0 = arith.constant 0 : i32
    return %arg0, %c0_i32 : i32, i32
  }
}

</mosaic_0001>

<llo_original>
// kernel: tile.31
$region0: #{tile.31}
  #allocation0 [shape = 's32[1]{0}', space=sflag, size = 0x4, scoped, tag = 'scoped memory for tile.31']
  %s0 = inlined_call_operand.vmem [shape: f32[4], index: 0, kind: input, shape index: {}]
  %s1 = inlined_call_operand.vmem [shape: f32[2,4], index: 1, kind: output, shape index: {}]
  // Predicated region
  $region2: #{tile.31} parent=0 // pred_check
    _
  $region3: #{tile.31} parent=0 // pred_check_branch
    %3 = sbr.rel (0) target = $region5
  $region4: #{tile.31} parent=0 // pred_region
    _
  $region5: #{tile.31} parent=0 // pred_fallthru
    _
  %v4 = vld [vmem:[%s0] ss:$0 sm:$0xff]
  %5 = vst [vmem:[%s1] sm:$0x3] %v4

// kernel: tile.2
$region0: #{tile.2}
  %s0 = inlined_call_operand.vmem [shape: f32[2,4], index: 0, kind: input, shape index: {}]
  %s1 = inlined_call_operand.vmem [shape: f32[8,1], index: 1, kind: output, shape index: {}]
  $region1: #{tile.2} parent=0
    #allocation0 [shape = 'u8[4096]{0}', space=vmem, size = 0x1000, scoped, tag = 'scoped mem for input reshape']
    %s3 = sshll.u32 1, 2
    %s4 = ssub.s32 %s3, 1
    %v5 = vld [vmem:[%s0] sm:%s4]
    %6 = vst [vmem:[#allocation0] sm:%s4] %v5
    %v7 = vld [vmem:[#allocation0] sm:$0x3]
    %vm8 = vcmask 7168
    %9 = vst.msk [vmem:[%s1] ss:$4 sm:$0x3] %vm8, %v7
    %v10 = vld [vmem:[#allocation0] sm:$0x3]
    %11 = vrot.lane.b32.xlu0 %v10, 127
    %v12 = vpop.permute.xlu0 %11
    %vm13 = vcmask 7168
    %s14 = scalar_lea.vmem %s1, 1
    %15 = vst.msk [vmem:[%s14] ss:$4 sm:$0x3] %vm13, %v12
    %v16 = vld [vmem:[#allocation0] sm:$0x3]
    %17 = vrot.lane.b32.xlu0 %v16, 126
    %v18 = vpop.permute.xlu0 %17
    %vm19 = vcmask 7168
    %s20 = scalar_lea.vmem %s1, 2
    %21 = vst.msk [vmem:[%s20] ss:$4 sm:$0x3] %vm19, %v18
    %v22 = vld [vmem:[#allocation0] sm:$0x3]
    %23 = vrot.lane.b32.xlu0 %v22, 125
    %v24 = vpop.permute.xlu0 %23
    %vm25 = vcmask 7168
    %s26 = scalar_lea.vmem %s1, 3
    %27 = vst.msk [vmem:[%s26] ss:$4 sm:$0x3] %vm25, %v24

// kernel: _lambda_.12
$region0: #{_lambda_.12}
  #allocation0 [shape = 'u32[]', space=smem, size = 0x4, offset = 0x4, fixed_abs, tag = 'smem constant byte address 0x4 - core index']
  #allocation1 [shape = 'u32[144,128]{1,0:T(1,128)}', space=vmem, size = 0x12000, scoped, tag = 'internal scratch']
  %s0 = inlined_call_operand.vmem [shape: f32[4,8], index: 0, kind: input, shape index: {}]
  %s1 = inlined_call_operand.vmem [shape: f32[8,8], index: 1, kind: input, shape index: {}]
  %s2 = inlined_call_operand.vmem [shape: f32[1,8], index: 2, kind: input, shape index: {}]
  %s3 = inlined_call_operand.vmem [shape: f32[4,8], index: 3, kind: output, shape index: {}]
  %s4 = sld [smem:[#allocation0]]
  $region22: #{_lambda_.12} parent=0
    _
  %s6 = ssub.s32 1, %s4
  %s7 = scalar_select 0, %s6, %s4
  // Predicated region
  $region2: #{_lambda_.12} parent=0 // pred_check
    _
  $region3: #{_lambda_.12} parent=0 // pred_check_branch
    %9 = sbr.rel (0) target = $region5
  $region4: #{_lambda_.12} parent=0 // pred_region
    _
  $region5: #{_lambda_.12} parent=0 // pred_fallthru
    _
  // Predicated region
  $region6: #{_lambda_.12} parent=0 // pred_check
    _
  $region7: #{_lambda_.12} parent=0 // pred_check_branch
    %11 = sbr.rel (0) target = $region9
  $region8: #{_lambda_.12} parent=0 // pred_region
    _
  $region9: #{_lambda_.12} parent=0 // pred_fallthru
    _
  // Predicated region
  $region10: #{_lambda_.12} parent=0 // pred_check
    _
  $region11: #{_lambda_.12} parent=0 // pred_check_branch
    %13 = sbr.rel (0) target = $region13
  $region12: #{_lambda_.12} parent=0 // pred_region
    _
  $region13: #{_lambda_.12} parent=0 // pred_fallthru
    _
  %v14 = vld [vmem:[%s0] sm:$0xf]
  %v15 = vld [vmem:[%s1] sm:$0xff]
  %v16 = vld [vmem:[%s2] sm:$0x1]
  %v18 = vlaneseq
  %v19 = vshrl.u32 %v18, 7
  %v20 = vsub.s32 0, %v19
  %v21 = vrot.slane %v16, %v20
  %vm23 = vcmask 64512
  %v25 = vsel %vm23, %v14, 0
  %27 = vmatprep.subr.mxu0 0.0
  %28 = vmatpush1.msra.mxu0 0.0
  %29 = vmatprep.subr.mxu0 0.0
  %30 = vmatpush1.msra.mxu0 0.0
  %31 = vmatprep.subr.mxu0 0.0
  %32 = vmatpush1.msra.mxu0 0.0
  %33 = vmatprep.subr.mxu0 0.0
  %34 = vmatpush1.msra.mxu0 0.0
  %35 = vmatprep.subr.mxu0 0.0
  %36 = vmatpush1.msra.mxu0 0.0
  %37 = vmatprep.subr.mxu0 0.0
  %38 = vmatpush1.msra.mxu0 0.0
  %39 = vmatprep.subr.mxu0 0.0
  %40 = vmatpush1.msra.mxu0 0.0
  %41 = vmatprep.subr.mxu0 0.0
  %42 = vmatpush1.msra.mxu0 0.0
  %43 = vmatprep.subr.mxu0 0.0
  %44 = vmatpush1.msra.mxu0 0.0
  %45 = vmatprep.subr.mxu0 0.0
  %46 = vmatpush1.msra.mxu0 0.0
  %47 = vmatprep.subr.mxu0 0.0
  %48 = vmatpush1.msra.mxu0 0.0
  %49 = vmatprep.subr.mxu0 0.0
  %50 = vmatpush1.msra.mxu0 0.0
  %51 = vmatprep.subr.mxu0 0.0
  %52 = vmatpush1.msra.mxu0 0.0
  %53 = vmatprep.subr.mxu0 0.0
  %54 = vmatpush1.msra.mxu0 0.0
  %55 = vmatprep.subr.mxu0 0.0
  %56 = vmatpush1.msra.mxu0 0.0
  %57 = vmatprep.subr.mxu0 0.0
  %58 = vmatpush1.msra.mxu0 %v15
  %59 = vmatprep.subr.mxu0 0.0
  %60 = vmatpush2.msra.mxu0 0.0
  %61 = vmatprep.subr.mxu0 0.0
  %62 = vmatpush2.msra.mxu0 0.0
  %63 = vmatprep.subr.mxu0 0.0
  %64 = vmatpush2.msra.mxu0 0.0
  %65 = vmatprep.subr.mxu0 0.0
  %66 = vmatpush2.msra.mxu0 0.0
  %67 = vmatprep.subr.mxu0 0.0
  %68 = vmatpush2.msra.mxu0 0.0
  %69 = vmatprep.subr.mxu0 0.0
  %70 = vmatpush2.msra.mxu0 0.0
  %71 = vmatprep.subr.mxu0 0.0
  %72 = vmatpush2.msra.mxu0 0.0
  %73 = vmatprep.subr.mxu0 0.0
  %74 = vmatpush2.msra.mxu0 0.0
  %75 = vmatprep.subr.mxu0 0.0
  %76 = vmatpush2.msra.mxu0 0.0
  %77 = vmatprep.subr.mxu0 0.0
  %78 = vmatpush2.msra.mxu0 0.0
  %79 = vmatprep.subr.mxu0 0.0
  %80 = vmatpush2.msra.mxu0 0.0
  %81 = vmatprep.subr.mxu0 0.0
  %82 = vmatpush2.msra.mxu0 0.0
  %83 = vmatprep.subr.mxu0 0.0
  %84 = vmatpush2.msra.mxu0 0.0
  %85 = vmatprep.subr.mxu0 0.0
  %86 = vmatpush2.msra.mxu0 0.0
  %87 = vmatprep.subr.mxu0 0.0
  %88 = vmatpush2.msra.mxu0 0.0
  %89 = vmatprep.subr.mxu0 0.0
  %90 = vmatpush2.msra.mxu0 0.0
  %91 = vmatprep.mubr.f32.mxu0 0.0
  %92 = vmatmul.mubr.f32.gmra.mxu0 %v25
  %v93 = vpop.f32.mrf.mxu0
  %v94 = vadd.f32 %v21, %v93
  %v95 = vpop.f32.mrf.mxu0
  %96 = vdwg.mxu0
  %vm97 = vcmask 60416
  %98 = vst.msk [vmem:[%s3] sm:$0xf] %vm97, %v94
  // Predicated region
  $region14: #{_lambda_.12} parent=0 // pred_check
    _
  $region15: #{_lambda_.12} parent=0 // pred_check_branch
    %100 = sbr.rel (0) target = $region17
  $region16: #{_lambda_.12} parent=0 // pred_region
    _
  $region17: #{_lambda_.12} parent=0 // pred_fallthru
    _
  // Predicated region
  $region18: #{_lambda_.12} parent=0 // pred_check
    _
  $region19: #{_lambda_.12} parent=0 // pred_check_branch
    %102 = sbr.rel (0) target = $region21
  $region20: #{_lambda_.12} parent=0 // pred_region
    _
  $region21: #{_lambda_.12} parent=0 // pred_fallthru
    _

// kernel: _lambda_.7
$region0: #{_lambda_.7}
  #allocation0 [shape = 'u32[]', space=smem, size = 0x4, offset = 0x4, fixed_abs, tag = 'smem constant byte address 0x4 - core index']
  #allocation1 [shape = 'u32[144,128]{1,0:T(1,128)}', space=vmem, size = 0x12000, scoped, tag = 'internal scratch']
  %s0 = inlined_call_operand.vmem [shape: s32[4,2,32], index: 0, kind: input, shape index: {}]
  %s1 = inlined_call_operand.vmem [shape: f32[8,4,1], index: 1, kind: input, shape index: {}]
  %s2 = inlined_call_operand.vmem [shape: f32[4,4,32], index: 2, kind: output, shape index: {}]
  %s3 = sld [smem:[#allocation0]]
  $region41: #{_lambda_.7} parent=0
    _
  %s5 = ssub.s32 1, %s3
  %s6 = scalar_select 0, %s5, %s3
  loop: start=0, step=1, limit=6
  $region2: #{_lambda_.7} parent=0 // loop_pre_header
    _
  $region3: #{_lambda_.7} parent=0 // loop_header
    %s8 = sphi 0, %s12
    %p9 = scmp.ge.s32.totalorder %s8, 6
    %s15 = sphi 0, %s27
    %s16 = sphi 0, %s23
    %s17 = sphi 0, %s15
    %s18 = sphi 0, %s16
    %s19 = sphi 0, %s17
    %s20 = sphi 0, %s18
    %s32 = sphi 0, %s34
    %s35 = sphi 0, %s32
    %s36 = sphi 0, %s35
    %s52 = sphi 0, %s36
    %s56 = sphi 0, %s56
    %s58 = sphi 0, %s56
    %s59 = sphi 0, %s58
    %s73 = sphi 0, %s59
    %s81 = sphi 0, %s83
    %s84 = sphi 0, %s81
    %s85 = sphi 0, %s84
    %s101 = sphi 0, %s85
  $region4: #{_lambda_.7} parent=0 // loop_header_branch
    %11 = sbr.rel (%p9) target = $region8
  $region5: #{_lambda_.7} parent=0 // loop_body
    %s13 = ssub.s32 %s8, 1
    %s14 = ssub.s32 %s8, 2
    %s21 = sadd.s32 1, %s16
    %p22 = scmp.ge.s32.totalorder %s21, 1
    %s23 = scalar_select %p22, 0, %s21
    %s24 = sadd.s32 1, %s15
    %s25 = scalar_select %p22, %s24, %s15
    %p26 = scmp.ge.s32.totalorder %s25, 4
    %s27 = scalar_select %p26, 0, %s25
    %s28 = ssub.s32 %s15, %s27
    %s29 = ssub.s32 %s16, %s23
    %s30 = sor.u32 %s28, %s29
    %p31 = scmp.eq.s32.totalorder %s30, 0
    %s33 = sadd.s32 %s32, 1
    %s34 = scalar_select %p31, %s32, %s33
    %p37 = pneg %p31
    %p38 = scmp.eq.s32.totalorder %s8, 3
    %p39 = por %p37, %p38
    %p40 = scmp.ne.s32.totalorder %s32, %s35
    %p41 = scmp.eq.s32.totalorder %s8, 0
    %p42 = por %p40, %p41
    %p43 = scmp.ne.s32.totalorder %s32, %s35
    %p44 = scmp.eq.s32.totalorder %s13, 3
    %p45 = por %p43, %p44
    %p46 = scmp.ne.s32.totalorder %s35, %s36
    %p47 = scmp.eq.s32.totalorder %s13, 0
    %p48 = por %p46, %p47
    %p49 = scmp.ne.s32.totalorder %s35, %s36
    %p50 = scmp.eq.s32.totalorder %s14, 3
    %p51 = por %p49, %p50
    %p53 = scmp.ne.s32.totalorder %s36, %s52
    %p54 = scmp.eq.s32.totalorder %s14, 0
    %p55 = por %p53, %p54
    %s57 = sadd.s32 %s56, 1
    %p60 = scmp.eq.s32.totalorder %s8, 3
    %p61 = scmp.ne.s32.totalorder %s56, %s58
    %p62 = scmp.eq.s32.totalorder %s8, 0
    %p63 = por %p61, %p62
    %p64 = scmp.ne.s32.totalorder %s56, %s58
    %p65 = scmp.eq.s32.totalorder %s13, 3
    %p66 = por %p64, %p65
    %p67 = scmp.ne.s32.totalorder %s58, %s59
    %p68 = scmp.eq.s32.totalorder %s13, 0
    %p69 = por %p67, %p68
    %p70 = scmp.ne.s32.totalorder %s58, %s59
    %p71 = scmp.eq.s32.totalorder %s14, 3
    %p72 = por %p70, %p71
    %p74 = scmp.ne.s32.totalorder %s59, %s73
    %p75 = scmp.eq.s32.totalorder %s14, 0
    %p76 = por %p74, %p75
    %s77 = ssub.s32 %s15, %s27
    %s78 = ssub.s32 %s16, %s23
    %s79 = sor.u32 %s77, %s78
    %p80 = scmp.eq.s32.totalorder %s79, 0
    %s82 = sadd.s32 %s81, 1
    %s83 = scalar_select %p80, %s81, %s82
    %p86 = pneg %p80
    %p87 = scmp.eq.s32.totalorder %s8, 3
    %p88 = por %p86, %p87
    %p89 = scmp.ne.s32.totalorder %s81, %s84
    %p90 = scmp.eq.s32.totalorder %s8, 0
    %p91 = por %p89, %p90
    %p92 = scmp.ne.s32.totalorder %s81, %s84
    %p93 = scmp.eq.s32.totalorder %s13, 3
    %p94 = por %p92, %p93
    %p95 = scmp.ne.s32.totalorder %s84, %s85
    %p96 = scmp.eq.s32.totalorder %s13, 0
    %p97 = por %p95, %p96
    %p98 = scmp.ne.s32.totalorder %s84, %s85
    %p99 = scmp.eq.s32.totalorder %s14, 3
    %p100 = por %p98, %p99
    %p102 = scmp.ne.s32.totalorder %s85, %s101
    %p103 = scmp.eq.s32.totalorder %s14, 0
    %p104 = por %p102, %p103
    %p105 = scmp.le.s32.totalorder 1, %s8
    %p106 = scmp.lt.s32.totalorder %s8, 5
    %p107 = pnand %p105, %p106
    %p108 = pneg %p107
    // Predicated region
    $region9: #{_lambda_.7} parent=5 // pred_check
      _
    $region10: #{_lambda_.7} parent=5 // pred_check_branch
      %110 = sbr.rel (%p107) target = $region12
    $region11: #{_lambda_.7} parent=5 // pred_region
      %s111 = ssub.s32 %s8, 1
      // Predicated region
      $region13: #{_lambda_.7} parent=11 // pred_check
        %p112 = pneg %p69
      $region14: #{_lambda_.7} parent=11 // pred_check_branch
        %114 = sbr.rel (%p112) target = $region16
      $region15: #{_lambda_.7} parent=11 // pred_region
        _
      $region16: #{_lambda_.7} parent=11 // pred_fallthru
        _
    $region12: #{_lambda_.7} parent=5 // pred_fallthru
      _
    %p115 = scmp.lt.s32.totalorder %s8, 4
    // Predicated region
    $region17: #{_lambda_.7} parent=5 // pred_check
      %p116 = pneg %p115
    $region18: #{_lambda_.7} parent=5 // pred_check_branch
      %118 = sbr.rel (%p116) target = $region20
    $region19: #{_lambda_.7} parent=5 // pred_region
      // Predicated region
      $region21: #{_lambda_.7} parent=19 // pred_check
        %p119 = pneg %p42
      $region22: #{_lambda_.7} parent=19 // pred_check_branch
        %121 = sbr.rel (%p119) target = $region24
      $region23: #{_lambda_.7} parent=19 // pred_region
        %p122 = scmp.lt.s32.totalorder %s15, 3
        %s123 = scalar_select %p122, %s15, 3
        %p124 = scmp.lt.s32.totalorder %s16, 0
        %s125 = scalar_select %p124, %s16, 0
        %s126 = sadd.s32 %s125, %s123
        %s127 = smul.addr %s126, 2
        %s128 = scalar_lea.vmem %s0, %s127
      $region24: #{_lambda_.7} parent=19 // pred_fallthru
        _
    $region20: #{_lambda_.7} parent=5 // pred_fallthru
      _
    %p129 = scmp.le.s32.totalorder 1, %s8
    %p130 = scmp.lt.s32.totalorder %s8, 5
    %p131 = pnand %p129, %p130
    %p132 = pneg %p131
    // Predicated region
    $region25: #{_lambda_.7} parent=5 // pred_check
      _
    $region26: #{_lambda_.7} parent=5 // pred_check_branch
      %134 = sbr.rel (%p131) target = $region28
    $region27: #{_lambda_.7} parent=5 // pred_region
      %s135 = ssub.s32 %s8, 1
      %p136 = scmp.lt.s32.totalorder %s17, 3
      %s137 = scalar_select %p136, %s17, 3
      %p138 = scmp.lt.s32.totalorder %s18, 0
      %s139 = scalar_select %p138, %s18, 0
      %s140 = sadd.s32 %s139, %s137
      %s141 = smul.addr %s140, 2
      %s142 = scalar_lea.vmem %s0, %s141
      %p143 = pneg %p48
      %p144 = pneg %p45
      %p145 = pneg %p69
      %p146 = pneg %p66
      %p147 = pneg %p97
      %p148 = pneg %p94
      %p149 = scmp.lt.s32.totalorder %s17, 3
      %s150 = scalar_select %p149, %s17, 3
      %p151 = scmp.lt.s32.totalorder %s18, 0
      %s152 = scalar_select %p151, %s18, 0
      %s153 = sadd.s32 %s152, %s150
      %s154 = smul.addr %s153, 4
      %s155 = scalar_lea.vmem %s2, %s154
      %p156 = scmp.lt.s32.totalorder %s17, 3
      %s157 = scalar_select %p156, %s17, 3
      %p158 = scmp.lt.s32.totalorder %s18, 0
      %s159 = scalar_select %p158, %s18, 0
      %s160 = sadd.s32 %s159, %s157
      %s161 = smul.addr %s160, 2
      %s162 = scalar_lea.vmem %s0, %s161
      %p163 = scmp.lt.s32.totalorder %s17, 3
      %s164 = scalar_select %p163, %s17, 3
      %p165 = scmp.lt.s32.totalorder %s18, 0
      %s166 = scalar_select %p165, %s18, 0
      %s167 = sadd.s32 %s166, %s164
      %s168 = smul.addr %s167, 4
      %s169 = scalar_lea.vmem %s2, %s168
      %v170 = vld [vmem:[%s162] sm:$0x3]
      %vm171 = vcmp.eq.s32.totalorder %v170, 0
      %v172 = vsel %vm171, 1, 0
      %v173 = vcvt.s32.f32 %v172
      %v174 = vld [vmem:[%s1] sm:$0xf]
      %v175 = vlaneseq
      %v176 = vshrl.u32 %v175, 7
      %v177 = vsub.s32 0, %v176
      %v178 = vrot.slane %v173, %v177
      %180 = vset.pattern.permute.xlu0 0
      %181 = vperm.xlu0 %180, %v174
      %v182 = vpop.permute.xlu0 %181
      %v184 = vmul.f32 %v178, %v182
      %v185 = vadd.f32 %v184, 0.0
      %vm186 = vcmp.eq.s32.totalorder %v170, 1
      %v187 = vsel %vm186, 1, 0
      %v188 = vcvt.s32.f32 %v187
      %s189 = scalar_lea.vmem %s1, 4
      %v190 = vld [vmem:[%s189] sm:$0xf]
      %v191 = vlaneseq
      %v192 = vshrl.u32 %v191, 7
      %v193 = vsub.s32 0, %v192
      %v194 = vrot.slane %v188, %v193
      %196 = vset.pattern.permute.xlu0 0
      %197 = vperm.xlu0 %196, %v190
      %v198 = vpop.permute.xlu0 %197
      %v200 = vmul.f32 %v194, %v198
      %v201 = vadd.f32 %v185, %v200
      %vm202 = vcmp.eq.s32.totalorder %v170, 2
      %v203 = vsel %vm202, 1, 0
      %v204 = vcvt.s32.f32 %v203
      %s205 = scalar_lea.vmem %s1, 8
      %v206 = vld [vmem:[%s205] sm:$0xf]
      %v207 = vlaneseq
      %v208 = vshrl.u32 %v207, 7
      %v209 = vsub.s32 0, %v208
      %v210 = vrot.slane %v204, %v209
      %212 = vset.pattern.permute.xlu0 0
      %213 = vperm.xlu0 %212, %v206
      %v214 = vpop.permute.xlu0 %213
      %v216 = vmul.f32 %v210, %v214
      %v217 = vadd.f32 %v201, %v216
      %vm218 = vcmp.eq.s32.totalorder %v170, 3
      %v219 = vsel %vm218, 1, 0
      %v220 = vcvt.s32.f32 %v219
      %s221 = scalar_lea.vmem %s1, 12
      %v222 = vld [vmem:[%s221] sm:$0xf]
      %v223 = vlaneseq
      %v224 = vshrl.u32 %v223, 7
      %v225 = vsub.s32 0, %v224
      %v226 = vrot.slane %v220, %v225
      %228 = vset.pattern.permute.xlu0 0
      %229 = vperm.xlu0 %228, %v222
      %v230 = vpop.permute.xlu0 %229
      %v232 = vmul.f32 %v226, %v230
      %v233 = vadd.f32 %v217, %v232
      %s234 = scalar_lea.vmem %s1, 16
      %v235 = vld [vmem:[%s234] sm:$0xf]
      %v236 = vlaneseq
      %v237 = vshrl.u32 %v236, 7
      %v238 = vsub.s32 1, %v237
      %v239 = vrot.slane %v173, %v238
      %241 = vset.pattern.permute.xlu0 0
      %242 = vperm.xlu0 %241, %v235
      %v243 = vpop.permute.xlu0 %242
      %v245 = vmul.f32 %v239, %v243
      %v246 = vadd.f32 %v233, %v245
      %s247 = scalar_lea.vmem %s1, 20
      %v248 = vld [vmem:[%s247] sm:$0xf]
      %v249 = vlaneseq
      %v250 = vshrl.u32 %v249, 7
      %v251 = vsub.s32 1, %v250
      %v252 = vrot.slane %v188, %v251
      %254 = vset.pattern.permute.xlu0 0
      %255 = vperm.xlu0 %254, %v248
      %v256 = vpop.permute.xlu0 %255
      %v258 = vmul.f32 %v252, %v256
      %v259 = vadd.f32 %v246, %v258
      %s260 = scalar_lea.vmem %s1, 24
      %v261 = vld [vmem:[%s260] sm:$0xf]
      %v262 = vlaneseq
      %v263 = vshrl.u32 %v262, 7
      %v264 = vsub.s32 1, %v263
      %v265 = vrot.slane %v204, %v264
      %267 = vset.pattern.permute.xlu0 0
      %268 = vperm.xlu0 %267, %v261
      %v269 = vpop.permute.xlu0 %268
      %v271 = vmul.f32 %v265, %v269
      %v272 = vadd.f32 %v259, %v271
      %s273 = scalar_lea.vmem %s1, 28
      %v274 = vld [vmem:[%s273] sm:$0xf]
      %v275 = vlaneseq
      %v276 = vshrl.u32 %v275, 7
      %v277 = vsub.s32 1, %v276
      %v278 = vrot.slane %v220, %v277
      %280 = vset.pattern.permute.xlu0 0
      %281 = vperm.xlu0 %280, %v274
      %v282 = vpop.permute.xlu0 %281
      %v284 = vmul.f32 %v278, %v282
      %v285 = vadd.f32 %v272, %v284
      %vm286 = vcmask 257024
      %287 = vst.msk [vmem:[%s169] sm:$0xf] %vm286, %v285
      %p288 = scmp.lt.s32.totalorder %s17, 3
      %s289 = scalar_select %p288, %s17, 3
      %p290 = scmp.lt.s32.totalorder %s18, 0
      %s291 = scalar_select %p290, %s18, 0
      %s292 = sadd.s32 %s291, %s289
      %s293 = smul.addr %s292, 4
      %s294 = scalar_lea.vmem %s2, %s293
      // Predicated region
      $region29: #{_lambda_.7} parent=27 // pred_check
        %p295 = pneg %p94
      $region30: #{_lambda_.7} parent=27 // pred_check_branch
        %297 = sbr.rel (%p295) target = $region32
      $region31: #{_lambda_.7} parent=27 // pred_region
        _
      $region32: #{_lambda_.7} parent=27 // pred_fallthru
        _
    $region28: #{_lambda_.7} parent=5 // pred_fallthru
      _
    %p298 = scmp.le.s32.totalorder 2, %s8
    // Predicated region
    $region33: #{_lambda_.7} parent=5 // pred_check
      %p299 = pneg %p298
    $region34: #{_lambda_.7} parent=5 // pred_check_branch
      %301 = sbr.rel (%p299) target = $region36
    $region35: #{_lambda_.7} parent=5 // pred_region
      %s302 = ssub.s32 %s8, 2
      // Predicated region
      $region37: #{_lambda_.7} parent=35 // pred_check
        %p303 = pneg %p100
      $region38: #{_lambda_.7} parent=35 // pred_check_branch
        %305 = sbr.rel (%p303) target = $region40
      $region39: #{_lambda_.7} parent=35 // pred_region
        %p306 = scmp.lt.s32.totalorder %s19, 3
        %s307 = scalar_select %p306, %s19, 3
        %p308 = scmp.lt.s32.totalorder %s20, 0
        %s309 = scalar_select %p308, %s20, 0
        %s310 = sadd.s32 %s309, %s307
        %s311 = smul.addr %s310, 4
        %s312 = scalar_lea.vmem %s2, %s311
      $region40: #{_lambda_.7} parent=35 // pred_fallthru
        _
    $region36: #{_lambda_.7} parent=5 // pred_fallthru
      _
  $region6: #{_lambda_.7} parent=0 // loop_footer
    %s12 = sadd.s32 1, %s8
  $region7: #{_lambda_.7} parent=0 // loop_footer_branch
    %7 = sbr.rel target = $region3
  $region8: #{_lambda_.7} parent=0 // loop_exit
    _

// kernel: _lambda_.8
$region0: #{_lambda_.8}
  #allocation0 [shape = 'u32[]', space=smem, size = 0x4, offset = 0x4, fixed_abs, tag = 'smem constant byte address 0x4 - core index']
  #allocation1 [shape = 'u32[144,128]{1,0:T(1,128)}', space=vmem, size = 0x12000, scoped, tag = 'internal scratch']
  %s0 = inlined_call_operand.vmem [shape: f32[4,8,16], index: 0, kind: input, shape index: {}]
  %s1 = inlined_call_operand.vmem [shape: f32[8,1], index: 1, kind: input, shape index: {}]
  %s2 = inlined_call_operand.vmem [shape: f32[8,1], index: 2, kind: input, shape index: {}]
  %s3 = inlined_call_operand.vmem [shape: f32[8,4,1], index: 3, kind: input, shape index: {}]
  %s4 = inlined_call_operand.vmem [shape: f32[4,4,16], index: 4, kind: output, shape index: {}]
  %s5 = sld [smem:[#allocation0]]
  $region49: #{_lambda_.8} parent=0
    _
  %s7 = ssub.s32 1, %s5
  %s8 = scalar_select 0, %s7, %s5
  loop: start=0, step=1, limit=6
  $region2: #{_lambda_.8} parent=0 // loop_pre_header
    _
  $region3: #{_lambda_.8} parent=0 // loop_header
    %s10 = sphi 0, %s14
    %p11 = scmp.ge.s32.totalorder %s10, 6
    %s17 = sphi 0, %s29
    %s18 = sphi 0, %s25
    %s19 = sphi 0, %s17
    %s20 = sphi 0, %s18
    %s21 = sphi 0, %s19
    %s22 = sphi 0, %s20
    %s34 = sphi 0, %s36
    %s37 = sphi 0, %s34
    %s38 = sphi 0, %s37
    %s54 = sphi 0, %s38
    %s58 = sphi 0, %s58
    %s60 = sphi 0, %s58
    %s61 = sphi 0, %s60
    %s75 = sphi 0, %s61
    %s79 = sphi 0, %s79
    %s81 = sphi 0, %s79
    %s82 = sphi 0, %s81
    %s96 = sphi 0, %s82
    %s100 = sphi 0, %s100
    %s102 = sphi 0, %s100
    %s103 = sphi 0, %s102
    %s117 = sphi 0, %s103
    %s125 = sphi 0, %s127
    %s128 = sphi 0, %s125
    %s129 = sphi 0, %s128
    %s145 = sphi 0, %s129
  $region4: #{_lambda_.8} parent=0 // loop_header_branch
    %13 = sbr.rel (%p11) target = $region8
  $region5: #{_lambda_.8} parent=0 // loop_body
    %s15 = ssub.s32 %s10, 1
    %s16 = ssub.s32 %s10, 2
    %s23 = sadd.s32 1, %s18
    %p24 = scmp.ge.s32.totalorder %s23, 1
    %s25 = scalar_select %p24, 0, %s23
    %s26 = sadd.s32 1, %s17
    %s27 = scalar_select %p24, %s26, %s17
    %p28 = scmp.ge.s32.totalorder %s27, 4
    %s29 = scalar_select %p28, 0, %s27
    %s30 = ssub.s32 %s17, %s29
    %s31 = ssub.s32 %s18, %s25
    %s32 = sor.u32 %s30, %s31
    %p33 = scmp.eq.s32.totalorder %s32, 0
    %s35 = sadd.s32 %s34, 1
    %s36 = scalar_select %p33, %s34, %s35
    %p39 = pneg %p33
    %p40 = scmp.eq.s32.totalorder %s10, 3
    %p41 = por %p39, %p40
    %p42 = scmp.ne.s32.totalorder %s34, %s37
    %p43 = scmp.eq.s32.totalorder %s10, 0
    %p44 = por %p42, %p43
    %p45 = scmp.ne.s32.totalorder %s34, %s37
    %p46 = scmp.eq.s32.totalorder %s15, 3
    %p47 = por %p45, %p46
    %p48 = scmp.ne.s32.totalorder %s37, %s38
    %p49 = scmp.eq.s32.totalorder %s15, 0
    %p50 = por %p48, %p49
    %p51 = scmp.ne.s32.totalorder %s37, %s38
    %p52 = scmp.eq.s32.totalorder %s16, 3
    %p53 = por %p51, %p52
    %p55 = scmp.ne.s32.totalorder %s38, %s54
    %p56 = scmp.eq.s32.totalorder %s16, 0
    %p57 = por %p55, %p56
    %s59 = sadd.s32 %s58, 1
    %p62 = scmp.eq.s32.totalorder %s10, 3
    %p63 = scmp.ne.s32.totalorder %s58, %s60
    %p64 = scmp.eq.s32.totalorder %s10, 0
    %p65 = por %p63, %p64
    %p66 = scmp.ne.s32.totalorder %s58, %s60
    %p67 = scmp.eq.s32.totalorder %s15, 3
    %p68 = por %p66, %p67
    %p69 = scmp.ne.s32.totalorder %s60, %s61
    %p70 = scmp.eq.s32.totalorder %s15, 0
    %p71 = por %p69, %p70
    %p72 = scmp.ne.s32.totalorder %s60, %s61
    %p73 = scmp.eq.s32.totalorder %s16, 3
    %p74 = por %p72, %p73
    %p76 = scmp.ne.s32.totalorder %s61, %s75
    %p77 = scmp.eq.s32.totalorder %s16, 0
    %p78 = por %p76, %p77
    %s80 = sadd.s32 %s79, 1
    %p83 = scmp.eq.s32.totalorder %s10, 3
    %p84 = scmp.ne.s32.totalorder %s79, %s81
    %p85 = scmp.eq.s32.totalorder %s10, 0
    %p86 = por %p84, %p85
    %p87 = scmp.ne.s32.totalorder %s79, %s81
    %p88 = scmp.eq.s32.totalorder %s15, 3
    %p89 = por %p87, %p88
    %p90 = scmp.ne.s32.totalorder %s81, %s82
    %p91 = scmp.eq.s32.totalorder %s15, 0
    %p92 = por %p90, %p91
    %p93 = scmp.ne.s32.totalorder %s81, %s82
    %p94 = scmp.eq.s32.totalorder %s16, 3
    %p95 = por %p93, %p94
    %p97 = scmp.ne.s32.totalorder %s82, %s96
    %p98 = scmp.eq.s32.totalorder %s16, 0
    %p99 = por %p97, %p98
    %s101 = sadd.s32 %s100, 1
    %p104 = scmp.eq.s32.totalorder %s10, 3
    %p105 = scmp.ne.s32.totalorder %s100, %s102
    %p106 = scmp.eq.s32.totalorder %s10, 0
    %p107 = por %p105, %p106
    %p108 = scmp.ne.s32.totalorder %s100, %s102
    %p109 = scmp.eq.s32.totalorder %s15, 3
    %p110 = por %p108, %p109
    %p111 = scmp.ne.s32.totalorder %s102, %s103
    %p112 = scmp.eq.s32.totalorder %s15, 0
    %p113 = por %p111, %p112
    %p114 = scmp.ne.s32.totalorder %s102, %s103
    %p115 = scmp.eq.s32.totalorder %s16, 3
    %p116 = por %p114, %p115
    %p118 = scmp.ne.s32.totalorder %s103, %s117
    %p119 = scmp.eq.s32.totalorder %s16, 0
    %p120 = por %p118, %p119
    %s121 = ssub.s32 %s17, %s29
    %s122 = ssub.s32 %s18, %s25
    %s123 = sor.u32 %s121, %s122
    %p124 = scmp.eq.s32.totalorder %s123, 0
    %s126 = sadd.s32 %s125, 1
    %s127 = scalar_select %p124, %s125, %s126
    %p130 = pneg %p124
    %p131 = scmp.eq.s32.totalorder %s10, 3
    %p132 = por %p130, %p131
    %p133 = scmp.ne.s32.totalorder %s125, %s128
    %p134 = scmp.eq.s32.totalorder %s10, 0
    %p135 = por %p133, %p134
    %p136 = scmp.ne.s32.totalorder %s125, %s128
    %p137 = scmp.eq.s32.totalorder %s15, 3
    %p138 = por %p136, %p137
    %p139 = scmp.ne.s32.totalorder %s128, %s129
    %p140 = scmp.eq.s32.totalorder %s15, 0
    %p141 = por %p139, %p140
    %p142 = scmp.ne.s32.totalorder %s128, %s129
    %p143 = scmp.eq.s32.totalorder %s16, 3
    %p144 = por %p142, %p143
    %p146 = scmp.ne.s32.totalorder %s129, %s145
    %p147 = scmp.eq.s32.totalorder %s16, 0
    %p148 = por %p146, %p147
    %p149 = scmp.le.s32.totalorder 1, %s10
    %p150 = scmp.lt.s32.totalorder %s10, 5
    %p151 = pnand %p149, %p150
    %p152 = pneg %p151
    // Predicated region
    $region9: #{_lambda_.8} parent=5 // pred_check
      _
    $region10: #{_lambda_.8} parent=5 // pred_check_branch
      %154 = sbr.rel (%p151) target = $region12
    $region11: #{_lambda_.8} parent=5 // pred_region
      %s155 = ssub.s32 %s10, 1
      // Predicated region
      $region13: #{_lambda_.8} parent=11 // pred_check
        %p156 = pneg %p71
      $region14: #{_lambda_.8} parent=11 // pred_check_branch
        %158 = sbr.rel (%p156) target = $region16
      $region15: #{_lambda_.8} parent=11 // pred_region
        _
      $region16: #{_lambda_.8} parent=11 // pred_fallthru
        _
      // Predicated region
      $region17: #{_lambda_.8} parent=11 // pred_check
        %p159 = pneg %p92
      $region18: #{_lambda_.8} parent=11 // pred_check_branch
        %161 = sbr.rel (%p159) target = $region20
      $region19: #{_lambda_.8} parent=11 // pred_region
        _
      $region20: #{_lambda_.8} parent=11 // pred_fallthru
        _
      // Predicated region
      $region21: #{_lambda_.8} parent=11 // pred_check
        %p162 = pneg %p113
      $region22: #{_lambda_.8} parent=11 // pred_check_branch
        %164 = sbr.rel (%p162) target = $region24
      $region23: #{_lambda_.8} parent=11 // pred_region
        _
      $region24: #{_lambda_.8} parent=11 // pred_fallthru
        _
    $region12: #{_lambda_.8} parent=5 // pred_fallthru
      _
    %p165 = scmp.lt.s32.totalorder %s10, 4
    // Predicated region
    $region25: #{_lambda_.8} parent=5 // pred_check
      %p166 = pneg %p165
    $region26: #{_lambda_.8} parent=5 // pred_check_branch
      %168 = sbr.rel (%p166) target = $region28
    $region27: #{_lambda_.8} parent=5 // pred_region
      // Predicated region
      $region29: #{_lambda_.8} parent=27 // pred_check
        %p169 = pneg %p44
      $region30: #{_lambda_.8} parent=27 // pred_check_branch
        %171 = sbr.rel (%p169) target = $region32
      $region31: #{_lambda_.8} parent=27 // pred_region
        %p172 = scmp.lt.s32.totalorder %s17, 3
        %s173 = scalar_select %p172, %s17, 3
        %p174 = scmp.lt.s32.totalorder %s18, 0
        %s175 = scalar_select %p174, %s18, 0
        %s176 = sadd.s32 %s175, %s173
        %s177 = smul.addr %s176, 8
        %s178 = scalar_lea.vmem %s0, %s177
      $region32: #{_lambda_.8} parent=27 // pred_fallthru
        _
    $region28: #{_lambda_.8} parent=5 // pred_fallthru
      _
    %p179 = scmp.le.s32.totalorder 1, %s10
    %p180 = scmp.lt.s32.totalorder %s10, 5
    %p181 = pnand %p179, %p180
    %p182 = pneg %p181
    // Predicated region
    $region33: #{_lambda_.8} parent=5 // pred_check
      _
    $region34: #{_lambda_.8} parent=5 // pred_check_branch
      %184 = sbr.rel (%p181) target = $region36
    $region35: #{_lambda_.8} parent=5 // pred_region
      %s185 = ssub.s32 %s10, 1
      %p186 = scmp.lt.s32.totalorder %s19, 3
      %s187 = scalar_select %p186, %s19, 3
      %p188 = scmp.lt.s32.totalorder %s20, 0
      %s189 = scalar_select %p188, %s20, 0
      %s190 = sadd.s32 %s189, %s187
      %s191 = smul.addr %s190, 8
      %s192 = scalar_lea.vmem %s0, %s191
      %p193 = pneg %p50
      %p194 = pneg %p47
      %p195 = pneg %p71
      %p196 = pneg %p68
      %p197 = pneg %p92
      %p198 = pneg %p89
      %p199 = pneg %p113
      %p200 = pneg %p110
      %p201 = pneg %p141
      %p202 = pneg %p138
      %p203 = scmp.lt.s32.totalorder %s19, 3
      %s204 = scalar_select %p203, %s19, 3
      %p205 = scmp.lt.s32.totalorder %s20, 0
      %s206 = scalar_select %p205, %s20, 0
      %s207 = sadd.s32 %s206, %s204
      %s208 = smul.addr %s207, 4
      %s209 = scalar_lea.vmem %s4, %s208
      %p210 = scmp.lt.s32.totalorder %s19, 3
      %s211 = scalar_select %p210, %s19, 3
      %p212 = scmp.lt.s32.totalorder %s20, 0
      %s213 = scalar_select %p212, %s20, 0
      %s214 = sadd.s32 %s213, %s211
      %s215 = smul.addr %s214, 8
      %s216 = scalar_lea.vmem %s0, %s215
      %p217 = scmp.lt.s32.totalorder %s19, 3
      %s218 = scalar_select %p217, %s19, 3
      %p219 = scmp.lt.s32.totalorder %s20, 0
      %s220 = scalar_select %p219, %s20, 0
      %s221 = sadd.s32 %s220, %s218
      %s222 = smul.addr %s221, 4
      %s223 = scalar_lea.vmem %s4, %s222
      %v224 = vld [vmem:[%s216] sm:$0xff]
      %v225 = vld [vmem:[%s1] sm:$0xff]
      %227 = vset.pattern.permute.xlu0 0
      %228 = vperm.xlu0 %227, %v225
      %v229 = vpop.permute.xlu0 %228
      %v231 = vmul.f32 %v224, %v229
      %v232 = vld [vmem:[%s2] sm:$0xff]
      %234 = vset.pattern.permute.xlu0 0
      %235 = vperm.xlu0 %234, %v232
      %v236 = vpop.permute.xlu0 %235
      %v238 = vadd.f32 %v231, %v236
      %v239 = vxor.u32 %v238, 2147483648
      %v240 = vmul.f32 %v239, 1.442695
      %v241 = vpow.pop %v240
      %v242 = vadd.f32 %v241, 1.0
      %v243 = vrcp.pop %v242
      %v244 = vmul.f32 1.0, %v243
      %v245 = vmul.f32 %v238, %v244
      %v246 = vld [vmem:[%s3] sm:$0xf]
      %v247 = vlaneseq
      %v248 = vshrl.u32 %v247, 7
      %v249 = vsub.s32 0, %v248
      %v250 = vrot.slane %v245, %v249
      %252 = vset.pattern.permute.xlu0 0
      %253 = vperm.xlu0 %252, %v246
      %v254 = vpop.permute.xlu0 %253
      %v256 = vmul.f32 %v250, %v254
      %v257 = vadd.f32 %v256, 0.0
      %s258 = scalar_lea.vmem %s3, 4
      %v259 = vld [vmem:[%s258] sm:$0xf]
      %v260 = vlaneseq
      %v261 = vshrl.u32 %v260, 7
      %v262 = vsub.s32 1, %v261
      %v263 = vrot.slane %v245, %v262
      %265 = vset.pattern.permute.xlu0 0
      %266 = vperm.xlu0 %265, %v259
      %v267 = vpop.permute.xlu0 %266
      %v269 = vmul.f32 %v263, %v267
      %v270 = vadd.f32 %v257, %v269
      %s271 = scalar_lea.vmem %s3, 8
      %v272 = vld [vmem:[%s271] sm:$0xf]
      %v273 = vlaneseq
      %v274 = vshrl.u32 %v273, 7
      %v275 = vsub.s32 2, %v274
      %v276 = vrot.slane %v245, %v275
      %278 = vset.pattern.permute.xlu0 0
      %279 = vperm.xlu0 %278, %v272
      %v280 = vpop.permute.xlu0 %279
      %v282 = vmul.f32 %v276, %v280
      %v283 = vadd.f32 %v270, %v282
      %s284 = scalar_lea.vmem %s3, 12
      %v285 = vld [vmem:[%s284] sm:$0xf]
      %v286 = vlaneseq
      %v287 = vshrl.u32 %v286, 7
      %v288 = vsub.s32 3, %v287
      %v289 = vrot.slane %v245, %v288
      %291 = vset.pattern.permute.xlu0 0
      %292 = vperm.xlu0 %291, %v285
      %v293 = vpop.permute.xlu0 %292
      %v295 = vmul.f32 %v289, %v293
      %v296 = vadd.f32 %v283, %v295
      %s297 = scalar_lea.vmem %s3, 16
      %v298 = vld [vmem:[%s297] sm:$0xf]
      %v299 = vlaneseq
      %v300 = vshrl.u32 %v299, 7
      %v301 = vsub.s32 4, %v300
      %v302 = vrot.slane %v245, %v301
      %304 = vset.pattern.permute.xlu0 0
      %305 = vperm.xlu0 %304, %v298
      %v306 = vpop.permute.xlu0 %305
      %v308 = vmul.f32 %v302, %v306
      %v309 = vadd.f32 %v296, %v308
      %s310 = scalar_lea.vmem %s3, 20
      %v311 = vld [vmem:[%s310] sm:$0xf]
      %v312 = vlaneseq
      %v313 = vshrl.u32 %v312, 7
      %v314 = vsub.s32 5, %v313
      %v315 = vrot.slane %v245, %v314
      %317 = vset.pattern.permute.xlu0 0
      %318 = vperm.xlu0 %317, %v311
      %v319 = vpop.permute.xlu0 %318
      %v321 = vmul.f32 %v315, %v319
      %v322 = vadd.f32 %v309, %v321
      %s323 = scalar_lea.vmem %s3, 24
      %v324 = vld [vmem:[%s323] sm:$0xf]
      %v325 = vlaneseq
      %v326 = vshrl.u32 %v325, 7
      %v327 = vsub.s32 6, %v326
      %v328 = vrot.slane %v245, %v327
      %330 = vset.pattern.permute.xlu0 0
      %331 = vperm.xlu0 %330, %v324
      %v332 = vpop.permute.xlu0 %331
      %v334 = vmul.f32 %v328, %v332
      %v335 = vadd.f32 %v322, %v334
      %s336 = scalar_lea.vmem %s3, 28
      %v337 = vld [vmem:[%s336] sm:$0xf]
      %v338 = vlaneseq
      %v339 = vshrl.u32 %v338, 7
      %v340 = vsub.s32 7, %v339
      %v341 = vrot.slane %v245, %v340
      %343 = vset.pattern.permute.xlu0 0
      %344 = vperm.xlu0 %343, %v337
      %v345 = vpop.permute.xlu0 %344
      %v347 = vmul.f32 %v341, %v345
      %v348 = vadd.f32 %v335, %v347
      %vm349 = vcmask 125952
      %350 = vst.msk [vmem:[%s223] sm:$0xf] %vm349, %v348
      %p351 = scmp.lt.s32.totalorder %s19, 3
      %s352 = scalar_select %p351, %s19, 3
      %p353 = scmp.lt.s32.totalorder %s20, 0
      %s354 = scalar_select %p353, %s20, 0
      %s355 = sadd.s32 %s354, %s352
      %s356 = smul.addr %s355, 4
      %s357 = scalar_lea.vmem %s4, %s356
      // Predicated region
      $region37: #{_lambda_.8} parent=35 // pred_check
        %p358 = pneg %p138
      $region38: #{_lambda_.8} parent=35 // pred_check_branch
        %360 = sbr.rel (%p358) target = $region40
      $region39: #{_lambda_.8} parent=35 // pred_region
        _
      $region40: #{_lambda_.8} parent=35 // pred_fallthru
        _
    $region36: #{_lambda_.8} parent=5 // pred_fallthru
      _
    %p361 = scmp.le.s32.totalorder 2, %s10
    // Predicated region
    $region41: #{_lambda_.8} parent=5 // pred_check
      %p362 = pneg %p361
    $region42: #{_lambda_.8} parent=5 // pred_check_branch
      %364 = sbr.rel (%p362) target = $region44
    $region43: #{_lambda_.8} parent=5 // pred_region
      %s365 = ssub.s32 %s10, 2
      // Predicated region
      $region45: #{_lambda_.8} parent=43 // pred_check
        %p366 = pneg %p144
      $region46: #{_lambda_.8} parent=43 // pred_check_branch
        %368 = sbr.rel (%p366) target = $region48
      $region47: #{_lambda_.8} parent=43 // pred_region
        %p369 = scmp.lt.s32.totalorder %s21, 3
        %s370 = scalar_select %p369, %s21, 3
        %p371 = scmp.lt.s32.totalorder %s22, 0
        %s372 = scalar_select %p371, %s22, 0
        %s373 = sadd.s32 %s372, %s370
        %s374 = smul.addr %s373, 4
        %s375 = scalar_lea.vmem %s4, %s374
      $region48: #{_lambda_.8} parent=43 // pred_fallthru
        _
    $region44: #{_lambda_.8} parent=5 // pred_fallthru
      _
  $region6: #{_lambda_.8} parent=0 // loop_footer
    %s14 = sadd.s32 1, %s10
  $region7: #{_lambda_.8} parent=0 // loop_footer_branch
    %9 = sbr.rel target = $region3
  $region8: #{_lambda_.8} parent=0 // loop_exit
    _

// kernel: _lambda_.9
$region0: #{_lambda_.9}
  #allocation0 [shape = 'u32[]', space=smem, size = 0x4, offset = 0x4, fixed_abs, tag = 'smem constant byte address 0x4 - core index']
  #allocation1 [shape = 'u32[144,128]{1,0:T(1,128)}', space=vmem, size = 0x12000, scoped, tag = 'internal scratch']
  %s0 = inlined_call_operand.vmem [shape: f32[4,8,8], index: 0, kind: input, shape index: {}]
  %s1 = inlined_call_operand.vmem [shape: f32[8,1], index: 1, kind: input, shape index: {}]
  %s2 = inlined_call_operand.vmem [shape: f32[8,1], index: 2, kind: input, shape index: {}]
  %s3 = inlined_call_operand.vmem [shape: f32[8,4,1], index: 3, kind: input, shape index: {}]
  %s4 = inlined_call_operand.vmem [shape: f32[4,4,32], index: 4, kind: input, shape index: {}]
  %s5 = inlined_call_operand.vmem [shape: f32[32,8], index: 5, kind: input, shape index: {}]
  %s6 = inlined_call_operand.vmem [shape: f32[1,8], index: 6, kind: input, shape index: {}]
  %s7 = inlined_call_operand.vmem [shape: f32[4,4,8], index: 7, kind: output, shape index: {}]
  %s8 = sld [smem:[#allocation0]]
  $region61: #{_lambda_.9} parent=0
    _
  %s10 = ssub.s32 1, %s8
  %s11 = scalar_select 0, %s10, %s8
  loop: start=0, step=1, limit=6
  $region2: #{_lambda_.9} parent=0 // loop_pre_header
    _
  $region3: #{_lambda_.9} parent=0 // loop_header
    %s13 = sphi 0, %s17
    %p14 = scmp.ge.s32.totalorder %s13, 6
    %s20 = sphi 0, %s32
    %s21 = sphi 0, %s28
    %s22 = sphi 0, %s20
    %s23 = sphi 0, %s21
    %s24 = sphi 0, %s22
    %s25 = sphi 0, %s23
    %s37 = sphi 0, %s39
    %s40 = sphi 0, %s37
    %s41 = sphi 0, %s40
    %s57 = sphi 0, %s41
    %s61 = sphi 0, %s61
    %s63 = sphi 0, %s61
    %s64 = sphi 0, %s63
    %s78 = sphi 0, %s64
    %s82 = sphi 0, %s82
    %s84 = sphi 0, %s82
    %s85 = sphi 0, %s84
    %s99 = sphi 0, %s85
    %s103 = sphi 0, %s103
    %s105 = sphi 0, %s103
    %s106 = sphi 0, %s105
    %s120 = sphi 0, %s106
    %s126 = sphi 0, %s128
    %s129 = sphi 0, %s126
    %s130 = sphi 0, %s129
    %s146 = sphi 0, %s130
    %s152 = sphi 0, %s154
    %s155 = sphi 0, %s152
    %s156 = sphi 0, %s155
    %s172 = sphi 0, %s156
    %s178 = sphi 0, %s180
    %s181 = sphi 0, %s178
    %s182 = sphi 0, %s181
    %s198 = sphi 0, %s182
    %s206 = sphi 0, %s208
    %s209 = sphi 0, %s206
    %s210 = sphi 0, %s209
    %s226 = sphi 0, %s210
  $region4: #{_lambda_.9} parent=0 // loop_header_branch
    %16 = sbr.rel (%p14) target = $region8
  $region5: #{_lambda_.9} parent=0 // loop_body
    %s18 = ssub.s32 %s13, 1
    %s19 = ssub.s32 %s13, 2
    %s26 = sadd.s32 1, %s21
    %p27 = scmp.ge.s32.totalorder %s26, 1
    %s28 = scalar_select %p27, 0, %s26
    %s29 = sadd.s32 1, %s20
    %s30 = scalar_select %p27, %s29, %s20
    %p31 = scmp.ge.s32.totalorder %s30, 4
    %s32 = scalar_select %p31, 0, %s30
    %s33 = ssub.s32 %s20, %s32
    %s34 = ssub.s32 %s21, %s28
    %s35 = sor.u32 %s33, %s34
    %p36 = scmp.eq.s32.totalorder %s35, 0
    %s38 = sadd.s32 %s37, 1
    %s39 = scalar_select %p36, %s37, %s38
    %p42 = pneg %p36
    %p43 = scmp.eq.s32.totalorder %s13, 3
    %p44 = por %p42, %p43
    %p45 = scmp.ne.s32.totalorder %s37, %s40
    %p46 = scmp.eq.s32.totalorder %s13, 0
    %p47 = por %p45, %p46
    %p48 = scmp.ne.s32.totalorder %s37, %s40
    %p49 = scmp.eq.s32.totalorder %s18, 3
    %p50 = por %p48, %p49
    %p51 = scmp.ne.s32.totalorder %s40, %s41
    %p52 = scmp.eq.s32.totalorder %s18, 0
    %p53 = por %p51, %p52
    %p54 = scmp.ne.s32.totalorder %s40, %s41
    %p55 = scmp.eq.s32.totalorder %s19, 3
    %p56 = por %p54, %p55
    %p58 = scmp.ne.s32.totalorder %s41, %s57
    %p59 = scmp.eq.s32.totalorder %s19, 0
    %p60 = por %p58, %p59
    %s62 = sadd.s32 %s61, 1
    %p65 = scmp.eq.s32.totalorder %s13, 3
    %p66 = scmp.ne.s32.totalorder %s61, %s63
    %p67 = scmp.eq.s32.totalorder %s13, 0
    %p68 = por %p66, %p67
    %p69 = scmp.ne.s32.totalorder %s61, %s63
    %p70 = scmp.eq.s32.totalorder %s18, 3
    %p71 = por %p69, %p70
    %p72 = scmp.ne.s32.totalorder %s63, %s64
    %p73 = scmp.eq.s32.totalorder %s18, 0
    %p74 = por %p72, %p73
    %p75 = scmp.ne.s32.totalorder %s63, %s64
    %p76 = scmp.eq.s32.totalorder %s19, 3
    %p77 = por %p75, %p76
    %p79 = scmp.ne.s32.totalorder %s64, %s78
    %p80 = scmp.eq.s32.totalorder %s19, 0
    %p81 = por %p79, %p80
    %s83 = sadd.s32 %s82, 1
    %p86 = scmp.eq.s32.totalorder %s13, 3
    %p87 = scmp.ne.s32.totalorder %s82, %s84
    %p88 = scmp.eq.s32.totalorder %s13, 0
    %p89 = por %p87, %p88
    %p90 = scmp.ne.s32.totalorder %s82, %s84
    %p91 = scmp.eq.s32.totalorder %s18, 3
    %p92 = por %p90, %p91
    %p93 = scmp.ne.s32.totalorder %s84, %s85
    %p94 = scmp.eq.s32.totalorder %s18, 0
    %p95 = por %p93, %p94
    %p96 = scmp.ne.s32.totalorder %s84, %s85
    %p97 = scmp.eq.s32.totalorder %s19, 3
    %p98 = por %p96, %p97
    %p100 = scmp.ne.s32.totalorder %s85, %s99
    %p101 = scmp.eq.s32.totalorder %s19, 0
    %p102 = por %p100, %p101
    %s104 = sadd.s32 %s103, 1
    %p107 = scmp.eq.s32.totalorder %s13, 3
    %p108 = scmp.ne.s32.totalorder %s103, %s105
    %p109 = scmp.eq.s32.totalorder %s13, 0
    %p110 = por %p108, %p109
    %p111 = scmp.ne.s32.totalorder %s103, %s105
    %p112 = scmp.eq.s32.totalorder %s18, 3
    %p113 = por %p111, %p112
    %p114 = scmp.ne.s32.totalorder %s105, %s106
    %p115 = scmp.eq.s32.totalorder %s18, 0
    %p116 = por %p114, %p115
    %p117 = scmp.ne.s32.totalorder %s105, %s106
    %p118 = scmp.eq.s32.totalorder %s19, 3
    %p119 = por %p117, %p118
    %p121 = scmp.ne.s32.totalorder %s106, %s120
    %p122 = scmp.eq.s32.totalorder %s19, 0
    %p123 = por %p121, %p122
    %s124 = ssub.s32 %s20, %s32
    %p125 = scmp.eq.s32.totalorder %s124, 0
    %s127 = sadd.s32 %s126, 1
    %s128 = scalar_select %p125, %s126, %s127
    %p131 = pneg %p125
    %p132 = scmp.eq.s32.totalorder %s13, 3
    %p133 = por %p131, %p132
    %p134 = scmp.ne.s32.totalorder %s126, %s129
    %p135 = scmp.eq.s32.totalorder %s13, 0
    %p136 = por %p134, %p135
    %p137 = scmp.ne.s32.totalorder %s126, %s129
    %p138 = scmp.eq.s32.totalorder %s18, 3
    %p139 = por %p137, %p138
    %p140 = scmp.ne.s32.totalorder %s129, %s130
    %p141 = scmp.eq.s32.totalorder %s18, 0
    %p142 = por %p140, %p141
    %p143 = scmp.ne.s32.totalorder %s129, %s130
    %p144 = scmp.eq.s32.totalorder %s19, 3
    %p145 = por %p143, %p144
    %p147 = scmp.ne.s32.totalorder %s130, %s146
    %p148 = scmp.eq.s32.totalorder %s19, 0
    %p149 = por %p147, %p148
    %s150 = ssub.s32 %s21, %s28
    %p151 = scmp.eq.s32.totalorder %s150, 0
    %s153 = sadd.s32 %s152, 1
    %s154 = scalar_select %p151, %s152, %s153
    %p157 = pneg %p151
    %p158 = scmp.eq.s32.totalorder %s13, 3
    %p159 = por %p157, %p158
    %p160 = scmp.ne.s32.totalorder %s152, %s155
    %p161 = scmp.eq.s32.totalorder %s13, 0
    %p162 = por %p160, %p161
    %p163 = scmp.ne.s32.totalorder %s152, %s155
    %p164 = scmp.eq.s32.totalorder %s18, 3
    %p165 = por %p163, %p164
    %p166 = scmp.ne.s32.totalorder %s155, %s156
    %p167 = scmp.eq.s32.totalorder %s18, 0
    %p168 = por %p166, %p167
    %p169 = scmp.ne.s32.totalorder %s155, %s156
    %p170 = scmp.eq.s32.totalorder %s19, 3
    %p171 = por %p169, %p170
    %p173 = scmp.ne.s32.totalorder %s156, %s172
    %p174 = scmp.eq.s32.totalorder %s19, 0
    %p175 = por %p173, %p174
    %s176 = ssub.s32 %s21, %s28
    %p177 = scmp.eq.s32.totalorder %s176, 0
    %s179 = sadd.s32 %s178, 1
    %s180 = scalar_select %p177, %s178, %s179
    %p183 = pneg %p177
    %p184 = scmp.eq.s32.totalorder %s13, 3
    %p185 = por %p183, %p184
    %p186 = scmp.ne.s32.totalorder %s178, %s181
    %p187 = scmp.eq.s32.totalorder %s13, 0
    %p188 = por %p186, %p187
    %p189 = scmp.ne.s32.totalorder %s178, %s181
    %p190 = scmp.eq.s32.totalorder %s18, 3
    %p191 = por %p189, %p190
    %p192 = scmp.ne.s32.totalorder %s181, %s182
    %p193 = scmp.eq.s32.totalorder %s18, 0
    %p194 = por %p192, %p193
    %p195 = scmp.ne.s32.totalorder %s181, %s182
    %p196 = scmp.eq.s32.totalorder %s19, 3
    %p197 = por %p195, %p196
    %p199 = scmp.ne.s32.totalorder %s182, %s198
    %p200 = scmp.eq.s32.totalorder %s19, 0
    %p201 = por %p199, %p200
    %s202 = ssub.s32 %s20, %s32
    %s203 = ssub.s32 %s21, %s28
    %s204 = sor.u32 %s202, %s203
    %p205 = scmp.eq.s32.totalorder %s204, 0
    %s207 = sadd.s32 %s206, 1
    %s208 = scalar_select %p205, %s206, %s207
    %p211 = pneg %p205
    %p212 = scmp.eq.s32.totalorder %s13, 3
    %p213 = por %p211, %p212
    %p214 = scmp.ne.s32.totalorder %s206, %s209
    %p215 = scmp.eq.s32.totalorder %s13, 0
    %p216 = por %p214, %p215
    %p217 = scmp.ne.s32.totalorder %s206, %s209
    %p218 = scmp.eq.s32.totalorder %s18, 3
    %p219 = por %p217, %p218
    %p220 = scmp.ne.s32.totalorder %s209, %s210
    %p221 = scmp.eq.s32.totalorder %s18, 0
    %p222 = por %p220, %p221
    %p223 = scmp.ne.s32.totalorder %s209, %s210
    %p224 = scmp.eq.s32.totalorder %s19, 3
    %p225 = por %p223, %p224
    %p227 = scmp.ne.s32.totalorder %s210, %s226
    %p228 = scmp.eq.s32.totalorder %s19, 0
    %p229 = por %p227, %p228
    %p230 = scmp.le.s32.totalorder 1, %s13
    %p231 = scmp.lt.s32.totalorder %s13, 5
    %p232 = pnand %p230, %p231
    %p233 = pneg %p232
    // Predicated region
    $region9: #{_lambda_.9} parent=5 // pred_check
      _
    $region10: #{_lambda_.9} parent=5 // pred_check_branch
      %235 = sbr.rel (%p232) target = $region12
    $region11: #{_lambda_.9} parent=5 // pred_region
      %s236 = ssub.s32 %s13, 1
      // Predicated region
      $region13: #{_lambda_.9} parent=11 // pred_check
        %p237 = pneg %p74
      $region14: #{_lambda_.9} parent=11 // pred_check_branch
        %239 = sbr.rel (%p237) target = $region16
      $region15: #{_lambda_.9} parent=11 // pred_region
        _
      $region16: #{_lambda_.9} parent=11 // pred_fallthru
        _
      // Predicated region
      $region17: #{_lambda_.9} parent=11 // pred_check
        %p240 = pneg %p95
      $region18: #{_lambda_.9} parent=11 // pred_check_branch
        %242 = sbr.rel (%p240) target = $region20
      $region19: #{_lambda_.9} parent=11 // pred_region
        _
      $region20: #{_lambda_.9} parent=11 // pred_fallthru
        _
      // Predicated region
      $region21: #{_lambda_.9} parent=11 // pred_check
        %p243 = pneg %p116
      $region22: #{_lambda_.9} parent=11 // pred_check_branch
        %245 = sbr.rel (%p243) target = $region24
      $region23: #{_lambda_.9} parent=11 // pred_region
        _
      $region24: #{_lambda_.9} parent=11 // pred_fallthru
        _
      // Predicated region
      $region25: #{_lambda_.9} parent=11 // pred_check
        %p246 = pneg %p168
      $region26: #{_lambda_.9} parent=11 // pred_check_branch
        %248 = sbr.rel (%p246) target = $region28
      $region27: #{_lambda_.9} parent=11 // pred_region
        %p249 = scmp.lt.s32.totalorder %s23, 0
        %s250 = scalar_select %p249, %s23, 0
        %s251 = smul.addr %s250, 8
        %s252 = scalar_lea.vmem %s5, %s251
      $region28: #{_lambda_.9} parent=11 // pred_fallthru
        _
      // Predicated region
      $region29: #{_lambda_.9} parent=11 // pred_check
        %p253 = pneg %p194
      $region30: #{_lambda_.9} parent=11 // pred_check_branch
        %255 = sbr.rel (%p253) target = $region32
      $region31: #{_lambda_.9} parent=11 // pred_region
        %p256 = scmp.lt.s32.totalorder %s23, 0
        %s257 = scalar_select %p256, %s23, 0
        %s258 = scalar_lea.vmem %s6, %s257
      $region32: #{_lambda_.9} parent=11 // pred_fallthru
        _
    $region12: #{_lambda_.9} parent=5 // pred_fallthru
      _
    %p259 = scmp.lt.s32.totalorder %s13, 4
    // Predicated region
    $region33: #{_lambda_.9} parent=5 // pred_check
      %p260 = pneg %p259
    $region34: #{_lambda_.9} parent=5 // pred_check_branch
      %262 = sbr.rel (%p260) target = $region36
    $region35: #{_lambda_.9} parent=5 // pred_region
      // Predicated region
      $region37: #{_lambda_.9} parent=35 // pred_check
        %p263 = pneg %p47
      $region38: #{_lambda_.9} parent=35 // pred_check_branch
        %265 = sbr.rel (%p263) target = $region40
      $region39: #{_lambda_.9} parent=35 // pred_region
        %p266 = scmp.lt.s32.totalorder %s20, 3
        %s267 = scalar_select %p266, %s20, 3
        %p268 = scmp.lt.s32.totalorder %s21, 0
        %s269 = scalar_select %p268, %s21, 0
        %s270 = sadd.s32 %s269, %s267
        %s271 = smul.addr %s270, 8
        %s272 = scalar_lea.vmem %s0, %s271
      $region40: #{_lambda_.9} parent=35 // pred_fallthru
        _
      // Predicated region
      $region41: #{_lambda_.9} parent=35 // pred_check
        %p273 = pneg %p136
      $region42: #{_lambda_.9} parent=35 // pred_check_branch
        %275 = sbr.rel (%p273) target = $region44
      $region43: #{_lambda_.9} parent=35 // pred_region
        %p276 = scmp.lt.s32.totalorder %s20, 3
        %s277 = scalar_select %p276, %s20, 3
        %s278 = smul.addr %s277, 4
        %s279 = scalar_lea.vmem %s4, %s278
      $region44: #{_lambda_.9} parent=35 // pred_fallthru
        _
    $region36: #{_lambda_.9} parent=5 // pred_fallthru
      _
    %p280 = scmp.le.s32.totalorder 1, %s13
    %p281 = scmp.lt.s32.totalorder %s13, 5
    %p282 = pnand %p280, %p281
    %p283 = pneg %p282
    // Predicated region
    $region45: #{_lambda_.9} parent=5 // pred_check
      _
    $region46: #{_lambda_.9} parent=5 // pred_check_branch
      %285 = sbr.rel (%p282) target = $region48
    $region47: #{_lambda_.9} parent=5 // pred_region
      %s286 = ssub.s32 %s13, 1
      %p287 = scmp.lt.s32.totalorder %s22, 3
      %s288 = scalar_select %p287, %s22, 3
      %p289 = scmp.lt.s32.totalorder %s23, 0
      %s290 = scalar_select %p289, %s23, 0
      %s291 = sadd.s32 %s290, %s288
      %s292 = smul.addr %s291, 8
      %s293 = scalar_lea.vmem %s0, %s292
      %p294 = pneg %p53
      %p295 = pneg %p50
      %p296 = pneg %p74
      %p297 = pneg %p71
      %p298 = pneg %p95
      %p299 = pneg %p92
      %p300 = pneg %p116
      %p301 = pneg %p113
      %p302 = scmp.lt.s32.totalorder %s22, 3
      %s303 = scalar_select %p302, %s22, 3
      %s304 = smul.addr %s303, 4
      %s305 = scalar_lea.vmem %s4, %s304
      %p306 = pneg %p142
      %p307 = pneg %p139
      %p308 = scmp.lt.s32.totalorder %s23, 0
      %s309 = scalar_select %p308, %s23, 0
      %s310 = smul.addr %s309, 8
      %s311 = scalar_lea.vmem %s5, %s310
      %p312 = pneg %p168
      %p313 = pneg %p165
      %p314 = scmp.lt.s32.totalorder %s23, 0
      %s315 = scalar_select %p314, %s23, 0
      %s316 = scalar_lea.vmem %s6, %s315
      %p317 = pneg %p194
      %p318 = pneg %p191
      %p319 = pneg %p222
      %p320 = pneg %p219
      %p321 = scmp.lt.s32.totalorder %s22, 3
      %s322 = scalar_select %p321, %s22, 3
      %p323 = scmp.lt.s32.totalorder %s23, 0
      %s324 = scalar_select %p323, %s23, 0
      %s325 = sadd.s32 %s324, %s322
      %s326 = smul.addr %s325, 4
      %s327 = scalar_lea.vmem %s7, %s326
      %p328 = scmp.lt.s32.totalorder %s22, 3
      %s329 = scalar_select %p328, %s22, 3
      %p330 = scmp.lt.s32.totalorder %s23, 0
      %s331 = scalar_select %p330, %s23, 0
      %s332 = sadd.s32 %s331, %s329
      %s333 = smul.addr %s332, 8
      %s334 = scalar_lea.vmem %s0, %s333
      %p335 = scmp.lt.s32.totalorder %s22, 3
      %s336 = scalar_select %p335, %s22, 3
      %s337 = smul.addr %s336, 4
      %s338 = scalar_lea.vmem %s4, %s337
      %p339 = scmp.lt.s32.totalorder %s23, 0
      %s340 = scalar_select %p339, %s23, 0
      %s341 = smul.addr %s340, 8
      %s342 = scalar_lea.vmem %s5, %s341
      %p343 = scmp.lt.s32.totalorder %s23, 0
      %s344 = scalar_select %p343, %s23, 0
      %s345 = scalar_lea.vmem %s6, %s344
      %p346 = scmp.lt.s32.totalorder %s22, 3
      %s347 = scalar_select %p346, %s22, 3
      %p348 = scmp.lt.s32.totalorder %s23, 0
      %s349 = scalar_select %p348, %s23, 0
      %s350 = sadd.s32 %s349, %s347
      %s351 = smul.addr %s350, 4
      %s352 = scalar_lea.vmem %s7, %s351
      %v353 = vld [vmem:[%s334] sm:$0xff]
      %v354 = vld [vmem:[%s1] sm:$0xff]
      %356 = vset.pattern.permute.xlu0 0
      %357 = vperm.xlu0 %356, %v354
      %v358 = vpop.permute.xlu0 %357
      %v360 = vmul.f32 %v353, %v358
      %v361 = vld [vmem:[%s2] sm:$0xff]
      %363 = vset.pattern.permute.xlu0 0
      %364 = vperm.xlu0 %363, %v361
      %v365 = vpop.permute.xlu0 %364
      %v367 = vadd.f32 %v360, %v365
      %v368 = vxor.u32 %v367, 2147483648
      %v369 = vmul.f32 %v368, 1.442695
      %v370 = vpow.pop %v369
      %v371 = vadd.f32 %v370, 1.0
      %v372 = vrcp.pop %v371
      %v373 = vmul.f32 1.0, %v372
      %v374 = vmul.f32 %v367, %v373
      %v375 = vld [vmem:[%s3] sm:$0xf]
      %v376 = vlaneseq
      %v377 = vshrl.u32 %v376, 7
      %v378 = vsub.s32 0, %v377
      %v379 = vrot.slane %v374, %v378
      %381 = vset.pattern.permute.xlu0 0
      %382 = vperm.xlu0 %381, %v375
      %v383 = vpop.permute.xlu0 %382
      %v385 = vmul.f32 %v379, %v383
      %v386 = vadd.f32 %v385, 0.0
      %s387 = scalar_lea.vmem %s3, 4
      %v388 = vld [vmem:[%s387] sm:$0xf]
      %v389 = vlaneseq
      %v390 = vshrl.u32 %v389, 7
      %v391 = vsub.s32 1, %v390
      %v392 = vrot.slane %v374, %v391
      %394 = vset.pattern.permute.xlu0 0
      %395 = vperm.xlu0 %394, %v388
      %v396 = vpop.permute.xlu0 %395
      %v398 = vmul.f32 %v392, %v396
      %v399 = vadd.f32 %v386, %v398
      %s400 = scalar_lea.vmem %s3, 8
      %v401 = vld [vmem:[%s400] sm:$0xf]
      %v402 = vlaneseq
      %v403 = vshrl.u32 %v402, 7
      %v404 = vsub.s32 2, %v403
      %v405 = vrot.slane %v374, %v404
      %407 = vset.pattern.permute.xlu0 0
      %408 = vperm.xlu0 %407, %v401
      %v409 = vpop.permute.xlu0 %408
      %v411 = vmul.f32 %v405, %v409
      %v412 = vadd.f32 %v399, %v411
      %s413 = scalar_lea.vmem %s3, 12
      %v414 = vld [vmem:[%s413] sm:$0xf]
      %v415 = vlaneseq
      %v416 = vshrl.u32 %v415, 7
      %v417 = vsub.s32 3, %v416
      %v418 = vrot.slane %v374, %v417
      %420 = vset.pattern.permute.xlu0 0
      %421 = vperm.xlu0 %420, %v414
      %v422 = vpop.permute.xlu0 %421
      %v424 = vmul.f32 %v418, %v422
      %v425 = vadd.f32 %v412, %v424
      %s426 = scalar_lea.vmem %s3, 16
      %v427 = vld [vmem:[%s426] sm:$0xf]
      %v428 = vlaneseq
      %v429 = vshrl.u32 %v428, 7
      %v430 = vsub.s32 4, %v429
      %v431 = vrot.slane %v374, %v430
      %433 = vset.pattern.permute.xlu0 0
      %434 = vperm.xlu0 %433, %v427
      %v435 = vpop.permute.xlu0 %434
      %v437 = vmul.f32 %v431, %v435
      %v438 = vadd.f32 %v425, %v437
      %s439 = scalar_lea.vmem %s3, 20
      %v440 = vld [vmem:[%s439] sm:$0xf]
      %v441 = vlaneseq
      %v442 = vshrl.u32 %v441, 7
      %v443 = vsub.s32 5, %v442
      %v444 = vrot.slane %v374, %v443
      %446 = vset.pattern.permute.xlu0 0
      %447 = vperm.xlu0 %446, %v440
      %v448 = vpop.permute.xlu0 %447
      %v450 = vmul.f32 %v444, %v448
      %v451 = vadd.f32 %v438, %v450
      %s452 = scalar_lea.vmem %s3, 24
      %v453 = vld [vmem:[%s452] sm:$0xf]
      %v454 = vlaneseq
      %v455 = vshrl.u32 %v454, 7
      %v456 = vsub.s32 6, %v455
      %v457 = vrot.slane %v374, %v456
      %459 = vset.pattern.permute.xlu0 0
      %460 = vperm.xlu0 %459, %v453
      %v461 = vpop.permute.xlu0 %460
      %v463 = vmul.f32 %v457, %v461
      %v464 = vadd.f32 %v451, %v463
      %s465 = scalar_lea.vmem %s3, 28
      %v466 = vld [vmem:[%s465] sm:$0xf]
      %v467 = vlaneseq
      %v468 = vshrl.u32 %v467, 7
      %v469 = vsub.s32 7, %v468
      %v470 = vrot.slane %v374, %v469
      %472 = vset.pattern.permute.xlu0 0
      %473 = vperm.xlu0 %472, %v466
      %v474 = vpop.permute.xlu0 %473
      %v476 = vmul.f32 %v470, %v474
      %v477 = vadd.f32 %v464, %v476
      %v478 = vld [vmem:[%s338] sm:$0xf]
      %v479 = vld [vmem:[%s342] sm:$0xff]
      %v480 = vld [vmem:[%s342 + $0x8] sm:$0xff]
      %v481 = vld [vmem:[%s342 + $0x10] sm:$0xff]
      %v482 = vld [vmem:[%s342 + $0x18] sm:$0xff]
      %vm483 = vcmask 261120
      %v485 = vsel %vm483, %v478, 0
      %487 = vmatprep.subr.mxu0 0.0
      %488 = vmatpush1.msra.mxu0 0.0
      %489 = vmatprep.subr.mxu0 0.0
      %490 = vmatpush1.msra.mxu0 0.0
      %491 = vmatprep.subr.mxu0 0.0
      %492 = vmatpush1.msra.mxu0 0.0
      %493 = vmatprep.subr.mxu0 0.0
      %494 = vmatpush1.msra.mxu0 0.0
      %495 = vmatprep.subr.mxu0 0.0
      %496 = vmatpush1.msra.mxu0 0.0
      %497 = vmatprep.subr.mxu0 0.0
      %498 = vmatpush1.msra.mxu0 0.0
      %499 = vmatprep.subr.mxu0 0.0
      %500 = vmatpush1.msra.mxu0 0.0
      %501 = vmatprep.subr.mxu0 0.0
      %502 = vmatpush1.msra.mxu0 0.0
      %503 = vmatprep.subr.mxu0 0.0
      %504 = vmatpush1.msra.mxu0 0.0
      %505 = vmatprep.subr.mxu0 0.0
      %506 = vmatpush1.msra.mxu0 0.0
      %507 = vmatprep.subr.mxu0 0.0
      %508 = vmatpush1.msra.mxu0 0.0
      %509 = vmatprep.subr.mxu0 0.0
      %510 = vmatpush1.msra.mxu0 0.0
      %511 = vmatprep.subr.mxu0 0.0
      %512 = vmatpush1.msra.mxu0 %v482
      %513 = vmatprep.subr.mxu0 0.0
      %514 = vmatpush1.msra.mxu0 %v481
      %515 = vmatprep.subr.mxu0 0.0
      %516 = vmatpush1.msra.mxu0 %v480
      %517 = vmatprep.subr.mxu0 0.0
      %518 = vmatpush1.msra.mxu0 %v479
      %519 = vmatprep.subr.mxu0 0.0
      %520 = vmatpush2.msra.mxu0 0.0
      %521 = vmatprep.subr.mxu0 0.0
      %522 = vmatpush2.msra.mxu0 0.0
      %523 = vmatprep.subr.mxu0 0.0
      %524 = vmatpush2.msra.mxu0 0.0
      %525 = vmatprep.subr.mxu0 0.0
      %526 = vmatpush2.msra.mxu0 0.0
      %527 = vmatprep.subr.mxu0 0.0
      %528 = vmatpush2.msra.mxu0 0.0
      %529 = vmatprep.subr.mxu0 0.0
      %530 = vmatpush2.msra.mxu0 0.0
      %531 = vmatprep.subr.mxu0 0.0
      %532 = vmatpush2.msra.mxu0 0.0
      %533 = vmatprep.subr.mxu0 0.0
      %534 = vmatpush2.msra.mxu0 0.0
      %535 = vmatprep.subr.mxu0 0.0
      %536 = vmatpush2.msra.mxu0 0.0
      %537 = vmatprep.subr.mxu0 0.0
      %538 = vmatpush2.msra.mxu0 0.0
      %539 = vmatprep.subr.mxu0 0.0
      %540 = vmatpush2.msra.mxu0 0.0
      %541 = vmatprep.subr.mxu0 0.0
      %542 = vmatpush2.msra.mxu0 0.0
      %543 = vmatprep.subr.mxu0 0.0
      %544 = vmatpush2.msra.mxu0 0.0
      %545 = vmatprep.subr.mxu0 0.0
      %546 = vmatpush2.msra.mxu0 0.0
      %547 = vmatprep.subr.mxu0 0.0
      %548 = vmatpush2.msra.mxu0 0.0
      %549 = vmatprep.subr.mxu0 0.0
      %550 = vmatpush2.msra.mxu0 0.0
      %551 = vmatprep.mubr.f32.mxu0 0.0
      %552 = vmatmul.mubr.f32.gmra.mxu0 %v485
      %v553 = vpop.f32.mrf.mxu0
      %v554 = vadd.f32 0.0, %v553
      %v555 = vpop.f32.mrf.mxu0
      %556 = vdwg.mxu0
      %v557 = vadd.f32 %v477, %v554
      %v558 = vld [vmem:[%s345] sm:$0x1]
      %v560 = vlaneseq
      %v561 = vshrl.u32 %v560, 7
      %v562 = vsub.s32 0, %v561
      %v563 = vrot.slane %v558, %v562
      %v565 = vadd.f32 %v557, %v563
      %vm566 = vcmask 60416
      %567 = vst.msk [vmem:[%s352] sm:$0xf] %vm566, %v565
      %p568 = scmp.lt.s32.totalorder %s22, 3
      %s569 = scalar_select %p568, %s22, 3
      %p570 = scmp.lt.s32.totalorder %s23, 0
      %s571 = scalar_select %p570, %s23, 0
      %s572 = sadd.s32 %s571, %s569
      %s573 = smul.addr %s572, 4
      %s574 = scalar_lea.vmem %s7, %s573
      // Predicated region
      $region49: #{_lambda_.9} parent=47 // pred_check
        %p575 = pneg %p219
      $region50: #{_lambda_.9} parent=47 // pred_check_branch
        %577 = sbr.rel (%p575) target = $region52
      $region51: #{_lambda_.9} parent=47 // pred_region
        _
      $region52: #{_lambda_.9} parent=47 // pred_fallthru
        _
    $region48: #{_lambda_.9} parent=5 // pred_fallthru
      _
    %p578 = scmp.le.s32.totalorder 2, %s13
    // Predicated region
    $region53: #{_lambda_.9} parent=5 // pred_check
      %p579 = pneg %p578
    $region54: #{_lambda_.9} parent=5 // pred_check_branch
      %581 = sbr.rel (%p579) target = $region56
    $region55: #{_lambda_.9} parent=5 // pred_region
      %s582 = ssub.s32 %s13, 2
      // Predicated region
      $region57: #{_lambda_.9} parent=55 // pred_check
        %p583 = pneg %p225
      $region58: #{_lambda_.9} parent=55 // pred_check_branch
        %585 = sbr.rel (%p583) target = $region60
      $region59: #{_lambda_.9} parent=55 // pred_region
        %p586 = scmp.lt.s32.totalorder %s24, 3
        %s587 = scalar_select %p586, %s24, 3
        %p588 = scmp.lt.s32.totalorder %s25, 0
        %s589 = scalar_select %p588, %s25, 0
        %s590 = sadd.s32 %s589, %s587
        %s591 = smul.addr %s590, 4
        %s592 = scalar_lea.vmem %s7, %s591
      $region60: #{_lambda_.9} parent=55 // pred_fallthru
        _
    $region56: #{_lambda_.9} parent=5 // pred_fallthru
      _
  $region6: #{_lambda_.9} parent=0 // loop_footer
    %s17 = sadd.s32 1, %s13
  $region7: #{_lambda_.9} parent=0 // loop_footer_branch
    %12 = sbr.rel target = $region3
  $region8: #{_lambda_.9} parent=0 // loop_exit
    _

// kernel: _lambda_.10
$region0: #{_lambda_.10}
  #allocation0 [shape = 'u32[]', space=smem, size = 0x4, offset = 0x4, fixed_abs, tag = 'smem constant byte address 0x4 - core index']
  #allocation1 [shape = 'u32[144,128]{1,0:T(1,128)}', space=vmem, size = 0x12000, scoped, tag = 'internal scratch']
  %s0 = inlined_call_operand.vmem [shape: f32[4,8,4], index: 0, kind: input, shape index: {}]
  %s1 = inlined_call_operand.vmem [shape: f32[8,1], index: 1, kind: input, shape index: {}]
  %s2 = inlined_call_operand.vmem [shape: f32[8,1], index: 2, kind: input, shape index: {}]
  %s3 = inlined_call_operand.vmem [shape: f32[8,4,1], index: 3, kind: input, shape index: {}]
  %s4 = inlined_call_operand.vmem [shape: f32[4,4,4], index: 4, kind: output, shape index: {}]
  %s5 = sld [smem:[#allocation0]]
  $region49: #{_lambda_.10} parent=0
    _
  %s7 = ssub.s32 1, %s5
  %s8 = scalar_select 0, %s7, %s5
  loop: start=0, step=1, limit=6
  $region2: #{_lambda_.10} parent=0 // loop_pre_header
    _
  $region3: #{_lambda_.10} parent=0 // loop_header
    %s10 = sphi 0, %s14
    %p11 = scmp.ge.s32.totalorder %s10, 6
    %s17 = sphi 0, %s29
    %s18 = sphi 0, %s25
    %s19 = sphi 0, %s17
    %s20 = sphi 0, %s18
    %s21 = sphi 0, %s19
    %s22 = sphi 0, %s20
    %s34 = sphi 0, %s36
    %s37 = sphi 0, %s34
    %s38 = sphi 0, %s37
    %s54 = sphi 0, %s38
    %s58 = sphi 0, %s58
    %s60 = sphi 0, %s58
    %s61 = sphi 0, %s60
    %s75 = sphi 0, %s61
    %s79 = sphi 0, %s79
    %s81 = sphi 0, %s79
    %s82 = sphi 0, %s81
    %s96 = sphi 0, %s82
    %s100 = sphi 0, %s100
    %s102 = sphi 0, %s100
    %s103 = sphi 0, %s102
    %s117 = sphi 0, %s103
    %s125 = sphi 0, %s127
    %s128 = sphi 0, %s125
    %s129 = sphi 0, %s128
    %s145 = sphi 0, %s129
  $region4: #{_lambda_.10} parent=0 // loop_header_branch
    %13 = sbr.rel (%p11) target = $region8
  $region5: #{_lambda_.10} parent=0 // loop_body
    %s15 = ssub.s32 %s10, 1
    %s16 = ssub.s32 %s10, 2
    %s23 = sadd.s32 1, %s18
    %p24 = scmp.ge.s32.totalorder %s23, 1
    %s25 = scalar_select %p24, 0, %s23
    %s26 = sadd.s32 1, %s17
    %s27 = scalar_select %p24, %s26, %s17
    %p28 = scmp.ge.s32.totalorder %s27, 4
    %s29 = scalar_select %p28, 0, %s27
    %s30 = ssub.s32 %s17, %s29
    %s31 = ssub.s32 %s18, %s25
    %s32 = sor.u32 %s30, %s31
    %p33 = scmp.eq.s32.totalorder %s32, 0
    %s35 = sadd.s32 %s34, 1
    %s36 = scalar_select %p33, %s34, %s35
    %p39 = pneg %p33
    %p40 = scmp.eq.s32.totalorder %s10, 3
    %p41 = por %p39, %p40
    %p42 = scmp.ne.s32.totalorder %s34, %s37
    %p43 = scmp.eq.s32.totalorder %s10, 0
    %p44 = por %p42, %p43
    %p45 = scmp.ne.s32.totalorder %s34, %s37
    %p46 = scmp.eq.s32.totalorder %s15, 3
    %p47 = por %p45, %p46
    %p48 = scmp.ne.s32.totalorder %s37, %s38
    %p49 = scmp.eq.s32.totalorder %s15, 0
    %p50 = por %p48, %p49
    %p51 = scmp.ne.s32.totalorder %s37, %s38
    %p52 = scmp.eq.s32.totalorder %s16, 3
    %p53 = por %p51, %p52
    %p55 = scmp.ne.s32.totalorder %s38, %s54
    %p56 = scmp.eq.s32.totalorder %s16, 0
    %p57 = por %p55, %p56
    %s59 = sadd.s32 %s58, 1
    %p62 = scmp.eq.s32.totalorder %s10, 3
    %p63 = scmp.ne.s32.totalorder %s58, %s60
    %p64 = scmp.eq.s32.totalorder %s10, 0
    %p65 = por %p63, %p64
    %p66 = scmp.ne.s32.totalorder %s58, %s60
    %p67 = scmp.eq.s32.totalorder %s15, 3
    %p68 = por %p66, %p67
    %p69 = scmp.ne.s32.totalorder %s60, %s61
    %p70 = scmp.eq.s32.totalorder %s15, 0
    %p71 = por %p69, %p70
    %p72 = scmp.ne.s32.totalorder %s60, %s61
    %p73 = scmp.eq.s32.totalorder %s16, 3
    %p74 = por %p72, %p73
    %p76 = scmp.ne.s32.totalorder %s61, %s75
    %p77 = scmp.eq.s32.totalorder %s16, 0
    %p78 = por %p76, %p77
    %s80 = sadd.s32 %s79, 1
    %p83 = scmp.eq.s32.totalorder %s10, 3
    %p84 = scmp.ne.s32.totalorder %s79, %s81
    %p85 = scmp.eq.s32.totalorder %s10, 0
    %p86 = por %p84, %p85
    %p87 = scmp.ne.s32.totalorder %s79, %s81
    %p88 = scmp.eq.s32.totalorder %s15, 3
    %p89 = por %p87, %p88
    %p90 = scmp.ne.s32.totalorder %s81, %s82
    %p91 = scmp.eq.s32.totalorder %s15, 0
    %p92 = por %p90, %p91
    %p93 = scmp.ne.s32.totalorder %s81, %s82
    %p94 = scmp.eq.s32.totalorder %s16, 3
    %p95 = por %p93, %p94
    %p97 = scmp.ne.s32.totalorder %s82, %s96
    %p98 = scmp.eq.s32.totalorder %s16, 0
    %p99 = por %p97, %p98
    %s101 = sadd.s32 %s100, 1
    %p104 = scmp.eq.s32.totalorder %s10, 3
    %p105 = scmp.ne.s32.totalorder %s100, %s102
    %p106 = scmp.eq.s32.totalorder %s10, 0
    %p107 = por %p105, %p106
    %p108 = scmp.ne.s32.totalorder %s100, %s102
    %p109 = scmp.eq.s32.totalorder %s15, 3
    %p110 = por %p108, %p109
    %p111 = scmp.ne.s32.totalorder %s102, %s103
    %p112 = scmp.eq.s32.totalorder %s15, 0
    %p113 = por %p111, %p112
    %p114 = scmp.ne.s32.totalorder %s102, %s103
    %p115 = scmp.eq.s32.totalorder %s16, 3
    %p116 = por %p114, %p115
    %p118 = scmp.ne.s32.totalorder %s103, %s117
    %p119 = scmp.eq.s32.totalorder %s16, 0
    %p120 = por %p118, %p119
    %s121 = ssub.s32 %s17, %s29
    %s122 = ssub.s32 %s18, %s25
    %s123 = sor.u32 %s121, %s122
    %p124 = scmp.eq.s32.totalorder %s123, 0
    %s126 = sadd.s32 %s125, 1
    %s127 = scalar_select %p124, %s125, %s126
    %p130 = pneg %p124
    %p131 = scmp.eq.s32.totalorder %s10, 3
    %p132 = por %p130, %p131
    %p133 = scmp.ne.s32.totalorder %s125, %s128
    %p134 = scmp.eq.s32.totalorder %s10, 0
    %p135 = por %p133, %p134
    %p136 = scmp.ne.s32.totalorder %s125, %s128
    %p137 = scmp.eq.s32.totalorder %s15, 3
    %p138 = por %p136, %p137
    %p139 = scmp.ne.s32.totalorder %s128, %s129
    %p140 = scmp.eq.s32.totalorder %s15, 0
    %p141 = por %p139, %p140
    %p142 = scmp.ne.s32.totalorder %s128, %s129
    %p143 = scmp.eq.s32.totalorder %s16, 3
    %p144 = por %p142, %p143
    %p146 = scmp.ne.s32.totalorder %s129, %s145
    %p147 = scmp.eq.s32.totalorder %s16, 0
    %p148 = por %p146, %p147
    %p149 = scmp.le.s32.totalorder 1, %s10
    %p150 = scmp.lt.s32.totalorder %s10, 5
    %p151 = pnand %p149, %p150
    %p152 = pneg %p151
    // Predicated region
    $region9: #{_lambda_.10} parent=5 // pred_check
      _
    $region10: #{_lambda_.10} parent=5 // pred_check_branch
      %154 = sbr.rel (%p151) target = $region12
    $region11: #{_lambda_.10} parent=5 // pred_region
      %s155 = ssub.s32 %s10, 1
      // Predicated region
      $region13: #{_lambda_.10} parent=11 // pred_check
        %p156 = pneg %p71
      $region14: #{_lambda_.10} parent=11 // pred_check_branch
        %158 = sbr.rel (%p156) target = $region16
      $region15: #{_lambda_.10} parent=11 // pred_region
        _
      $region16: #{_lambda_.10} parent=11 // pred_fallthru
        _
      // Predicated region
      $region17: #{_lambda_.10} parent=11 // pred_check
        %p159 = pneg %p92
      $region18: #{_lambda_.10} parent=11 // pred_check_branch
        %161 = sbr.rel (%p159) target = $region20
      $region19: #{_lambda_.10} parent=11 // pred_region
        _
      $region20: #{_lambda_.10} parent=11 // pred_fallthru
        _
      // Predicated region
      $region21: #{_lambda_.10} parent=11 // pred_check
        %p162 = pneg %p113
      $region22: #{_lambda_.10} parent=11 // pred_check_branch
        %164 = sbr.rel (%p162) target = $region24
      $region23: #{_lambda_.10} parent=11 // pred_region
        _
      $region24: #{_lambda_.10} parent=11 // pred_fallthru
        _
    $region12: #{_lambda_.10} parent=5 // pred_fallthru
      _
    %p165 = scmp.lt.s32.totalorder %s10, 4
    // Predicated region
    $region25: #{_lambda_.10} parent=5 // pred_check
      %p166 = pneg %p165
    $region26: #{_lambda_.10} parent=5 // pred_check_branch
      %168 = sbr.rel (%p166) target = $region28
    $region27: #{_lambda_.10} parent=5 // pred_region
      // Predicated region
      $region29: #{_lambda_.10} parent=27 // pred_check
        %p169 = pneg %p44
      $region30: #{_lambda_.10} parent=27 // pred_check_branch
        %171 = sbr.rel (%p169) target = $region32
      $region31: #{_lambda_.10} parent=27 // pred_region
        %p172 = scmp.lt.s32.totalorder %s17, 3
        %s173 = scalar_select %p172, %s17, 3
        %p174 = scmp.lt.s32.totalorder %s18, 0
        %s175 = scalar_select %p174, %s18, 0
        %s176 = sadd.s32 %s175, %s173
        %s177 = smul.addr %s176, 8
        %s178 = scalar_lea.vmem %s0, %s177
      $region32: #{_lambda_.10} parent=27 // pred_fallthru
        _
    $region28: #{_lambda_.10} parent=5 // pred_fallthru
      _
    %p179 = scmp.le.s32.totalorder 1, %s10
    %p180 = scmp.lt.s32.totalorder %s10, 5
    %p181 = pnand %p179, %p180
    %p182 = pneg %p181
    // Predicated region
    $region33: #{_lambda_.10} parent=5 // pred_check
      _
    $region34: #{_lambda_.10} parent=5 // pred_check_branch
      %184 = sbr.rel (%p181) target = $region36
    $region35: #{_lambda_.10} parent=5 // pred_region
      %s185 = ssub.s32 %s10, 1
      %p186 = scmp.lt.s32.totalorder %s19, 3
      %s187 = scalar_select %p186, %s19, 3
      %p188 = scmp.lt.s32.totalorder %s20, 0
      %s189 = scalar_select %p188, %s20, 0
      %s190 = sadd.s32 %s189, %s187
      %s191 = smul.addr %s190, 8
      %s192 = scalar_lea.vmem %s0, %s191
      %p193 = pneg %p50
      %p194 = pneg %p47
      %p195 = pneg %p71
      %p196 = pneg %p68
      %p197 = pneg %p92
      %p198 = pneg %p89
      %p199 = pneg %p113
      %p200 = pneg %p110
      %p201 = pneg %p141
      %p202 = pneg %p138
      %p203 = scmp.lt.s32.totalorder %s19, 3
      %s204 = scalar_select %p203, %s19, 3
      %p205 = scmp.lt.s32.totalorder %s20, 0
      %s206 = scalar_select %p205, %s20, 0
      %s207 = sadd.s32 %s206, %s204
      %s208 = smul.addr %s207, 4
      %s209 = scalar_lea.vmem %s4, %s208
      %p210 = scmp.lt.s32.totalorder %s19, 3
      %s211 = scalar_select %p210, %s19, 3
      %p212 = scmp.lt.s32.totalorder %s20, 0
      %s213 = scalar_select %p212, %s20, 0
      %s214 = sadd.s32 %s213, %s211
      %s215 = smul.addr %s214, 8
      %s216 = scalar_lea.vmem %s0, %s215
      %p217 = scmp.lt.s32.totalorder %s19, 3
      %s218 = scalar_select %p217, %s19, 3
      %p219 = scmp.lt.s32.totalorder %s20, 0
      %s220 = scalar_select %p219, %s20, 0
      %s221 = sadd.s32 %s220, %s218
      %s222 = smul.addr %s221, 4
      %s223 = scalar_lea.vmem %s4, %s222
      %v224 = vld [vmem:[%s216] sm:$0xff]
      %v225 = vld [vmem:[%s1] sm:$0xff]
      %227 = vset.pattern.permute.xlu0 0
      %228 = vperm.xlu0 %227, %v225
      %v229 = vpop.permute.xlu0 %228
      %v231 = vmul.f32 %v224, %v229
      %v232 = vld [vmem:[%s2] sm:$0xff]
      %234 = vset.pattern.permute.xlu0 0
      %235 = vperm.xlu0 %234, %v232
      %v236 = vpop.permute.xlu0 %235
      %v238 = vadd.f32 %v231, %v236
      %v239 = vxor.u32 %v238, 2147483648
      %v240 = vmul.f32 %v239, 1.442695
      %v241 = vpow.pop %v240
      %v242 = vadd.f32 %v241, 1.0
      %v243 = vrcp.pop %v242
      %v244 = vmul.f32 1.0, %v243
      %v245 = vmul.f32 %v238, %v244
      %v246 = vld [vmem:[%s3] sm:$0xf]
      %v247 = vlaneseq
      %v248 = vshrl.u32 %v247, 7
      %v249 = vsub.s32 0, %v248
      %v250 = vrot.slane %v245, %v249
      %252 = vset.pattern.permute.xlu0 0
      %253 = vperm.xlu0 %252, %v246
      %v254 = vpop.permute.xlu0 %253
      %v256 = vmul.f32 %v250, %v254
      %v257 = vadd.f32 %v256, 0.0
      %s258 = scalar_lea.vmem %s3, 4
      %v259 = vld [vmem:[%s258] sm:$0xf]
      %v260 = vlaneseq
      %v261 = vshrl.u32 %v260, 7
      %v262 = vsub.s32 1, %v261
      %v263 = vrot.slane %v245, %v262
      %265 = vset.pattern.permute.xlu0 0
      %266 = vperm.xlu0 %265, %v259
      %v267 = vpop.permute.xlu0 %266
      %v269 = vmul.f32 %v263, %v267
      %v270 = vadd.f32 %v257, %v269
      %s271 = scalar_lea.vmem %s3, 8
      %v272 = vld [vmem:[%s271] sm:$0xf]
      %v273 = vlaneseq
      %v274 = vshrl.u32 %v273, 7
      %v275 = vsub.s32 2, %v274
      %v276 = vrot.slane %v245, %v275
      %278 = vset.pattern.permute.xlu0 0
      %279 = vperm.xlu0 %278, %v272
      %v280 = vpop.permute.xlu0 %279
      %v282 = vmul.f32 %v276, %v280
      %v283 = vadd.f32 %v270, %v282
      %s284 = scalar_lea.vmem %s3, 12
      %v285 = vld [vmem:[%s284] sm:$0xf]
      %v286 = vlaneseq
      %v287 = vshrl.u32 %v286, 7
      %v288 = vsub.s32 3, %v287
      %v289 = vrot.slane %v245, %v288
      %291 = vset.pattern.permute.xlu0 0
      %292 = vperm.xlu0 %291, %v285
      %v293 = vpop.permute.xlu0 %292
      %v295 = vmul.f32 %v289, %v293
      %v296 = vadd.f32 %v283, %v295
      %s297 = scalar_lea.vmem %s3, 16
      %v298 = vld [vmem:[%s297] sm:$0xf]
      %v299 = vlaneseq
      %v300 = vshrl.u32 %v299, 7
      %v301 = vsub.s32 4, %v300
      %v302 = vrot.slane %v245, %v301
      %304 = vset.pattern.permute.xlu0 0
      %305 = vperm.xlu0 %304, %v298
      %v306 = vpop.permute.xlu0 %305
      %v308 = vmul.f32 %v302, %v306
      %v309 = vadd.f32 %v296, %v308
      %s310 = scalar_lea.vmem %s3, 20
      %v311 = vld [vmem:[%s310] sm:$0xf]
      %v312 = vlaneseq
      %v313 = vshrl.u32 %v312, 7
      %v314 = vsub.s32 5, %v313
      %v315 = vrot.slane %v245, %v314
      %317 = vset.pattern.permute.xlu0 0
      %318 = vperm.xlu0 %317, %v311
      %v319 = vpop.permute.xlu0 %318
      %v321 = vmul.f32 %v315, %v319
      %v322 = vadd.f32 %v309, %v321
      %s323 = scalar_lea.vmem %s3, 24
      %v324 = vld [vmem:[%s323] sm:$0xf]
      %v325 = vlaneseq
      %v326 = vshrl.u32 %v325, 7
      %v327 = vsub.s32 6, %v326
      %v328 = vrot.slane %v245, %v327
      %330 = vset.pattern.permute.xlu0 0
      %331 = vperm.xlu0 %330, %v324
      %v332 = vpop.permute.xlu0 %331
      %v334 = vmul.f32 %v328, %v332
      %v335 = vadd.f32 %v322, %v334
      %s336 = scalar_lea.vmem %s3, 28
      %v337 = vld [vmem:[%s336] sm:$0xf]
      %v338 = vlaneseq
      %v339 = vshrl.u32 %v338, 7
      %v340 = vsub.s32 7, %v339
      %v341 = vrot.slane %v245, %v340
      %343 = vset.pattern.permute.xlu0 0
      %344 = vperm.xlu0 %343, %v337
      %v345 = vpop.permute.xlu0 %344
      %v347 = vmul.f32 %v341, %v345
      %v348 = vadd.f32 %v335, %v347
      %vm349 = vcmask 27648
      %350 = vst.msk [vmem:[%s223] sm:$0xf] %vm349, %v348
      %p351 = scmp.lt.s32.totalorder %s19, 3
      %s352 = scalar_select %p351, %s19, 3
      %p353 = scmp.lt.s32.totalorder %s20, 0
      %s354 = scalar_select %p353, %s20, 0
      %s355 = sadd.s32 %s354, %s352
      %s356 = smul.addr %s355, 4
      %s357 = scalar_lea.vmem %s4, %s356
      // Predicated region
      $region37: #{_lambda_.10} parent=35 // pred_check
        %p358 = pneg %p138
      $region38: #{_lambda_.10} parent=35 // pred_check_branch
        %360 = sbr.rel (%p358) target = $region40
      $region39: #{_lambda_.10} parent=35 // pred_region
        _
      $region40: #{_lambda_.10} parent=35 // pred_fallthru
        _
    $region36: #{_lambda_.10} parent=5 // pred_fallthru
      _
    %p361 = scmp.le.s32.totalorder 2, %s10
    // Predicated region
    $region41: #{_lambda_.10} parent=5 // pred_check
      %p362 = pneg %p361
    $region42: #{_lambda_.10} parent=5 // pred_check_branch
      %364 = sbr.rel (%p362) target = $region44
    $region43: #{_lambda_.10} parent=5 // pred_region
      %s365 = ssub.s32 %s10, 2
      // Predicated region
      $region45: #{_lambda_.10} parent=43 // pred_check
        %p366 = pneg %p144
      $region46: #{_lambda_.10} parent=43 // pred_check_branch
        %368 = sbr.rel (%p366) target = $region48
      $region47: #{_lambda_.10} parent=43 // pred_region
        %p369 = scmp.lt.s32.totalorder %s21, 3
        %s370 = scalar_select %p369, %s21, 3
        %p371 = scmp.lt.s32.totalorder %s22, 0
        %s372 = scalar_select %p371, %s22, 0
        %s373 = sadd.s32 %s372, %s370
        %s374 = smul.addr %s373, 4
        %s375 = scalar_lea.vmem %s4, %s374
      $region48: #{_lambda_.10} parent=43 // pred_fallthru
        _
    $region44: #{_lambda_.10} parent=5 // pred_fallthru
      _
  $region6: #{_lambda_.10} parent=0 // loop_footer
    %s14 = sadd.s32 1, %s10
  $region7: #{_lambda_.10} parent=0 // loop_footer_branch
    %9 = sbr.rel target = $region3
  $region8: #{_lambda_.10} parent=0 // loop_exit
    _

// kernel: _lambda_.11
$region0: #{_lambda_.11}
  #allocation0 [shape = 'u32[]', space=smem, size = 0x4, offset = 0x4, fixed_abs, tag = 'smem constant byte address 0x4 - core index']
  #allocation1 [shape = 'u32[144,128]{1,0:T(1,128)}', space=vmem, size = 0x12000, scoped, tag = 'internal scratch']
  %s0 = inlined_call_operand.vmem [shape: f32[4,8,2], index: 0, kind: input, shape index: {}]
  %s1 = inlined_call_operand.vmem [shape: f32[8,1], index: 1, kind: input, shape index: {}]
  %s2 = inlined_call_operand.vmem [shape: f32[8,1], index: 2, kind: input, shape index: {}]
  %s3 = inlined_call_operand.vmem [shape: f32[8,4,1], index: 3, kind: input, shape index: {}]
  %s4 = inlined_call_operand.vmem [shape: f32[4,4,8], index: 4, kind: input, shape index: {}]
  %s5 = inlined_call_operand.vmem [shape: f32[8,2], index: 5, kind: input, shape index: {}]
  %s6 = inlined_call_operand.vmem [shape: f32[1,2], index: 6, kind: input, shape index: {}]
  %s7 = inlined_call_operand.vmem [shape: f32[4,4,2], index: 7, kind: output, shape index: {}]
  %s8 = sld [smem:[#allocation0]]
  $region61: #{_lambda_.11} parent=0
    _
  %s10 = ssub.s32 1, %s8
  %s11 = scalar_select 0, %s10, %s8
  loop: start=0, step=1, limit=6
  $region2: #{_lambda_.11} parent=0 // loop_pre_header
    _
  $region3: #{_lambda_.11} parent=0 // loop_header
    %s13 = sphi 0, %s17
    %p14 = scmp.ge.s32.totalorder %s13, 6
    %s20 = sphi 0, %s32
    %s21 = sphi 0, %s28
    %s22 = sphi 0, %s20
    %s23 = sphi 0, %s21
    %s24 = sphi 0, %s22
    %s25 = sphi 0, %s23
    %s37 = sphi 0, %s39
    %s40 = sphi 0, %s37
    %s41 = sphi 0, %s40
    %s57 = sphi 0, %s41
    %s61 = sphi 0, %s61
    %s63 = sphi 0, %s61
    %s64 = sphi 0, %s63
    %s78 = sphi 0, %s64
    %s82 = sphi 0, %s82
    %s84 = sphi 0, %s82
    %s85 = sphi 0, %s84
    %s99 = sphi 0, %s85
    %s103 = sphi 0, %s103
    %s105 = sphi 0, %s103
    %s106 = sphi 0, %s105
    %s120 = sphi 0, %s106
    %s126 = sphi 0, %s128
    %s129 = sphi 0, %s126
    %s130 = sphi 0, %s129
    %s146 = sphi 0, %s130
    %s152 = sphi 0, %s154
    %s155 = sphi 0, %s152
    %s156 = sphi 0, %s155
    %s172 = sphi 0, %s156
    %s178 = sphi 0, %s180
    %s181 = sphi 0, %s178
    %s182 = sphi 0, %s181
    %s198 = sphi 0, %s182
    %s206 = sphi 0, %s208
    %s209 = sphi 0, %s206
    %s210 = sphi 0, %s209
    %s226 = sphi 0, %s210
  $region4: #{_lambda_.11} parent=0 // loop_header_branch
    %16 = sbr.rel (%p14) target = $region8
  $region5: #{_lambda_.11} parent=0 // loop_body
    %s18 = ssub.s32 %s13, 1
    %s19 = ssub.s32 %s13, 2
    %s26 = sadd.s32 1, %s21
    %p27 = scmp.ge.s32.totalorder %s26, 1
    %s28 = scalar_select %p27, 0, %s26
    %s29 = sadd.s32 1, %s20
    %s30 = scalar_select %p27, %s29, %s20
    %p31 = scmp.ge.s32.totalorder %s30, 4
    %s32 = scalar_select %p31, 0, %s30
    %s33 = ssub.s32 %s20, %s32
    %s34 = ssub.s32 %s21, %s28
    %s35 = sor.u32 %s33, %s34
    %p36 = scmp.eq.s32.totalorder %s35, 0
    %s38 = sadd.s32 %s37, 1
    %s39 = scalar_select %p36, %s37, %s38
    %p42 = pneg %p36
    %p43 = scmp.eq.s32.totalorder %s13, 3
    %p44 = por %p42, %p43
    %p45 = scmp.ne.s32.totalorder %s37, %s40
    %p46 = scmp.eq.s32.totalorder %s13, 0
    %p47 = por %p45, %p46
    %p48 = scmp.ne.s32.totalorder %s37, %s40
    %p49 = scmp.eq.s32.totalorder %s18, 3
    %p50 = por %p48, %p49
    %p51 = scmp.ne.s32.totalorder %s40, %s41
    %p52 = scmp.eq.s32.totalorder %s18, 0
    %p53 = por %p51, %p52
    %p54 = scmp.ne.s32.totalorder %s40, %s41
    %p55 = scmp.eq.s32.totalorder %s19, 3
    %p56 = por %p54, %p55
    %p58 = scmp.ne.s32.totalorder %s41, %s57
    %p59 = scmp.eq.s32.totalorder %s19, 0
    %p60 = por %p58, %p59
    %s62 = sadd.s32 %s61, 1
    %p65 = scmp.eq.s32.totalorder %s13, 3
    %p66 = scmp.ne.s32.totalorder %s61, %s63
    %p67 = scmp.eq.s32.totalorder %s13, 0
    %p68 = por %p66, %p67
    %p69 = scmp.ne.s32.totalorder %s61, %s63
    %p70 = scmp.eq.s32.totalorder %s18, 3
    %p71 = por %p69, %p70
    %p72 = scmp.ne.s32.totalorder %s63, %s64
    %p73 = scmp.eq.s32.totalorder %s18, 0
    %p74 = por %p72, %p73
    %p75 = scmp.ne.s32.totalorder %s63, %s64
    %p76 = scmp.eq.s32.totalorder %s19, 3
    %p77 = por %p75, %p76
    %p79 = scmp.ne.s32.totalorder %s64, %s78
    %p80 = scmp.eq.s32.totalorder %s19, 0
    %p81 = por %p79, %p80
    %s83 = sadd.s32 %s82, 1
    %p86 = scmp.eq.s32.totalorder %s13, 3
    %p87 = scmp.ne.s32.totalorder %s82, %s84
    %p88 = scmp.eq.s32.totalorder %s13, 0
    %p89 = por %p87, %p88
    %p90 = scmp.ne.s32.totalorder %s82, %s84
    %p91 = scmp.eq.s32.totalorder %s18, 3
    %p92 = por %p90, %p91
    %p93 = scmp.ne.s32.totalorder %s84, %s85
    %p94 = scmp.eq.s32.totalorder %s18, 0
    %p95 = por %p93, %p94
    %p96 = scmp.ne.s32.totalorder %s84, %s85
    %p97 = scmp.eq.s32.totalorder %s19, 3
    %p98 = por %p96, %p97
    %p100 = scmp.ne.s32.totalorder %s85, %s99
    %p101 = scmp.eq.s32.totalorder %s19, 0
    %p102 = por %p100, %p101
    %s104 = sadd.s32 %s103, 1
    %p107 = scmp.eq.s32.totalorder %s13, 3
    %p108 = scmp.ne.s32.totalorder %s103, %s105
    %p109 = scmp.eq.s32.totalorder %s13, 0
    %p110 = por %p108, %p109
    %p111 = scmp.ne.s32.totalorder %s103, %s105
    %p112 = scmp.eq.s32.totalorder %s18, 3
    %p113 = por %p111, %p112
    %p114 = scmp.ne.s32.totalorder %s105, %s106
    %p115 = scmp.eq.s32.totalorder %s18, 0
    %p116 = por %p114, %p115
    %p117 = scmp.ne.s32.totalorder %s105, %s106
    %p118 = scmp.eq.s32.totalorder %s19, 3
    %p119 = por %p117, %p118
    %p121 = scmp.ne.s32.totalorder %s106, %s120
    %p122 = scmp.eq.s32.totalorder %s19, 0
    %p123 = por %p121, %p122
    %s124 = ssub.s32 %s20, %s32
    %p125 = scmp.eq.s32.totalorder %s124, 0
    %s127 = sadd.s32 %s126, 1
    %s128 = scalar_select %p125, %s126, %s127
    %p131 = pneg %p125
    %p132 = scmp.eq.s32.totalorder %s13, 3
    %p133 = por %p131, %p132
    %p134 = scmp.ne.s32.totalorder %s126, %s129
    %p135 = scmp.eq.s32.totalorder %s13, 0
    %p136 = por %p134, %p135
    %p137 = scmp.ne.s32.totalorder %s126, %s129
    %p138 = scmp.eq.s32.totalorder %s18, 3
    %p139 = por %p137, %p138
    %p140 = scmp.ne.s32.totalorder %s129, %s130
    %p141 = scmp.eq.s32.totalorder %s18, 0
    %p142 = por %p140, %p141
    %p143 = scmp.ne.s32.totalorder %s129, %s130
    %p144 = scmp.eq.s32.totalorder %s19, 3
    %p145 = por %p143, %p144
    %p147 = scmp.ne.s32.totalorder %s130, %s146
    %p148 = scmp.eq.s32.totalorder %s19, 0
    %p149 = por %p147, %p148
    %s150 = ssub.s32 %s21, %s28
    %p151 = scmp.eq.s32.totalorder %s150, 0
    %s153 = sadd.s32 %s152, 1
    %s154 = scalar_select %p151, %s152, %s153
    %p157 = pneg %p151
    %p158 = scmp.eq.s32.totalorder %s13, 3
    %p159 = por %p157, %p158
    %p160 = scmp.ne.s32.totalorder %s152, %s155
    %p161 = scmp.eq.s32.totalorder %s13, 0
    %p162 = por %p160, %p161
    %p163 = scmp.ne.s32.totalorder %s152, %s155
    %p164 = scmp.eq.s32.totalorder %s18, 3
    %p165 = por %p163, %p164
    %p166 = scmp.ne.s32.totalorder %s155, %s156
    %p167 = scmp.eq.s32.totalorder %s18, 0
    %p168 = por %p166, %p167
    %p169 = scmp.ne.s32.totalorder %s155, %s156
    %p170 = scmp.eq.s32.totalorder %s19, 3
    %p171 = por %p169, %p170
    %p173 = scmp.ne.s32.totalorder %s156, %s172
    %p174 = scmp.eq.s32.totalorder %s19, 0
    %p175 = por %p173, %p174
    %s176 = ssub.s32 %s21, %s28
    %p177 = scmp.eq.s32.totalorder %s176, 0
    %s179 = sadd.s32 %s178, 1
    %s180 = scalar_select %p177, %s178, %s179
    %p183 = pneg %p177
    %p184 = scmp.eq.s32.totalorder %s13, 3
    %p185 = por %p183, %p184
    %p186 = scmp.ne.s32.totalorder %s178, %s181
    %p187 = scmp.eq.s32.totalorder %s13, 0
    %p188 = por %p186, %p187
    %p189 = scmp.ne.s32.totalorder %s178, %s181
    %p190 = scmp.eq.s32.totalorder %s18, 3
    %p191 = por %p189, %p190
    %p192 = scmp.ne.s32.totalorder %s181, %s182
    %p193 = scmp.eq.s32.totalorder %s18, 0
    %p194 = por %p192, %p193
    %p195 = scmp.ne.s32.totalorder %s181, %s182
    %p196 = scmp.eq.s32.totalorder %s19, 3
    %p197 = por %p195, %p196
    %p199 = scmp.ne.s32.totalorder %s182, %s198
    %p200 = scmp.eq.s32.totalorder %s19, 0
    %p201 = por %p199, %p200
    %s202 = ssub.s32 %s20, %s32
    %s203 = ssub.s32 %s21, %s28
    %s204 = sor.u32 %s202, %s203
    %p205 = scmp.eq.s32.totalorder %s204, 0
    %s207 = sadd.s32 %s206, 1
    %s208 = scalar_select %p205, %s206, %s207
    %p211 = pneg %p205
    %p212 = scmp.eq.s32.totalorder %s13, 3
    %p213 = por %p211, %p212
    %p214 = scmp.ne.s32.totalorder %s206, %s209
    %p215 = scmp.eq.s32.totalorder %s13, 0
    %p216 = por %p214, %p215
    %p217 = scmp.ne.s32.totalorder %s206, %s209
    %p218 = scmp.eq.s32.totalorder %s18, 3
    %p219 = por %p217, %p218
    %p220 = scmp.ne.s32.totalorder %s209, %s210
    %p221 = scmp.eq.s32.totalorder %s18, 0
    %p222 = por %p220, %p221
    %p223 = scmp.ne.s32.totalorder %s209, %s210
    %p224 = scmp.eq.s32.totalorder %s19, 3
    %p225 = por %p223, %p224
    %p227 = scmp.ne.s32.totalorder %s210, %s226
    %p228 = scmp.eq.s32.totalorder %s19, 0
    %p229 = por %p227, %p228
    %p230 = scmp.le.s32.totalorder 1, %s13
    %p231 = scmp.lt.s32.totalorder %s13, 5
    %p232 = pnand %p230, %p231
    %p233 = pneg %p232
    // Predicated region
    $region9: #{_lambda_.11} parent=5 // pred_check
      _
    $region10: #{_lambda_.11} parent=5 // pred_check_branch
      %235 = sbr.rel (%p232) target = $region12
    $region11: #{_lambda_.11} parent=5 // pred_region
      %s236 = ssub.s32 %s13, 1
      // Predicated region
      $region13: #{_lambda_.11} parent=11 // pred_check
        %p237 = pneg %p74
      $region14: #{_lambda_.11} parent=11 // pred_check_branch
        %239 = sbr.rel (%p237) target = $region16
      $region15: #{_lambda_.11} parent=11 // pred_region
        _
      $region16: #{_lambda_.11} parent=11 // pred_fallthru
        _
      // Predicated region
      $region17: #{_lambda_.11} parent=11 // pred_check
        %p240 = pneg %p95
      $region18: #{_lambda_.11} parent=11 // pred_check_branch
        %242 = sbr.rel (%p240) target = $region20
      $region19: #{_lambda_.11} parent=11 // pred_region
        _
      $region20: #{_lambda_.11} parent=11 // pred_fallthru
        _
      // Predicated region
      $region21: #{_lambda_.11} parent=11 // pred_check
        %p243 = pneg %p116
      $region22: #{_lambda_.11} parent=11 // pred_check_branch
        %245 = sbr.rel (%p243) target = $region24
      $region23: #{_lambda_.11} parent=11 // pred_region
        _
      $region24: #{_lambda_.11} parent=11 // pred_fallthru
        _
      // Predicated region
      $region25: #{_lambda_.11} parent=11 // pred_check
        %p246 = pneg %p168
      $region26: #{_lambda_.11} parent=11 // pred_check_branch
        %248 = sbr.rel (%p246) target = $region28
      $region27: #{_lambda_.11} parent=11 // pred_region
        %p249 = scmp.lt.s32.totalorder %s23, 0
        %s250 = scalar_select %p249, %s23, 0
        %s251 = smul.addr %s250, 8
        %s252 = scalar_lea.vmem %s5, %s251
      $region28: #{_lambda_.11} parent=11 // pred_fallthru
        _
      // Predicated region
      $region29: #{_lambda_.11} parent=11 // pred_check
        %p253 = pneg %p194
      $region30: #{_lambda_.11} parent=11 // pred_check_branch
        %255 = sbr.rel (%p253) target = $region32
      $region31: #{_lambda_.11} parent=11 // pred_region
        %p256 = scmp.lt.s32.totalorder %s23, 0
        %s257 = scalar_select %p256, %s23, 0
        %s258 = scalar_lea.vmem %s6, %s257
      $region32: #{_lambda_.11} parent=11 // pred_fallthru
        _
    $region12: #{_lambda_.11} parent=5 // pred_fallthru
      _
    %p259 = scmp.lt.s32.totalorder %s13, 4
    // Predicated region
    $region33: #{_lambda_.11} parent=5 // pred_check
      %p260 = pneg %p259
    $region34: #{_lambda_.11} parent=5 // pred_check_branch
      %262 = sbr.rel (%p260) target = $region36
    $region35: #{_lambda_.11} parent=5 // pred_region
      // Predicated region
      $region37: #{_lambda_.11} parent=35 // pred_check
        %p263 = pneg %p47
      $region38: #{_lambda_.11} parent=35 // pred_check_branch
        %265 = sbr.rel (%p263) target = $region40
      $region39: #{_lambda_.11} parent=35 // pred_region
        %p266 = scmp.lt.s32.totalorder %s20, 3
        %s267 = scalar_select %p266, %s20, 3
        %p268 = scmp.lt.s32.totalorder %s21, 0
        %s269 = scalar_select %p268, %s21, 0
        %s270 = sadd.s32 %s269, %s267
        %s271 = smul.addr %s270, 8
        %s272 = scalar_lea.vmem %s0, %s271
      $region40: #{_lambda_.11} parent=35 // pred_fallthru
        _
      // Predicated region
      $region41: #{_lambda_.11} parent=35 // pred_check
        %p273 = pneg %p136
      $region42: #{_lambda_.11} parent=35 // pred_check_branch
        %275 = sbr.rel (%p273) target = $region44
      $region43: #{_lambda_.11} parent=35 // pred_region
        %p276 = scmp.lt.s32.totalorder %s20, 3
        %s277 = scalar_select %p276, %s20, 3
        %s278 = smul.addr %s277, 4
        %s279 = scalar_lea.vmem %s4, %s278
      $region44: #{_lambda_.11} parent=35 // pred_fallthru
        _
    $region36: #{_lambda_.11} parent=5 // pred_fallthru
      _
    %p280 = scmp.le.s32.totalorder 1, %s13
    %p281 = scmp.lt.s32.totalorder %s13, 5
    %p282 = pnand %p280, %p281
    %p283 = pneg %p282
    // Predicated region
    $region45: #{_lambda_.11} parent=5 // pred_check
      _
    $region46: #{_lambda_.11} parent=5 // pred_check_branch
      %285 = sbr.rel (%p282) target = $region48
    $region47: #{_lambda_.11} parent=5 // pred_region
      %s286 = ssub.s32 %s13, 1
      %p287 = scmp.lt.s32.totalorder %s22, 3
      %s288 = scalar_select %p287, %s22, 3
      %p289 = scmp.lt.s32.totalorder %s23, 0
      %s290 = scalar_select %p289, %s23, 0
      %s291 = sadd.s32 %s290, %s288
      %s292 = smul.addr %s291, 8
      %s293 = scalar_lea.vmem %s0, %s292
      %p294 = pneg %p53
      %p295 = pneg %p50
      %p296 = pneg %p74
      %p297 = pneg %p71
      %p298 = pneg %p95
      %p299 = pneg %p92
      %p300 = pneg %p116
      %p301 = pneg %p113
      %p302 = scmp.lt.s32.totalorder %s22, 3
      %s303 = scalar_select %p302, %s22, 3
      %s304 = smul.addr %s303, 4
      %s305 = scalar_lea.vmem %s4, %s304
      %p306 = pneg %p142
      %p307 = pneg %p139
      %p308 = scmp.lt.s32.totalorder %s23, 0
      %s309 = scalar_select %p308, %s23, 0
      %s310 = smul.addr %s309, 8
      %s311 = scalar_lea.vmem %s5, %s310
      %p312 = pneg %p168
      %p313 = pneg %p165
      %p314 = scmp.lt.s32.totalorder %s23, 0
      %s315 = scalar_select %p314, %s23, 0
      %s316 = scalar_lea.vmem %s6, %s315
      %p317 = pneg %p194
      %p318 = pneg %p191
      %p319 = pneg %p222
      %p320 = pneg %p219
      %p321 = scmp.lt.s32.totalorder %s22, 3
      %s322 = scalar_select %p321, %s22, 3
      %p323 = scmp.lt.s32.totalorder %s23, 0
      %s324 = scalar_select %p323, %s23, 0
      %s325 = sadd.s32 %s324, %s322
      %s326 = smul.addr %s325, 4
      %s327 = scalar_lea.vmem %s7, %s326
      %p328 = scmp.lt.s32.totalorder %s22, 3
      %s329 = scalar_select %p328, %s22, 3
      %p330 = scmp.lt.s32.totalorder %s23, 0
      %s331 = scalar_select %p330, %s23, 0
      %s332 = sadd.s32 %s331, %s329
      %s333 = smul.addr %s332, 8
      %s334 = scalar_lea.vmem %s0, %s333
      %p335 = scmp.lt.s32.totalorder %s22, 3
      %s336 = scalar_select %p335, %s22, 3
      %s337 = smul.addr %s336, 4
      %s338 = scalar_lea.vmem %s4, %s337
      %p339 = scmp.lt.s32.totalorder %s23, 0
      %s340 = scalar_select %p339, %s23, 0
      %s341 = smul.addr %s340, 8
      %s342 = scalar_lea.vmem %s5, %s341
      %p343 = scmp.lt.s32.totalorder %s23, 0
      %s344 = scalar_select %p343, %s23, 0
      %s345 = scalar_lea.vmem %s6, %s344
      %p346 = scmp.lt.s32.totalorder %s22, 3
      %s347 = scalar_select %p346, %s22, 3
      %p348 = scmp.lt.s32.totalorder %s23, 0
      %s349 = scalar_select %p348, %s23, 0
      %s350 = sadd.s32 %s349, %s347
      %s351 = smul.addr %s350, 4
      %s352 = scalar_lea.vmem %s7, %s351
      %v353 = vld [vmem:[%s334] sm:$0xff]
      %v354 = vld [vmem:[%s1] sm:$0xff]
      %356 = vset.pattern.permute.xlu0 0
      %357 = vperm.xlu0 %356, %v354
      %v358 = vpop.permute.xlu0 %357
      %v360 = vmul.f32 %v353, %v358
      %v361 = vld [vmem:[%s2] sm:$0xff]
      %363 = vset.pattern.permute.xlu0 0
      %364 = vperm.xlu0 %363, %v361
      %v365 = vpop.permute.xlu0 %364
      %v367 = vadd.f32 %v360, %v365
      %v368 = vxor.u32 %v367, 2147483648
      %v369 = vmul.f32 %v368, 1.442695
      %v370 = vpow.pop %v369
      %v371 = vadd.f32 %v370, 1.0
      %v372 = vrcp.pop %v371
      %v373 = vmul.f32 1.0, %v372
      %v374 = vmul.f32 %v367, %v373
      %v375 = vld [vmem:[%s3] sm:$0xf]
      %v376 = vlaneseq
      %v377 = vshrl.u32 %v376, 7
      %v378 = vsub.s32 0, %v377
      %v379 = vrot.slane %v374, %v378
      %381 = vset.pattern.permute.xlu0 0
      %382 = vperm.xlu0 %381, %v375
      %v383 = vpop.permute.xlu0 %382
      %v385 = vmul.f32 %v379, %v383
      %v386 = vadd.f32 %v385, 0.0
      %s387 = scalar_lea.vmem %s3, 4
      %v388 = vld [vmem:[%s387] sm:$0xf]
      %v389 = vlaneseq
      %v390 = vshrl.u32 %v389, 7
      %v391 = vsub.s32 1, %v390
      %v392 = vrot.slane %v374, %v391
      %394 = vset.pattern.permute.xlu0 0
      %395 = vperm.xlu0 %394, %v388
      %v396 = vpop.permute.xlu0 %395
      %v398 = vmul.f32 %v392, %v396
      %v399 = vadd.f32 %v386, %v398
      %s400 = scalar_lea.vmem %s3, 8
      %v401 = vld [vmem:[%s400] sm:$0xf]
      %v402 = vlaneseq
      %v403 = vshrl.u32 %v402, 7
      %v404 = vsub.s32 2, %v403
      %v405 = vrot.slane %v374, %v404
      %407 = vset.pattern.permute.xlu0 0
      %408 = vperm.xlu0 %407, %v401
      %v409 = vpop.permute.xlu0 %408
      %v411 = vmul.f32 %v405, %v409
      %v412 = vadd.f32 %v399, %v411
      %s413 = scalar_lea.vmem %s3, 12
      %v414 = vld [vmem:[%s413] sm:$0xf]
      %v415 = vlaneseq
      %v416 = vshrl.u32 %v415, 7
      %v417 = vsub.s32 3, %v416
      %v418 = vrot.slane %v374, %v417
      %420 = vset.pattern.permute.xlu0 0
      %421 = vperm.xlu0 %420, %v414
      %v422 = vpop.permute.xlu0 %421
      %v424 = vmul.f32 %v418, %v422
      %v425 = vadd.f32 %v412, %v424
      %s426 = scalar_lea.vmem %s3, 16
      %v427 = vld [vmem:[%s426] sm:$0xf]
      %v428 = vlaneseq
      %v429 = vshrl.u32 %v428, 7
      %v430 = vsub.s32 4, %v429
      %v431 = vrot.slane %v374, %v430
      %433 = vset.pattern.permute.xlu0 0
      %434 = vperm.xlu0 %433, %v427
      %v435 = vpop.permute.xlu0 %434
      %v437 = vmul.f32 %v431, %v435
      %v438 = vadd.f32 %v425, %v437
      %s439 = scalar_lea.vmem %s3, 20
      %v440 = vld [vmem:[%s439] sm:$0xf]
      %v441 = vlaneseq
      %v442 = vshrl.u32 %v441, 7
      %v443 = vsub.s32 5, %v442
      %v444 = vrot.slane %v374, %v443
      %446 = vset.pattern.permute.xlu0 0
      %447 = vperm.xlu0 %446, %v440
      %v448 = vpop.permute.xlu0 %447
      %v450 = vmul.f32 %v444, %v448
      %v451 = vadd.f32 %v438, %v450
      %s452 = scalar_lea.vmem %s3, 24
      %v453 = vld [vmem:[%s452] sm:$0xf]
      %v454 = vlaneseq
      %v455 = vshrl.u32 %v454, 7
      %v456 = vsub.s32 6, %v455
      %v457 = vrot.slane %v374, %v456
      %459 = vset.pattern.permute.xlu0 0
      %460 = vperm.xlu0 %459, %v453
      %v461 = vpop.permute.xlu0 %460
      %v463 = vmul.f32 %v457, %v461
      %v464 = vadd.f32 %v451, %v463
      %s465 = scalar_lea.vmem %s3, 28
      %v466 = vld [vmem:[%s465] sm:$0xf]
      %v467 = vlaneseq
      %v468 = vshrl.u32 %v467, 7
      %v469 = vsub.s32 7, %v468
      %v470 = vrot.slane %v374, %v469
      %472 = vset.pattern.permute.xlu0 0
      %473 = vperm.xlu0 %472, %v466
      %v474 = vpop.permute.xlu0 %473
      %v476 = vmul.f32 %v470, %v474
      %v477 = vadd.f32 %v464, %v476
      %v478 = vld [vmem:[%s338] sm:$0xf]
      %v479 = vld [vmem:[%s342] sm:$0xff]
      %vm480 = vcmask 64512
      %v482 = vsel %vm480, %v478, 0
      %484 = vmatprep.subr.mxu0 0.0
      %485 = vmatpush1.msra.mxu0 0.0
      %486 = vmatprep.subr.mxu0 0.0
      %487 = vmatpush1.msra.mxu0 0.0
      %488 = vmatprep.subr.mxu0 0.0
      %489 = vmatpush1.msra.mxu0 0.0
      %490 = vmatprep.subr.mxu0 0.0
      %491 = vmatpush1.msra.mxu0 0.0
      %492 = vmatprep.subr.mxu0 0.0
      %493 = vmatpush1.msra.mxu0 0.0
      %494 = vmatprep.subr.mxu0 0.0
      %495 = vmatpush1.msra.mxu0 0.0
      %496 = vmatprep.subr.mxu0 0.0
      %497 = vmatpush1.msra.mxu0 0.0
      %498 = vmatprep.subr.mxu0 0.0
      %499 = vmatpush1.msra.mxu0 0.0
      %500 = vmatprep.subr.mxu0 0.0
      %501 = vmatpush1.msra.mxu0 0.0
      %502 = vmatprep.subr.mxu0 0.0
      %503 = vmatpush1.msra.mxu0 0.0
      %504 = vmatprep.subr.mxu0 0.0
      %505 = vmatpush1.msra.mxu0 0.0
      %506 = vmatprep.subr.mxu0 0.0
      %507 = vmatpush1.msra.mxu0 0.0
      %508 = vmatprep.subr.mxu0 0.0
      %509 = vmatpush1.msra.mxu0 0.0
      %510 = vmatprep.subr.mxu0 0.0
      %511 = vmatpush1.msra.mxu0 0.0
      %512 = vmatprep.subr.mxu0 0.0
      %513 = vmatpush1.msra.mxu0 0.0
      %514 = vmatprep.subr.mxu0 0.0
      %515 = vmatpush1.msra.mxu0 %v479
      %516 = vmatprep.subr.mxu0 0.0
      %517 = vmatpush2.msra.mxu0 0.0
      %518 = vmatprep.subr.mxu0 0.0
      %519 = vmatpush2.msra.mxu0 0.0
      %520 = vmatprep.subr.mxu0 0.0
      %521 = vmatpush2.msra.mxu0 0.0
      %522 = vmatprep.subr.mxu0 0.0
      %523 = vmatpush2.msra.mxu0 0.0
      %524 = vmatprep.subr.mxu0 0.0
      %525 = vmatpush2.msra.mxu0 0.0
      %526 = vmatprep.subr.mxu0 0.0
      %527 = vmatpush2.msra.mxu0 0.0
      %528 = vmatprep.subr.mxu0 0.0
      %529 = vmatpush2.msra.mxu0 0.0
      %530 = vmatprep.subr.mxu0 0.0
      %531 = vmatpush2.msra.mxu0 0.0
      %532 = vmatprep.subr.mxu0 0.0
      %533 = vmatpush2.msra.mxu0 0.0
      %534 = vmatprep.subr.mxu0 0.0
      %535 = vmatpush2.msra.mxu0 0.0
      %536 = vmatprep.subr.mxu0 0.0
      %537 = vmatpush2.msra.mxu0 0.0
      %538 = vmatprep.subr.mxu0 0.0
      %539 = vmatpush2.msra.mxu0 0.0
      %540 = vmatprep.subr.mxu0 0.0
      %541 = vmatpush2.msra.mxu0 0.0
      %542 = vmatprep.subr.mxu0 0.0
      %543 = vmatpush2.msra.mxu0 0.0
      %544 = vmatprep.subr.mxu0 0.0
      %545 = vmatpush2.msra.mxu0 0.0
      %546 = vmatprep.subr.mxu0 0.0
      %547 = vmatpush2.msra.mxu0 0.0
      %548 = vmatprep.mubr.f32.mxu0 0.0
      %549 = vmatmul.mubr.f32.gmra.mxu0 %v482
      %v550 = vpop.f32.mrf.mxu0
      %v551 = vadd.f32 0.0, %v550
      %v552 = vpop.f32.mrf.mxu0
      %553 = vdwg.mxu0
      %v554 = vadd.f32 %v477, %v551
      %v555 = vld [vmem:[%s345] sm:$0x1]
      %v557 = vlaneseq
      %v558 = vshrl.u32 %v557, 7
      %v559 = vsub.s32 0, %v558
      %v560 = vrot.slane %v555, %v559
      %v562 = vadd.f32 %v554, %v560
      %vm563 = vcmask 11264
      %564 = vst.msk [vmem:[%s352] sm:$0xf] %vm563, %v562
      %p565 = scmp.lt.s32.totalorder %s22, 3
      %s566 = scalar_select %p565, %s22, 3
      %p567 = scmp.lt.s32.totalorder %s23, 0
      %s568 = scalar_select %p567, %s23, 0
      %s569 = sadd.s32 %s568, %s566
      %s570 = smul.addr %s569, 4
      %s571 = scalar_lea.vmem %s7, %s570
      // Predicated region
      $region49: #{_lambda_.11} parent=47 // pred_check
        %p572 = pneg %p219
      $region50: #{_lambda_.11} parent=47 // pred_check_branch
        %574 = sbr.rel (%p572) target = $region52
      $region51: #{_lambda_.11} parent=47 // pred_region
        _
      $region52: #{_lambda_.11} parent=47 // pred_fallthru
        _
    $region48: #{_lambda_.11} parent=5 // pred_fallthru
      _
    %p575 = scmp.le.s32.totalorder 2, %s13
    // Predicated region
    $region53: #{_lambda_.11} parent=5 // pred_check
      %p576 = pneg %p575
    $region54: #{_lambda_.11} parent=5 // pred_check_branch
      %578 = sbr.rel (%p576) target = $region56
    $region55: #{_lambda_.11} parent=5 // pred_region
      %s579 = ssub.s32 %s13, 2
      // Predicated region
      $region57: #{_lambda_.11} parent=55 // pred_check
        %p580 = pneg %p225
      $region58: #{_lambda_.11} parent=55 // pred_check_branch
        %582 = sbr.rel (%p580) target = $region60
      $region59: #{_lambda_.11} parent=55 // pred_region
        %p583 = scmp.lt.s32.totalorder %s24, 3
        %s584 = scalar_select %p583, %s24, 3
        %p585 = scmp.lt.s32.totalorder %s25, 0
        %s586 = scalar_select %p585, %s25, 0
        %s587 = sadd.s32 %s586, %s584
        %s588 = smul.addr %s587, 4
        %s589 = scalar_lea.vmem %s7, %s588
      $region60: #{_lambda_.11} parent=55 // pred_fallthru
        _
    $region56: #{_lambda_.11} parent=5 // pred_fallthru
      _
  $region6: #{_lambda_.11} parent=0 // loop_footer
    %s17 = sadd.s32 1, %s13
  $region7: #{_lambda_.11} parent=0 // loop_footer_branch
    %12 = sbr.rel target = $region3
  $region8: #{_lambda_.11} parent=0 // loop_exit
    _

// kernel: _lambda_.13
$region0: #{_lambda_.13}
  #allocation0 [shape = 'u32[]', space=smem, size = 0x4, offset = 0x4, fixed_abs, tag = 'smem constant byte address 0x4 - core index']
  #allocation1 [shape = 'u32[144,128]{1,0:T(1,128)}', space=vmem, size = 0x12000, scoped, tag = 'internal scratch']
  %s0 = inlined_call_operand.smem [shape: u32[32], index: -1, kind: input, shape index: {}]
  %s1 = sld [smem:[%s0]]
  %s2 = scalar_lea.smem %s0, 1
  %s3 = sld [smem:[%s2]]
  %s4 = scalar_lea.smem %s0, 2
  %s5 = sld [smem:[%s4]]
  %s6 = scalar_lea.smem %s0, 3
  %s7 = sld [smem:[%s6]]
  %s8 = scalar_lea.smem %s0, 4
  %s9 = sld [smem:[%s8]]
  %s10 = scalar_lea.smem %s0, 5
  %s11 = sld [smem:[%s10]]
  %s12 = scalar_lea.smem %s0, 6
  %s13 = sld [smem:[%s12]]
  %s14 = scalar_lea.smem %s0, 7
  %s15 = sld [smem:[%s14]]
  %s16 = scalar_lea.smem %s0, 8
  %s17 = sld [smem:[%s16]]
  %s18 = scalar_lea.smem %s0, 9
  %s19 = sld [smem:[%s18]]
  %s20 = scalar_lea.smem %s0, 10
  %s21 = sld [smem:[%s20]]
  %s22 = scalar_lea.smem %s0, 11
  %s23 = sld [smem:[%s22]]
  %s24 = scalar_lea.smem %s0, 12
  %s25 = sld [smem:[%s24]]
  %s26 = scalar_lea.smem %s0, 13
  %s27 = sld [smem:[%s26]]
  %s28 = scalar_lea.smem %s0, 14
  %s29 = sld [smem:[%s28]]
  %s30 = scalar_lea.smem %s0, 15
  %s31 = sld [smem:[%s30]]
  %s32 = scalar_lea.smem %s0, 16
  %s33 = sld [smem:[%s32]]
  %s34 = scalar_lea.smem %s0, 17
  %s35 = sld [smem:[%s34]]
  %s36 = scalar_lea.smem %s0, 18
  %s37 = sld [smem:[%s36]]
  %s38 = scalar_lea.smem %s0, 19
  %s39 = sld [smem:[%s38]]
  %s40 = scalar_lea.smem %s0, 20
  %s41 = sld [smem:[%s40]]
  %s42 = scalar_lea.smem %s0, 21
  %s43 = sld [smem:[%s42]]
  %s44 = scalar_lea.smem %s0, 22
  %s45 = sld [smem:[%s44]]
  %s46 = scalar_lea.smem %s0, 23
  %s47 = sld [smem:[%s46]]
  %s48 = scalar_lea.smem %s0, 24
  %s49 = sld [smem:[%s48]]
  %s50 = scalar_lea.smem %s0, 25
  %s51 = sld [smem:[%s50]]
  %s52 = scalar_lea.smem %s0, 26
  %s53 = sld [smem:[%s52]]
  %s54 = scalar_lea.smem %s0, 27
  %s55 = sld [smem:[%s54]]
  %s56 = scalar_lea.smem %s0, 28
  %s57 = sld [smem:[%s56]]
  %s58 = scalar_lea.smem %s0, 29
  %s59 = sld [smem:[%s58]]
  %s60 = scalar_lea.smem %s0, 30
  %s61 = sld [smem:[%s60]]
  %s62 = scalar_lea.smem %s0, 31
  %s63 = sld [smem:[%s62]]
  %s64 = sld [smem:[#allocation0]]
  $region134: #{_lambda_.13} parent=0
    _
  %s66 = ssub.s32 1, %s64
  %s67 = scalar_select 0, %s66, %s64
  $region1: #{_lambda_.13} parent=0
    #allocation2 [shape = 'u8[2048]{0}', space=vmem, size = 0x800, scoped, tag = 'output window, operand 0, single buffered']
    #allocation3 [shape = 's32[1]{0}', space=sflag, size = 0x4, scoped, tag = 'scoped memory for _lambda_.13']
    %68 = vsyncpa [#allocation3], 0
    // Predicated region
    $region2: #{_lambda_.13} parent=1 // pred_check
      _
    $region3: #{_lambda_.13} parent=1 // pred_check_branch
      %70 = sbr.rel (0) target = $region5
    $region4: #{_lambda_.13} parent=1 // pred_region
      _
    $region5: #{_lambda_.13} parent=1 // pred_fallthru
      _
    // Predicated region
    $region6: #{_lambda_.13} parent=1 // pred_check
      _
    $region7: #{_lambda_.13} parent=1 // pred_check_branch
      %72 = sbr.rel (0) target = $region9
    $region8: #{_lambda_.13} parent=1 // pred_region
      _
    $region9: #{_lambda_.13} parent=1 // pred_fallthru
      _
    // Predicated region
    $region10: #{_lambda_.13} parent=1 // pred_check
      _
    $region11: #{_lambda_.13} parent=1 // pred_check_branch
      %74 = sbr.rel (0) target = $region13
    $region12: #{_lambda_.13} parent=1 // pred_region
      _
    $region13: #{_lambda_.13} parent=1 // pred_fallthru
      _
    // Predicated region
    $region14: #{_lambda_.13} parent=1 // pred_check
      _
    $region15: #{_lambda_.13} parent=1 // pred_check_branch
      %76 = sbr.rel (0) target = $region17
    $region16: #{_lambda_.13} parent=1 // pred_region
      _
    $region17: #{_lambda_.13} parent=1 // pred_fallthru
      _
    // Predicated region
    $region18: #{_lambda_.13} parent=1 // pred_check
      _
    $region19: #{_lambda_.13} parent=1 // pred_check_branch
      %78 = sbr.rel (0) target = $region21
    $region20: #{_lambda_.13} parent=1 // pred_region
      _
    $region21: #{_lambda_.13} parent=1 // pred_fallthru
      _
    // Predicated region
    $region22: #{_lambda_.13} parent=1 // pred_check
      _
    $region23: #{_lambda_.13} parent=1 // pred_check_branch
      %80 = sbr.rel (0) target = $region25
    $region24: #{_lambda_.13} parent=1 // pred_region
      _
    $region25: #{_lambda_.13} parent=1 // pred_fallthru
      _
    // Predicated region
    $region26: #{_lambda_.13} parent=1 // pred_check
      _
    $region27: #{_lambda_.13} parent=1 // pred_check_branch
      %82 = sbr.rel (0) target = $region29
    $region28: #{_lambda_.13} parent=1 // pred_region
      _
    $region29: #{_lambda_.13} parent=1 // pred_fallthru
      _
    // Predicated region
    $region30: #{_lambda_.13} parent=1 // pred_check
      _
    $region31: #{_lambda_.13} parent=1 // pred_check_branch
      %84 = sbr.rel (0) target = $region33
    $region32: #{_lambda_.13} parent=1 // pred_region
      _
    $region33: #{_lambda_.13} parent=1 // pred_fallthru
      _
    // Predicated region
    $region34: #{_lambda_.13} parent=1 // pred_check
      _
    $region35: #{_lambda_.13} parent=1 // pred_check_branch
      %86 = sbr.rel (0) target = $region37
    $region36: #{_lambda_.13} parent=1 // pred_region
      _
    $region37: #{_lambda_.13} parent=1 // pred_fallthru
      _
    // Predicated region
    $region38: #{_lambda_.13} parent=1 // pred_check
      _
    $region39: #{_lambda_.13} parent=1 // pred_check_branch
      %88 = sbr.rel (0) target = $region41
    $region40: #{_lambda_.13} parent=1 // pred_region
      _
    $region41: #{_lambda_.13} parent=1 // pred_fallthru
      _
    // Predicated region
    $region42: #{_lambda_.13} parent=1 // pred_check
      _
    $region43: #{_lambda_.13} parent=1 // pred_check_branch
      %90 = sbr.rel (0) target = $region45
    $region44: #{_lambda_.13} parent=1 // pred_region
      _
    $region45: #{_lambda_.13} parent=1 // pred_fallthru
      _
    // Predicated region
    $region46: #{_lambda_.13} parent=1 // pred_check
      _
    $region47: #{_lambda_.13} parent=1 // pred_check_branch
      %92 = sbr.rel (0) target = $region49
    $region48: #{_lambda_.13} parent=1 // pred_region
      _
    $region49: #{_lambda_.13} parent=1 // pred_fallthru
      _
    // Predicated region
    $region50: #{_lambda_.13} parent=1 // pred_check
      _
    $region51: #{_lambda_.13} parent=1 // pred_check_branch
      %94 = sbr.rel (0) target = $region53
    $region52: #{_lambda_.13} parent=1 // pred_region
      _
    $region53: #{_lambda_.13} parent=1 // pred_fallthru
      _
    // Predicated region
    $region54: #{_lambda_.13} parent=1 // pred_check
      _
    $region55: #{_lambda_.13} parent=1 // pred_check_branch
      %96 = sbr.rel (0) target = $region57
    $region56: #{_lambda_.13} parent=1 // pred_region
      _
    $region57: #{_lambda_.13} parent=1 // pred_fallthru
      _
    // Predicated region
    $region58: #{_lambda_.13} parent=1 // pred_check
      _
    $region59: #{_lambda_.13} parent=1 // pred_check_branch
      %98 = sbr.rel (0) target = $region61
    $region60: #{_lambda_.13} parent=1 // pred_region
      _
    $region61: #{_lambda_.13} parent=1 // pred_fallthru
      _
    // Predicated region
    $region62: #{_lambda_.13} parent=1 // pred_check
      _
    $region63: #{_lambda_.13} parent=1 // pred_check_branch
      %100 = sbr.rel (0) target = $region65
    $region64: #{_lambda_.13} parent=1 // pred_region
      _
    $region65: #{_lambda_.13} parent=1 // pred_fallthru
      _
    // Predicated region
    $region66: #{_lambda_.13} parent=1 // pred_check
      _
    $region67: #{_lambda_.13} parent=1 // pred_check_branch
      %102 = sbr.rel (0) target = $region69
    $region68: #{_lambda_.13} parent=1 // pred_region
      _
    $region69: #{_lambda_.13} parent=1 // pred_fallthru
      _
    // Predicated region
    $region70: #{_lambda_.13} parent=1 // pred_check
      _
    $region71: #{_lambda_.13} parent=1 // pred_check_branch
      %104 = sbr.rel (0) target = $region73
    $region72: #{_lambda_.13} parent=1 // pred_region
      _
    $region73: #{_lambda_.13} parent=1 // pred_fallthru
      _
    // Predicated region
    $region74: #{_lambda_.13} parent=1 // pred_check
      _
    $region75: #{_lambda_.13} parent=1 // pred_check_branch
      %106 = sbr.rel (0) target = $region77
    $region76: #{_lambda_.13} parent=1 // pred_region
      _
    $region77: #{_lambda_.13} parent=1 // pred_fallthru
      _
    // Predicated region
    $region78: #{_lambda_.13} parent=1 // pred_check
      _
    $region79: #{_lambda_.13} parent=1 // pred_check_branch
      %108 = sbr.rel (0) target = $region81
    $region80: #{_lambda_.13} parent=1 // pred_region
      _
    $region81: #{_lambda_.13} parent=1 // pred_fallthru
      _
    // Predicated region
    $region82: #{_lambda_.13} parent=1 // pred_check
      _
    $region83: #{_lambda_.13} parent=1 // pred_check_branch
      %110 = sbr.rel (0) target = $region85
    $region84: #{_lambda_.13} parent=1 // pred_region
      _
    $region85: #{_lambda_.13} parent=1 // pred_fallthru
      _
    // Predicated region
    $region86: #{_lambda_.13} parent=1 // pred_check
      _
    $region87: #{_lambda_.13} parent=1 // pred_check_branch
      %112 = sbr.rel (0) target = $region89
    $region88: #{_lambda_.13} parent=1 // pred_region
      _
    $region89: #{_lambda_.13} parent=1 // pred_fallthru
      _
    // Predicated region
    $region90: #{_lambda_.13} parent=1 // pred_check
      _
    $region91: #{_lambda_.13} parent=1 // pred_check_branch
      %114 = sbr.rel (0) target = $region93
    $region92: #{_lambda_.13} parent=1 // pred_region
      _
    $region93: #{_lambda_.13} parent=1 // pred_fallthru
      _
    // Predicated region
    $region94: #{_lambda_.13} parent=1 // pred_check
      _
    $region95: #{_lambda_.13} parent=1 // pred_check_branch
      %116 = sbr.rel (0) target = $region97
    $region96: #{_lambda_.13} parent=1 // pred_region
      _
    $region97: #{_lambda_.13} parent=1 // pred_fallthru
      _
    // Predicated region
    $region98: #{_lambda_.13} parent=1 // pred_check
      _
    $region99: #{_lambda_.13} parent=1 // pred_check_branch
      %118 = sbr.rel (0) target = $region101
    $region100: #{_lambda_.13} parent=1 // pred_region
      _
    $region101: #{_lambda_.13} parent=1 // pred_fallthru
      _
    // Predicated region
    $region102: #{_lambda_.13} parent=1 // pred_check
      _
    $region103: #{_lambda_.13} parent=1 // pred_check_branch
      %120 = sbr.rel (0) target = $region105
    $region104: #{_lambda_.13} parent=1 // pred_region
      _
    $region105: #{_lambda_.13} parent=1 // pred_fallthru
      _
    // Predicated region
    $region106: #{_lambda_.13} parent=1 // pred_check
      _
    $region107: #{_lambda_.13} parent=1 // pred_check_branch
      %122 = sbr.rel (0) target = $region109
    $region108: #{_lambda_.13} parent=1 // pred_region
      _
    $region109: #{_lambda_.13} parent=1 // pred_fallthru
      _
    // Predicated region
    $region110: #{_lambda_.13} parent=1 // pred_check
      _
    $region111: #{_lambda_.13} parent=1 // pred_check_branch
      %124 = sbr.rel (0) target = $region113
    $region112: #{_lambda_.13} parent=1 // pred_region
      _
    $region113: #{_lambda_.13} parent=1 // pred_fallthru
      _
    // Predicated region
    $region114: #{_lambda_.13} parent=1 // pred_check
      _
    $region115: #{_lambda_.13} parent=1 // pred_check_branch
      %126 = sbr.rel (0) target = $region117
    $region116: #{_lambda_.13} parent=1 // pred_region
      _
    $region117: #{_lambda_.13} parent=1 // pred_fallthru
      _
    // Predicated region
    $region118: #{_lambda_.13} parent=1 // pred_check
      _
    $region119: #{_lambda_.13} parent=1 // pred_check_branch
      %128 = sbr.rel (0) target = $region121
    $region120: #{_lambda_.13} parent=1 // pred_region
      _
    $region121: #{_lambda_.13} parent=1 // pred_fallthru
      _
    // Predicated region
    $region122: #{_lambda_.13} parent=1 // pred_check
      _
    $region123: #{_lambda_.13} parent=1 // pred_check_branch
      %130 = sbr.rel (0) target = $region125
    $region124: #{_lambda_.13} parent=1 // pred_region
      _
    $region125: #{_lambda_.13} parent=1 // pred_fallthru
      _
    %v132 = vld [vmem:[%s1] sm:$0xf]
    %v133 = vld [vmem:[%s3] sm:$0x1]
    %v134 = vld [vmem:[%s5] sm:$0x1]
    %v135 = vld [vmem:[%s7] sm:$0xff]
    %v136 = vld [vmem:[%s7 + $0x8] sm:$0xff]
    %v137 = vld [vmem:[%s9] sm:$0x3]
    %v138 = vld [vmem:[%s11] sm:$0x3]
    %v139 = vld [vmem:[%s13] sm:$0x3]
    %v140 = vld [vmem:[%s15] sm:$0xff]
    %v141 = vld [vmem:[%s15 + $0x8] sm:$0xff]
    %v142 = vld [vmem:[%s15 + $0x10] sm:$0xff]
    %v143 = vld [vmem:[%s15 + $0x18] sm:$0xff]
    %v144 = vld [vmem:[%s15 + $0x20] sm:$0xff]
    %v145 = vld [vmem:[%s15 + $0x28] sm:$0xff]
    %v146 = vld [vmem:[%s15 + $0x30] sm:$0xff]
    %v147 = vld [vmem:[%s15 + $0x38] sm:$0xff]
    %v148 = vld [vmem:[%s15 + $0x40] sm:$0xff]
    %v149 = vld [vmem:[%s15 + $0x48] sm:$0xff]
    %v150 = vld [vmem:[%s15 + $0x50] sm:$0xff]
    %v151 = vld [vmem:[%s15 + $0x58] sm:$0xff]
    %v152 = vld [vmem:[%s15 + $0x60] sm:$0xff]
    %v153 = vld [vmem:[%s15 + $0x68] sm:$0xff]
    %v154 = vld [vmem:[%s15 + $0x70] sm:$0xff]
    %v155 = vld [vmem:[%s15 + $0x78] sm:$0xff]
    %v156 = vld [vmem:[%s15 + $0x80] sm:$0xff]
    %v157 = vld [vmem:[%s15 + $0x88] sm:$0xff]
    %v158 = vld [vmem:[%s15 + $0x90] sm:$0xff]
    %v159 = vld [vmem:[%s15 + $0x98] sm:$0xff]
    %v160 = vld [vmem:[%s15 + $0xa0] sm:$0xff]
    %v161 = vld [vmem:[%s15 + $0xa8] sm:$0xff]
    %v162 = vld [vmem:[%s15 + $0xb0] sm:$0xff]
    %v163 = vld [vmem:[%s15 + $0xb8] sm:$0xff]
    %v164 = vld [vmem:[%s15 + $0xc0] sm:$0xff]
    %v165 = vld [vmem:[%s15 + $0xc8] sm:$0xff]
    %v166 = vld [vmem:[%s15 + $0xd0] sm:$0xff]
    %v167 = vld [vmem:[%s15 + $0xd8] sm:$0xff]
    %v168 = vld [vmem:[%s15 + $0xe0] sm:$0xff]
    %v169 = vld [vmem:[%s15 + $0xe8] sm:$0xff]
    %v170 = vld [vmem:[%s15 + $0xf0] sm:$0xff]
    %v171 = vld [vmem:[%s15 + $0xf8] sm:$0xff]
    %v172 = vld [vmem:[%s17] sm:$0x3]
    %v173 = vld [vmem:[%s19] sm:$0xff]
    %v174 = vld [vmem:[%s19 + $0x8] sm:$0xff]
    %v175 = vld [vmem:[%s21] sm:$0x3]
    %v177 = vlaneseq
    %v178 = vshrl.u32 %v177, 7
    %v179 = vsub.s32 0, %v178
    %v180 = vrot.slane %v133, %v179
    %v182 = vmul.f32 %v132, %v180
    %v184 = vlaneseq
    %v185 = vshrl.u32 %v184, 7
    %v186 = vsub.s32 0, %v185
    %v187 = vrot.slane %v134, %v186
    %v189 = vadd.f32 %v182, %v187
    %v190 = vxor.u32 %v189, 2147483648
    %v191 = vmul.f32 %v190, 1.442695
    %v192 = vpow.pop %v191
    %v193 = vadd.f32 %v192, 1.0
    %v194 = vrcp.pop %v193
    %v195 = vmul.f32 1.0, %v194
    %v196 = vmul.f32 %v189, %v195
    %v197 = vpack.c.bf16 %v196, %v196
    %v199 = vlaneseq
    %v200 = vshrl.u32 %v199, 7
    %v201 = vsub.s32 0, %v200
    %v202 = vrot.slane %v137, %v201
    %v203 = vlaneseq
    %v204 = vshrl.u32 %v203, 7
    %v205 = vsub.s32 1, %v204
    %v206 = vrot.slane %v137, %v205
    %v211 = vunpack.c.l.b16 %v135
    %v212 = vunpack.c.h.b16 %v135
    %v213 = vunpack.c.l.b16 %v136
    %v214 = vunpack.c.h.b16 %v136
    %v215 = vpack.c.b16 %v213, %v211
    %v216 = vpack.c.b16 %v214, %v212
    %vm219 = vcmask 130048
    %v221 = vsel %vm219, %v197, 0
    %223 = vmatprep.subr.bf16.mxu0 0
    %224 = vmatpush1.bf16.msra.mxu0 0
    %225 = vmatprep.subr.bf16.mxu0 0
    %226 = vmatpush1.bf16.msra.mxu0 0
    %227 = vmatprep.subr.bf16.mxu0 0
    %228 = vmatpush1.bf16.msra.mxu0 0
    %229 = vmatprep.subr.bf16.mxu0 0
    %230 = vmatpush1.bf16.msra.mxu0 0
    %231 = vmatprep.subr.bf16.mxu0 0
    %232 = vmatpush1.bf16.msra.mxu0 0
    %233 = vmatprep.subr.bf16.mxu0 0
    %234 = vmatpush1.bf16.msra.mxu0 0
    %235 = vmatprep.subr.bf16.mxu0 0
    %236 = vmatpush1.bf16.msra.mxu0 0
    %237 = vmatprep.subr.bf16.mxu0 %v216
    %238 = vmatpush1.bf16.msra.mxu0 %v215
    %239 = vmatprep.subr.bf16.mxu0 0
    %240 = vmatpush2.bf16.msra.mxu0 0
    %241 = vmatprep.subr.bf16.mxu0 0
    %242 = vmatpush2.bf16.msra.mxu0 0
    %243 = vmatprep.subr.bf16.mxu0 0
    %244 = vmatpush2.bf16.msra.mxu0 0
    %245 = vmatprep.subr.bf16.mxu0 0
    %246 = vmatpush2.bf16.msra.mxu0 0
    %247 = vmatprep.subr.bf16.mxu0 0
    %248 = vmatpush2.bf16.msra.mxu0 0
    %249 = vmatprep.subr.bf16.mxu0 0
    %250 = vmatpush2.bf16.msra.mxu0 0
    %251 = vmatprep.subr.bf16.mxu0 0
    %252 = vmatpush2.bf16.msra.mxu0 0
    %253 = vmatprep.subr.bf16.mxu0 0
    %254 = vmatpush2.bf16.msra.mxu0 0
    %255 = vmatprep.mubr.bf16.mxu0 0
    %256 = vmatmul.mubr.bf16.gmra.mxu0 %v221
    %v257 = vpop.f32.mrf.mxu0
    %v258 = vadd.f32 %v202, %v257
    %v259 = vpop.f32.mrf.mxu0
    %v260 = vadd.f32 %v206, %v259
    %v261 = vpop.f32.mrf.mxu0
    %v262 = vpop.f32.mrf.mxu0
    %263 = vdwg.mxu0
    %v265 = vlaneseq
    %v266 = vshrl.u32 %v265, 7
    %v267 = vsub.s32 0, %v266
    %v268 = vrot.slane %v138, %v267
    %v269 = vlaneseq
    %v270 = vshrl.u32 %v269, 7
    %v271 = vsub.s32 1, %v270
    %v272 = vrot.slane %v138, %v271
    %v275 = vmul.f32 %v258, %v268
    %v276 = vmul.f32 %v260, %v272
    %v278 = vlaneseq
    %v279 = vshrl.u32 %v278, 7
    %v280 = vsub.s32 0, %v279
    %v281 = vrot.slane %v139, %v280
    %v282 = vlaneseq
    %v283 = vshrl.u32 %v282, 7
    %v284 = vsub.s32 1, %v283
    %v285 = vrot.slane %v139, %v284
    %v288 = vadd.f32 %v275, %v281
    %v289 = vadd.f32 %v276, %v285
    %v290 = vxor.u32 %v288, 2147483648
    %v291 = vxor.u32 %v289, 2147483648
    %v292 = vmul.f32 %v290, 1.442695
    %v293 = vpow.pop %v292
    %v294 = vmul.f32 %v291, 1.442695
    %v295 = vpow.pop %v294
    %v296 = vadd.f32 %v293, 1.0
    %v297 = vadd.f32 %v295, 1.0
    %v298 = vrcp.pop %v296
    %v299 = vmul.f32 1.0, %v298
    %v300 = vrcp.pop %v297
    %v301 = vmul.f32 1.0, %v300
    %v302 = vmul.f32 %v288, %v299
    %v303 = vmul.f32 %v289, %v301
    %v304 = vpack.c.bf16 %v302, %v302
    %v305 = vpack.c.bf16 %v303, %v303
    %v307 = vlaneseq
    %v308 = vshrl.u32 %v307, 7
    %v309 = vsub.s32 0, %v308
    %v310 = vrot.slane %v172, %v309
    %v311 = vlaneseq
    %v312 = vshrl.u32 %v311, 7
    %v313 = vsub.s32 1, %v312
    %v314 = vrot.slane %v172, %v313
    %v349 = vunpack.c.l.b16 %v140
    %v350 = vunpack.c.h.b16 %v140
    %v351 = vunpack.c.l.b16 %v141
    %v352 = vunpack.c.h.b16 %v141
    %v353 = vunpack.c.l.b16 %v142
    %v354 = vunpack.c.h.b16 %v142
    %v355 = vunpack.c.l.b16 %v143
    %v356 = vunpack.c.h.b16 %v143
    %v357 = vunpack.c.l.b16 %v144
    %v358 = vunpack.c.h.b16 %v144
    %v359 = vunpack.c.l.b16 %v145
    %v360 = vunpack.c.h.b16 %v145
    %v361 = vunpack.c.l.b16 %v146
    %v362 = vunpack.c.h.b16 %v146
    %v363 = vunpack.c.l.b16 %v147
    %v364 = vunpack.c.h.b16 %v147
    %v365 = vunpack.c.l.b16 %v148
    %v366 = vunpack.c.h.b16 %v148
    %v367 = vunpack.c.l.b16 %v149
    %v368 = vunpack.c.h.b16 %v149
    %v369 = vunpack.c.l.b16 %v150
    %v370 = vunpack.c.h.b16 %v150
    %v371 = vunpack.c.l.b16 %v151
    %v372 = vunpack.c.h.b16 %v151
    %v373 = vunpack.c.l.b16 %v152
    %v374 = vunpack.c.h.b16 %v152
    %v375 = vunpack.c.l.b16 %v153
    %v376 = vunpack.c.h.b16 %v153
    %v377 = vunpack.c.l.b16 %v154
    %v378 = vunpack.c.h.b16 %v154
    %v379 = vunpack.c.l.b16 %v155
    %v380 = vunpack.c.h.b16 %v155
    %v381 = vunpack.c.l.b16 %v156
    %v382 = vunpack.c.h.b16 %v156
    %v383 = vunpack.c.l.b16 %v157
    %v384 = vunpack.c.h.b16 %v157
    %v385 = vunpack.c.l.b16 %v158
    %v386 = vunpack.c.h.b16 %v158
    %v387 = vunpack.c.l.b16 %v159
    %v388 = vunpack.c.h.b16 %v159
    %v389 = vunpack.c.l.b16 %v160
    %v390 = vunpack.c.h.b16 %v160
    %v391 = vunpack.c.l.b16 %v161
    %v392 = vunpack.c.h.b16 %v161
    %v393 = vunpack.c.l.b16 %v162
    %v394 = vunpack.c.h.b16 %v162
    %v395 = vunpack.c.l.b16 %v163
    %v396 = vunpack.c.h.b16 %v163
    %v397 = vunpack.c.l.b16 %v164
    %v398 = vunpack.c.h.b16 %v164
    %v399 = vunpack.c.l.b16 %v165
    %v400 = vunpack.c.h.b16 %v165
    %v401 = vunpack.c.l.b16 %v166
    %v402 = vunpack.c.h.b16 %v166
    %v403 = vunpack.c.l.b16 %v167
    %v404 = vunpack.c.h.b16 %v167
    %v405 = vunpack.c.l.b16 %v168
    %v406 = vunpack.c.h.b16 %v168
    %v407 = vunpack.c.l.b16 %v169
    %v408 = vunpack.c.h.b16 %v169
    %v409 = vunpack.c.l.b16 %v170
    %v410 = vunpack.c.h.b16 %v170
    %v411 = vunpack.c.l.b16 %v171
    %v412 = vunpack.c.h.b16 %v171
    %v413 = vpack.c.b16 %v351, %v349
    %v414 = vpack.c.b16 %v352, %v350
    %v415 = vpack.c.b16 %v355, %v353
    %v416 = vpack.c.b16 %v356, %v354
    %v417 = vpack.c.b16 %v359, %v357
    %v418 = vpack.c.b16 %v360, %v358
    %v419 = vpack.c.b16 %v363, %v361
    %v420 = vpack.c.b16 %v364, %v362
    %v421 = vpack.c.b16 %v367, %v365
    %v422 = vpack.c.b16 %v368, %v366
    %v423 = vpack.c.b16 %v371, %v369
    %v424 = vpack.c.b16 %v372, %v370
    %v425 = vpack.c.b16 %v375, %v373
    %v426 = vpack.c.b16 %v376, %v374
    %v427 = vpack.c.b16 %v379, %v377
    %v428 = vpack.c.b16 %v380, %v378
    %v429 = vpack.c.b16 %v383, %v381
    %v430 = vpack.c.b16 %v384, %v382
    %v431 = vpack.c.b16 %v387, %v385
    %v432 = vpack.c.b16 %v388, %v386
    %v433 = vpack.c.b16 %v391, %v389
    %v434 = vpack.c.b16 %v392, %v390
    %v435 = vpack.c.b16 %v395, %v393
    %v436 = vpack.c.b16 %v396, %v394
    %v437 = vpack.c.b16 %v399, %v397
    %v438 = vpack.c.b16 %v400, %v398
    %v439 = vpack.c.b16 %v403, %v401
    %v440 = vpack.c.b16 %v404, %v402
    %v441 = vpack.c.b16 %v407, %v405
    %v442 = vpack.c.b16 %v408, %v406
    %v443 = vpack.c.b16 %v411, %v409
    %v444 = vpack.c.b16 %v412, %v410
    %477 = vmatprep.subr.bf16.mxu0 %v428
    %478 = vmatpush1.bf16.msra.mxu0 %v427
    %479 = vmatprep.subr.bf16.mxu0 %v426
    %480 = vmatpush1.bf16.msra.mxu0 %v425
    %481 = vmatprep.subr.bf16.mxu0 %v424
    %482 = vmatpush1.bf16.msra.mxu0 %v423
    %483 = vmatprep.subr.bf16.mxu0 %v422
    %484 = vmatpush1.bf16.msra.mxu0 %v421
    %485 = vmatprep.subr.bf16.mxu0 %v420
    %486 = vmatpush1.bf16.msra.mxu0 %v419
    %487 = vmatprep.subr.bf16.mxu0 %v418
    %488 = vmatpush1.bf16.msra.mxu0 %v417
    %489 = vmatprep.subr.bf16.mxu0 %v416
    %490 = vmatpush1.bf16.msra.mxu0 %v415
    %491 = vmatprep.subr.bf16.mxu0 %v414
    %492 = vmatpush1.bf16.msra.mxu0 %v413
    %493 = vmatprep.subr.bf16.mxu0 %v444
    %494 = vmatpush2.bf16.msra.mxu0 %v443
    %495 = vmatprep.subr.bf16.mxu0 %v442
    %496 = vmatpush2.bf16.msra.mxu0 %v441
    %497 = vmatprep.subr.bf16.mxu0 %v440
    %498 = vmatpush2.bf16.msra.mxu0 %v439
    %499 = vmatprep.subr.bf16.mxu0 %v438
    %500 = vmatpush2.bf16.msra.mxu0 %v437
    %501 = vmatprep.subr.bf16.mxu0 %v436
    %502 = vmatpush2.bf16.msra.mxu0 %v435
    %503 = vmatprep.subr.bf16.mxu0 %v434
    %504 = vmatpush2.bf16.msra.mxu0 %v433
    %505 = vmatprep.subr.bf16.mxu0 %v432
    %506 = vmatpush2.bf16.msra.mxu0 %v431
    %507 = vmatprep.subr.bf16.mxu0 %v430
    %508 = vmatpush2.bf16.msra.mxu0 %v429
    %509 = vmatprep.mubr.bf16.mxu0 %v305
    %510 = vmatmul.mubr.bf16.gmra.mxu0 %v304
    %v511 = vpop.f32.mrf.mxu0
    %v512 = vadd.f32 %v310, %v511
    %v513 = vpop.f32.mrf.mxu0
    %v514 = vadd.f32 %v314, %v513
    %v515 = vpop.f32.mrf.mxu0
    %v516 = vpop.f32.mrf.mxu0
    %517 = vdwg.mxu0
    %v518 = vpack.c.bf16 %v132, %v132
    %v520 = vlaneseq
    %v521 = vshrl.u32 %v520, 7
    %v522 = vsub.s32 0, %v521
    %v523 = vrot.slane %v175, %v522
    %v524 = vlaneseq
    %v525 = vshrl.u32 %v524, 7
    %v526 = vsub.s32 1, %v525
    %v527 = vrot.slane %v175, %v526
    %v532 = vunpack.c.l.b16 %v173
    %v533 = vunpack.c.h.b16 %v173
    %v534 = vunpack.c.l.b16 %v174
    %v535 = vunpack.c.h.b16 %v174
    %v536 = vpack.c.b16 %v534, %v532
    %v537 = vpack.c.b16 %v535, %v533
    %v541 = vsel %vm219, %v518, 0
    %543 = vmatprep.subr.bf16.mxu0 0
    %544 = vmatpush1.bf16.msra.mxu0 0
    %545 = vmatprep.subr.bf16.mxu0 0
    %546 = vmatpush1.bf16.msra.mxu0 0
    %547 = vmatprep.subr.bf16.mxu0 0
    %548 = vmatpush1.bf16.msra.mxu0 0
    %549 = vmatprep.subr.bf16.mxu0 0
    %550 = vmatpush1.bf16.msra.mxu0 0
    %551 = vmatprep.subr.bf16.mxu0 0
    %552 = vmatpush1.bf16.msra.mxu0 0
    %553 = vmatprep.subr.bf16.mxu0 0
    %554 = vmatpush1.bf16.msra.mxu0 0
    %555 = vmatprep.subr.bf16.mxu0 0
    %556 = vmatpush1.bf16.msra.mxu0 0
    %557 = vmatprep.subr.bf16.mxu0 %v537
    %558 = vmatpush1.bf16.msra.mxu0 %v536
    %559 = vmatprep.subr.bf16.mxu0 0
    %560 = vmatpush2.bf16.msra.mxu0 0
    %561 = vmatprep.subr.bf16.mxu0 0
    %562 = vmatpush2.bf16.msra.mxu0 0
    %563 = vmatprep.subr.bf16.mxu0 0
    %564 = vmatpush2.bf16.msra.mxu0 0
    %565 = vmatprep.subr.bf16.mxu0 0
    %566 = vmatpush2.bf16.msra.mxu0 0
    %567 = vmatprep.subr.bf16.mxu0 0
    %568 = vmatpush2.bf16.msra.mxu0 0
    %569 = vmatprep.subr.bf16.mxu0 0
    %570 = vmatpush2.bf16.msra.mxu0 0
    %571 = vmatprep.subr.bf16.mxu0 0
    %572 = vmatpush2.bf16.msra.mxu0 0
    %573 = vmatprep.subr.bf16.mxu0 0
    %574 = vmatpush2.bf16.msra.mxu0 0
    %575 = vmatprep.mubr.bf16.mxu0 0
    %576 = vmatmul.mubr.bf16.gmra.mxu0 %v541
    %v577 = vpop.f32.mrf.mxu0
    %v578 = vadd.f32 %v523, %v577
    %v579 = vpop.f32.mrf.mxu0
    %v580 = vadd.f32 %v527, %v579
    %v581 = vpop.f32.mrf.mxu0
    %v582 = vpop.f32.mrf.mxu0
    %583 = vdwg.mxu0
    %v584 = vadd.f32 %v512, %v578
    %v585 = vadd.f32 %v514, %v580
    %v586 = vld [vmem:[%s23] sm:$0x3]
    %v587 = vld [vmem:[%s25] sm:$0x3]
    %v588 = vld [vmem:[%s27] sm:$0xff]
    %v589 = vld [vmem:[%s27 + $0x8] sm:$0xff]
    %v590 = vld [vmem:[%s27 + $0x10] sm:$0xff]
    %v591 = vld [vmem:[%s27 + $0x18] sm:$0xff]
    %v592 = vld [vmem:[%s27 + $0x20] sm:$0xff]
    %v593 = vld [vmem:[%s27 + $0x28] sm:$0xff]
    %v594 = vld [vmem:[%s27 + $0x30] sm:$0xff]
    %v595 = vld [vmem:[%s27 + $0x38] sm:$0xff]
    %v596 = vld [vmem:[%s27 + $0x40] sm:$0xff]
    %v597 = vld [vmem:[%s27 + $0x48] sm:$0xff]
    %v598 = vld [vmem:[%s27 + $0x50] sm:$0xff]
    %v599 = vld [vmem:[%s27 + $0x58] sm:$0xff]
    %v600 = vld [vmem:[%s27 + $0x60] sm:$0xff]
    %v601 = vld [vmem:[%s27 + $0x68] sm:$0xff]
    %v602 = vld [vmem:[%s27 + $0x70] sm:$0xff]
    %v603 = vld [vmem:[%s27 + $0x78] sm:$0xff]
    %v604 = vld [vmem:[%s27 + $0x80] sm:$0xff]
    %v605 = vld [vmem:[%s27 + $0x88] sm:$0xff]
    %v606 = vld [vmem:[%s27 + $0x90] sm:$0xff]
    %v607 = vld [vmem:[%s27 + $0x98] sm:$0xff]
    %v608 = vld [vmem:[%s27 + $0xa0] sm:$0xff]
    %v609 = vld [vmem:[%s27 + $0xa8] sm:$0xff]
    %v610 = vld [vmem:[%s27 + $0xb0] sm:$0xff]
    %v611 = vld [vmem:[%s27 + $0xb8] sm:$0xff]
    %v612 = vld [vmem:[%s27 + $0xc0] sm:$0xff]
    %v613 = vld [vmem:[%s27 + $0xc8] sm:$0xff]
    %v614 = vld [vmem:[%s27 + $0xd0] sm:$0xff]
    %v615 = vld [vmem:[%s27 + $0xd8] sm:$0xff]
    %v616 = vld [vmem:[%s27 + $0xe0] sm:$0xff]
    %v617 = vld [vmem:[%s27 + $0xe8] sm:$0xff]
    %v618 = vld [vmem:[%s27 + $0xf0] sm:$0xff]
    %v619 = vld [vmem:[%s27 + $0xf8] sm:$0xff]
    %v620 = vld [vmem:[%s29] sm:$0x3]
    %v621 = vld [vmem:[%s31] sm:$0x3]
    %v622 = vld [vmem:[%s33] sm:$0x3]
    %v623 = vld [vmem:[%s35] sm:$0xff]
    %v624 = vld [vmem:[%s35 + $0x8] sm:$0xff]
    %v625 = vld [vmem:[%s35 + $0x10] sm:$0xff]
    %v626 = vld [vmem:[%s35 + $0x18] sm:$0xff]
    %v627 = vld [vmem:[%s35 + $0x20] sm:$0xff]
    %v628 = vld [vmem:[%s35 + $0x28] sm:$0xff]
    %v629 = vld [vmem:[%s35 + $0x30] sm:$0xff]
    %v630 = vld [vmem:[%s35 + $0x38] sm:$0xff]
    %v631 = vld [vmem:[%s35 + $0x40] sm:$0xff]
    %v632 = vld [vmem:[%s35 + $0x48] sm:$0xff]
    %v633 = vld [vmem:[%s35 + $0x50] sm:$0xff]
    %v634 = vld [vmem:[%s35 + $0x58] sm:$0xff]
    %v635 = vld [vmem:[%s35 + $0x60] sm:$0xff]
    %v636 = vld [vmem:[%s35 + $0x68] sm:$0xff]
    %v637 = vld [vmem:[%s35 + $0x70] sm:$0xff]
    %v638 = vld [vmem:[%s35 + $0x78] sm:$0xff]
    %v639 = vld [vmem:[%s35 + $0x80] sm:$0xff]
    %v640 = vld [vmem:[%s35 + $0x88] sm:$0xff]
    %v641 = vld [vmem:[%s35 + $0x90] sm:$0xff]
    %v642 = vld [vmem:[%s35 + $0x98] sm:$0xff]
    %v643 = vld [vmem:[%s35 + $0xa0] sm:$0xff]
    %v644 = vld [vmem:[%s35 + $0xa8] sm:$0xff]
    %v645 = vld [vmem:[%s35 + $0xb0] sm:$0xff]
    %v646 = vld [vmem:[%s35 + $0xb8] sm:$0xff]
    %v647 = vld [vmem:[%s35 + $0xc0] sm:$0xff]
    %v648 = vld [vmem:[%s35 + $0xc8] sm:$0xff]
    %v649 = vld [vmem:[%s35 + $0xd0] sm:$0xff]
    %v650 = vld [vmem:[%s35 + $0xd8] sm:$0xff]
    %v651 = vld [vmem:[%s35 + $0xe0] sm:$0xff]
    %v652 = vld [vmem:[%s35 + $0xe8] sm:$0xff]
    %v653 = vld [vmem:[%s35 + $0xf0] sm:$0xff]
    %v654 = vld [vmem:[%s35 + $0xf8] sm:$0xff]
    %v655 = vld [vmem:[%s37] sm:$0x3]
    %v657 = vlaneseq
    %v658 = vshrl.u32 %v657, 7
    %v659 = vsub.s32 0, %v658
    %v660 = vrot.slane %v586, %v659
    %v661 = vlaneseq
    %v662 = vshrl.u32 %v661, 7
    %v663 = vsub.s32 1, %v662
    %v664 = vrot.slane %v586, %v663
    %v667 = vmul.f32 %v584, %v660
    %v668 = vmul.f32 %v585, %v664
    %v670 = vlaneseq
    %v671 = vshrl.u32 %v670, 7
    %v672 = vsub.s32 0, %v671
    %v673 = vrot.slane %v587, %v672
    %v674 = vlaneseq
    %v675 = vshrl.u32 %v674, 7
    %v676 = vsub.s32 1, %v675
    %v677 = vrot.slane %v587, %v676
    %v680 = vadd.f32 %v667, %v673
    %v681 = vadd.f32 %v668, %v677
    %v682 = vxor.u32 %v680, 2147483648
    %v683 = vxor.u32 %v681, 2147483648
    %v684 = vmul.f32 %v682, 1.442695
    %v685 = vpow.pop %v684
    %v686 = vmul.f32 %v683, 1.442695
    %v687 = vpow.pop %v686
    %v688 = vadd.f32 %v685, 1.0
    %v689 = vadd.f32 %v687, 1.0
    %v690 = vrcp.pop %v688
    %v691 = vmul.f32 1.0, %v690
    %v692 = vrcp.pop %v689
    %v693 = vmul.f32 1.0, %v692
    %v694 = vmul.f32 %v680, %v691
    %v695 = vmul.f32 %v681, %v693
    %v696 = vpack.c.bf16 %v694, %v694
    %v697 = vpack.c.bf16 %v695, %v695
    %v699 = vlaneseq
    %v700 = vshrl.u32 %v699, 7
    %v701 = vsub.s32 0, %v700
    %v702 = vrot.slane %v620, %v701
    %v703 = vlaneseq
    %v704 = vshrl.u32 %v703, 7
    %v705 = vsub.s32 1, %v704
    %v706 = vrot.slane %v620, %v705
    %v741 = vunpack.c.l.b16 %v588
    %v742 = vunpack.c.h.b16 %v588
    %v743 = vunpack.c.l.b16 %v589
    %v744 = vunpack.c.h.b16 %v589
    %v745 = vunpack.c.l.b16 %v590
    %v746 = vunpack.c.h.b16 %v590
    %v747 = vunpack.c.l.b16 %v591
    %v748 = vunpack.c.h.b16 %v591
    %v749 = vunpack.c.l.b16 %v592
    %v750 = vunpack.c.h.b16 %v592
    %v751 = vunpack.c.l.b16 %v593
    %v752 = vunpack.c.h.b16 %v593
    %v753 = vunpack.c.l.b16 %v594
    %v754 = vunpack.c.h.b16 %v594
    %v755 = vunpack.c.l.b16 %v595
    %v756 = vunpack.c.h.b16 %v595
    %v757 = vunpack.c.l.b16 %v596
    %v758 = vunpack.c.h.b16 %v596
    %v759 = vunpack.c.l.b16 %v597
    %v760 = vunpack.c.h.b16 %v597
    %v761 = vunpack.c.l.b16 %v598
    %v762 = vunpack.c.h.b16 %v598
    %v763 = vunpack.c.l.b16 %v599
    %v764 = vunpack.c.h.b16 %v599
    %v765 = vunpack.c.l.b16 %v600
    %v766 = vunpack.c.h.b16 %v600
    %v767 = vunpack.c.l.b16 %v601
    %v768 = vunpack.c.h.b16 %v601
    %v769 = vunpack.c.l.b16 %v602
    %v770 = vunpack.c.h.b16 %v602
    %v771 = vunpack.c.l.b16 %v603
    %v772 = vunpack.c.h.b16 %v603
    %v773 = vunpack.c.l.b16 %v604
    %v774 = vunpack.c.h.b16 %v604
    %v775 = vunpack.c.l.b16 %v605
    %v776 = vunpack.c.h.b16 %v605
    %v777 = vunpack.c.l.b16 %v606
    %v778 = vunpack.c.h.b16 %v606
    %v779 = vunpack.c.l.b16 %v607
    %v780 = vunpack.c.h.b16 %v607
    %v781 = vunpack.c.l.b16 %v608
    %v782 = vunpack.c.h.b16 %v608
    %v783 = vunpack.c.l.b16 %v609
    %v784 = vunpack.c.h.b16 %v609
    %v785 = vunpack.c.l.b16 %v610
    %v786 = vunpack.c.h.b16 %v610
    %v787 = vunpack.c.l.b16 %v611
    %v788 = vunpack.c.h.b16 %v611
    %v789 = vunpack.c.l.b16 %v612
    %v790 = vunpack.c.h.b16 %v612
    %v791 = vunpack.c.l.b16 %v613
    %v792 = vunpack.c.h.b16 %v613
    %v793 = vunpack.c.l.b16 %v614
    %v794 = vunpack.c.h.b16 %v614
    %v795 = vunpack.c.l.b16 %v615
    %v796 = vunpack.c.h.b16 %v615
    %v797 = vunpack.c.l.b16 %v616
    %v798 = vunpack.c.h.b16 %v616
    %v799 = vunpack.c.l.b16 %v617
    %v800 = vunpack.c.h.b16 %v617
    %v801 = vunpack.c.l.b16 %v618
    %v802 = vunpack.c.h.b16 %v618
    %v803 = vunpack.c.l.b16 %v619
    %v804 = vunpack.c.h.b16 %v619
    %v805 = vpack.c.b16 %v743, %v741
    %v806 = vpack.c.b16 %v744, %v742
    %v807 = vpack.c.b16 %v747, %v745
    %v808 = vpack.c.b16 %v748, %v746
    %v809 = vpack.c.b16 %v751, %v749
    %v810 = vpack.c.b16 %v752, %v750
    %v811 = vpack.c.b16 %v755, %v753
    %v812 = vpack.c.b16 %v756, %v754
    %v813 = vpack.c.b16 %v759, %v757
    %v814 = vpack.c.b16 %v760, %v758
    %v815 = vpack.c.b16 %v763, %v761
    %v816 = vpack.c.b16 %v764, %v762
    %v817 = vpack.c.b16 %v767, %v765
    %v818 = vpack.c.b16 %v768, %v766
    %v819 = vpack.c.b16 %v771, %v769
    %v820 = vpack.c.b16 %v772, %v770
    %v821 = vpack.c.b16 %v775, %v773
    %v822 = vpack.c.b16 %v776, %v774
    %v823 = vpack.c.b16 %v779, %v777
    %v824 = vpack.c.b16 %v780, %v778
    %v825 = vpack.c.b16 %v783, %v781
    %v826 = vpack.c.b16 %v784, %v782
    %v827 = vpack.c.b16 %v787, %v785
    %v828 = vpack.c.b16 %v788, %v786
    %v829 = vpack.c.b16 %v791, %v789
    %v830 = vpack.c.b16 %v792, %v790
    %v831 = vpack.c.b16 %v795, %v793
    %v832 = vpack.c.b16 %v796, %v794
    %v833 = vpack.c.b16 %v799, %v797
    %v834 = vpack.c.b16 %v800, %v798
    %v835 = vpack.c.b16 %v803, %v801
    %v836 = vpack.c.b16 %v804, %v802
    %869 = vmatprep.subr.bf16.mxu0 %v820
    %870 = vmatpush1.bf16.msra.mxu0 %v819
    %871 = vmatprep.subr.bf16.mxu0 %v818
    %872 = vmatpush1.bf16.msra.mxu0 %v817
    %873 = vmatprep.subr.bf16.mxu0 %v816
    %874 = vmatpush1.bf16.msra.mxu0 %v815
    %875 = vmatprep.subr.bf16.mxu0 %v814
    %876 = vmatpush1.bf16.msra.mxu0 %v813
    %877 = vmatprep.subr.bf16.mxu0 %v812
    %878 = vmatpush1.bf16.msra.mxu0 %v811
    %879 = vmatprep.subr.bf16.mxu0 %v810
    %880 = vmatpush1.bf16.msra.mxu0 %v809
    %881 = vmatprep.subr.bf16.mxu0 %v808
    %882 = vmatpush1.bf16.msra.mxu0 %v807
    %883 = vmatprep.subr.bf16.mxu0 %v806
    %884 = vmatpush1.bf16.msra.mxu0 %v805
    %885 = vmatprep.subr.bf16.mxu0 %v836
    %886 = vmatpush2.bf16.msra.mxu0 %v835
    %887 = vmatprep.subr.bf16.mxu0 %v834
    %888 = vmatpush2.bf16.msra.mxu0 %v833
    %889 = vmatprep.subr.bf16.mxu0 %v832
    %890 = vmatpush2.bf16.msra.mxu0 %v831
    %891 = vmatprep.subr.bf16.mxu0 %v830
    %892 = vmatpush2.bf16.msra.mxu0 %v829
    %893 = vmatprep.subr.bf16.mxu0 %v828
    %894 = vmatpush2.bf16.msra.mxu0 %v827
    %895 = vmatprep.subr.bf16.mxu0 %v826
    %896 = vmatpush2.bf16.msra.mxu0 %v825
    %897 = vmatprep.subr.bf16.mxu0 %v824
    %898 = vmatpush2.bf16.msra.mxu0 %v823
    %899 = vmatprep.subr.bf16.mxu0 %v822
    %900 = vmatpush2.bf16.msra.mxu0 %v821
    %901 = vmatprep.mubr.bf16.mxu0 %v697
    %902 = vmatmul.mubr.bf16.gmra.mxu0 %v696
    %v903 = vpop.f32.mrf.mxu0
    %v904 = vadd.f32 %v702, %v903
    %v905 = vpop.f32.mrf.mxu0
    %v906 = vadd.f32 %v706, %v905
    %v907 = vpop.f32.mrf.mxu0
    %v908 = vpop.f32.mrf.mxu0
    %909 = vdwg.mxu0
    %v911 = vlaneseq
    %v912 = vshrl.u32 %v911, 7
    %v913 = vsub.s32 0, %v912
    %v914 = vrot.slane %v621, %v913
    %v915 = vlaneseq
    %v916 = vshrl.u32 %v915, 7
    %v917 = vsub.s32 1, %v916
    %v918 = vrot.slane %v621, %v917
    %v921 = vmul.f32 %v904, %v914
    %v922 = vmul.f32 %v906, %v918
    %v924 = vlaneseq
    %v925 = vshrl.u32 %v924, 7
    %v926 = vsub.s32 0, %v925
    %v927 = vrot.slane %v622, %v926
    %v928 = vlaneseq
    %v929 = vshrl.u32 %v928, 7
    %v930 = vsub.s32 1, %v929
    %v931 = vrot.slane %v622, %v930
    %v934 = vadd.f32 %v921, %v927
    %v935 = vadd.f32 %v922, %v931
    %v936 = vxor.u32 %v934, 2147483648
    %v937 = vxor.u32 %v935, 2147483648
    %v938 = vmul.f32 %v936, 1.442695
    %v939 = vpow.pop %v938
    %v940 = vmul.f32 %v937, 1.442695
    %v941 = vpow.pop %v940
    %v942 = vadd.f32 %v939, 1.0
    %v943 = vadd.f32 %v941, 1.0
    %v944 = vrcp.pop %v942
    %v945 = vmul.f32 1.0, %v944
    %v946 = vrcp.pop %v943
    %v947 = vmul.f32 1.0, %v946
    %v948 = vmul.f32 %v934, %v945
    %v949 = vmul.f32 %v935, %v947
    %v950 = vpack.c.bf16 %v948, %v948
    %v951 = vpack.c.bf16 %v949, %v949
    %v953 = vlaneseq
    %v954 = vshrl.u32 %v953, 7
    %v955 = vsub.s32 0, %v954
    %v956 = vrot.slane %v655, %v955
    %v957 = vlaneseq
    %v958 = vshrl.u32 %v957, 7
    %v959 = vsub.s32 1, %v958
    %v960 = vrot.slane %v655, %v959
    %v995 = vunpack.c.l.b16 %v623
    %v996 = vunpack.c.h.b16 %v623
    %v997 = vunpack.c.l.b16 %v624
    %v998 = vunpack.c.h.b16 %v624
    %v999 = vunpack.c.l.b16 %v625
    %v1000 = vunpack.c.h.b16 %v625
    %v1001 = vunpack.c.l.b16 %v626
    %v1002 = vunpack.c.h.b16 %v626
    %v1003 = vunpack.c.l.b16 %v627
    %v1004 = vunpack.c.h.b16 %v627
    %v1005 = vunpack.c.l.b16 %v628
    %v1006 = vunpack.c.h.b16 %v628
    %v1007 = vunpack.c.l.b16 %v629
    %v1008 = vunpack.c.h.b16 %v629
    %v1009 = vunpack.c.l.b16 %v630
    %v1010 = vunpack.c.h.b16 %v630
    %v1011 = vunpack.c.l.b16 %v631
    %v1012 = vunpack.c.h.b16 %v631
    %v1013 = vunpack.c.l.b16 %v632
    %v1014 = vunpack.c.h.b16 %v632
    %v1015 = vunpack.c.l.b16 %v633
    %v1016 = vunpack.c.h.b16 %v633
    %v1017 = vunpack.c.l.b16 %v634
    %v1018 = vunpack.c.h.b16 %v634
    %v1019 = vunpack.c.l.b16 %v635
    %v1020 = vunpack.c.h.b16 %v635
    %v1021 = vunpack.c.l.b16 %v636
    %v1022 = vunpack.c.h.b16 %v636
    %v1023 = vunpack.c.l.b16 %v637
    %v1024 = vunpack.c.h.b16 %v637
    %v1025 = vunpack.c.l.b16 %v638
    %v1026 = vunpack.c.h.b16 %v638
    %v1027 = vunpack.c.l.b16 %v639
    %v1028 = vunpack.c.h.b16 %v639
    %v1029 = vunpack.c.l.b16 %v640
    %v1030 = vunpack.c.h.b16 %v640
    %v1031 = vunpack.c.l.b16 %v641
    %v1032 = vunpack.c.h.b16 %v641
    %v1033 = vunpack.c.l.b16 %v642
    %v1034 = vunpack.c.h.b16 %v642
    %v1035 = vunpack.c.l.b16 %v643
    %v1036 = vunpack.c.h.b16 %v643
    %v1037 = vunpack.c.l.b16 %v644
    %v1038 = vunpack.c.h.b16 %v644
    %v1039 = vunpack.c.l.b16 %v645
    %v1040 = vunpack.c.h.b16 %v645
    %v1041 = vunpack.c.l.b16 %v646
    %v1042 = vunpack.c.h.b16 %v646
    %v1043 = vunpack.c.l.b16 %v647
    %v1044 = vunpack.c.h.b16 %v647
    %v1045 = vunpack.c.l.b16 %v648
    %v1046 = vunpack.c.h.b16 %v648
    %v1047 = vunpack.c.l.b16 %v649
    %v1048 = vunpack.c.h.b16 %v649
    %v1049 = vunpack.c.l.b16 %v650
    %v1050 = vunpack.c.h.b16 %v650
    %v1051 = vunpack.c.l.b16 %v651
    %v1052 = vunpack.c.h.b16 %v651
    %v1053 = vunpack.c.l.b16 %v652
    %v1054 = vunpack.c.h.b16 %v652
    %v1055 = vunpack.c.l.b16 %v653
    %v1056 = vunpack.c.h.b16 %v653
    %v1057 = vunpack.c.l.b16 %v654
    %v1058 = vunpack.c.h.b16 %v654
    %v1059 = vpack.c.b16 %v997, %v995
    %v1060 = vpack.c.b16 %v998, %v996
    %v1061 = vpack.c.b16 %v1001, %v999
    %v1062 = vpack.c.b16 %v1002, %v1000
    %v1063 = vpack.c.b16 %v1005, %v1003
    %v1064 = vpack.c.b16 %v1006, %v1004
    %v1065 = vpack.c.b16 %v1009, %v1007
    %v1066 = vpack.c.b16 %v1010, %v1008
    %v1067 = vpack.c.b16 %v1013, %v1011
    %v1068 = vpack.c.b16 %v1014, %v1012
    %v1069 = vpack.c.b16 %v1017, %v1015
    %v1070 = vpack.c.b16 %v1018, %v1016
    %v1071 = vpack.c.b16 %v1021, %v1019
    %v1072 = vpack.c.b16 %v1022, %v1020
    %v1073 = vpack.c.b16 %v1025, %v1023
    %v1074 = vpack.c.b16 %v1026, %v1024
    %v1075 = vpack.c.b16 %v1029, %v1027
    %v1076 = vpack.c.b16 %v1030, %v1028
    %v1077 = vpack.c.b16 %v1033, %v1031
    %v1078 = vpack.c.b16 %v1034, %v1032
    %v1079 = vpack.c.b16 %v1037, %v1035
    %v1080 = vpack.c.b16 %v1038, %v1036
    %v1081 = vpack.c.b16 %v1041, %v1039
    %v1082 = vpack.c.b16 %v1042, %v1040
    %v1083 = vpack.c.b16 %v1045, %v1043
    %v1084 = vpack.c.b16 %v1046, %v1044
    %v1085 = vpack.c.b16 %v1049, %v1047
    %v1086 = vpack.c.b16 %v1050, %v1048
    %v1087 = vpack.c.b16 %v1053, %v1051
    %v1088 = vpack.c.b16 %v1054, %v1052
    %v1089 = vpack.c.b16 %v1057, %v1055
    %v1090 = vpack.c.b16 %v1058, %v1056
    %1123 = vmatprep.subr.bf16.mxu0 %v1074
    %1124 = vmatpush1.bf16.msra.mxu0 %v1073
    %1125 = vmatprep.subr.bf16.mxu0 %v1072
    %1126 = vmatpush1.bf16.msra.mxu0 %v1071
    %1127 = vmatprep.subr.bf16.mxu0 %v1070
    %1128 = vmatpush1.bf16.msra.mxu0 %v1069
    %1129 = vmatprep.subr.bf16.mxu0 %v1068
    %1130 = vmatpush1.bf16.msra.mxu0 %v1067
    %1131 = vmatprep.subr.bf16.mxu0 %v1066
    %1132 = vmatpush1.bf16.msra.mxu0 %v1065
    %1133 = vmatprep.subr.bf16.mxu0 %v1064
    %1134 = vmatpush1.bf16.msra.mxu0 %v1063
    %1135 = vmatprep.subr.bf16.mxu0 %v1062
    %1136 = vmatpush1.bf16.msra.mxu0 %v1061
    %1137 = vmatprep.subr.bf16.mxu0 %v1060
    %1138 = vmatpush1.bf16.msra.mxu0 %v1059
    %1139 = vmatprep.subr.bf16.mxu0 %v1090
    %1140 = vmatpush2.bf16.msra.mxu0 %v1089
    %1141 = vmatprep.subr.bf16.mxu0 %v1088
    %1142 = vmatpush2.bf16.msra.mxu0 %v1087
    %1143 = vmatprep.subr.bf16.mxu0 %v1086
    %1144 = vmatpush2.bf16.msra.mxu0 %v1085
    %1145 = vmatprep.subr.bf16.mxu0 %v1084
    %1146 = vmatpush2.bf16.msra.mxu0 %v1083
    %1147 = vmatprep.subr.bf16.mxu0 %v1082
    %1148 = vmatpush2.bf16.msra.mxu0 %v1081
    %1149 = vmatprep.subr.bf16.mxu0 %v1080
    %1150 = vmatpush2.bf16.msra.mxu0 %v1079
    %1151 = vmatprep.subr.bf16.mxu0 %v1078
    %1152 = vmatpush2.bf16.msra.mxu0 %v1077
    %1153 = vmatprep.subr.bf16.mxu0 %v1076
    %1154 = vmatpush2.bf16.msra.mxu0 %v1075
    %1155 = vmatprep.mubr.bf16.mxu0 %v951
    %1156 = vmatmul.mubr.bf16.gmra.mxu0 %v950
    %v1157 = vpop.f32.mrf.mxu0
    %v1158 = vadd.f32 %v956, %v1157
    %v1159 = vpop.f32.mrf.mxu0
    %v1160 = vadd.f32 %v960, %v1159
    %v1161 = vpop.f32.mrf.mxu0
    %v1162 = vpop.f32.mrf.mxu0
    %1163 = vdwg.mxu0
    %v1164 = vadd.f32 %v1158, %v584
    %v1165 = vadd.f32 %v1160, %v585
    %v1166 = vld [vmem:[%s39] sm:$0x3]
    %v1167 = vld [vmem:[%s41] sm:$0x3]
    %v1168 = vld [vmem:[%s43] sm:$0xff]
    %v1169 = vld [vmem:[%s43 + $0x8] sm:$0xff]
    %v1170 = vld [vmem:[%s43 + $0x10] sm:$0xff]
    %v1171 = vld [vmem:[%s43 + $0x18] sm:$0xff]
    %v1172 = vld [vmem:[%s43 + $0x20] sm:$0xff]
    %v1173 = vld [vmem:[%s43 + $0x28] sm:$0xff]
    %v1174 = vld [vmem:[%s43 + $0x30] sm:$0xff]
    %v1175 = vld [vmem:[%s43 + $0x38] sm:$0xff]
    %v1176 = vld [vmem:[%s43 + $0x40] sm:$0xff]
    %v1177 = vld [vmem:[%s43 + $0x48] sm:$0xff]
    %v1178 = vld [vmem:[%s43 + $0x50] sm:$0xff]
    %v1179 = vld [vmem:[%s43 + $0x58] sm:$0xff]
    %v1180 = vld [vmem:[%s43 + $0x60] sm:$0xff]
    %v1181 = vld [vmem:[%s43 + $0x68] sm:$0xff]
    %v1182 = vld [vmem:[%s43 + $0x70] sm:$0xff]
    %v1183 = vld [vmem:[%s43 + $0x78] sm:$0xff]
    %v1184 = vld [vmem:[%s43 + $0x80] sm:$0xff]
    %v1185 = vld [vmem:[%s43 + $0x88] sm:$0xff]
    %v1186 = vld [vmem:[%s43 + $0x90] sm:$0xff]
    %v1187 = vld [vmem:[%s43 + $0x98] sm:$0xff]
    %v1188 = vld [vmem:[%s43 + $0xa0] sm:$0xff]
    %v1189 = vld [vmem:[%s43 + $0xa8] sm:$0xff]
    %v1190 = vld [vmem:[%s43 + $0xb0] sm:$0xff]
    %v1191 = vld [vmem:[%s43 + $0xb8] sm:$0xff]
    %v1192 = vld [vmem:[%s43 + $0xc0] sm:$0xff]
    %v1193 = vld [vmem:[%s43 + $0xc8] sm:$0xff]
    %v1194 = vld [vmem:[%s43 + $0xd0] sm:$0xff]
    %v1195 = vld [vmem:[%s43 + $0xd8] sm:$0xff]
    %v1196 = vld [vmem:[%s43 + $0xe0] sm:$0xff]
    %v1197 = vld [vmem:[%s43 + $0xe8] sm:$0xff]
    %v1198 = vld [vmem:[%s43 + $0xf0] sm:$0xff]
    %v1199 = vld [vmem:[%s43 + $0xf8] sm:$0xff]
    %v1200 = vld [vmem:[%s45] sm:$0x3]
    %v1201 = vld [vmem:[%s47] sm:$0x3]
    %v1202 = vld [vmem:[%s49] sm:$0x3]
    %v1203 = vld [vmem:[%s51] sm:$0xff]
    %v1204 = vld [vmem:[%s51 + $0x8] sm:$0xff]
    %v1205 = vld [vmem:[%s51 + $0x10] sm:$0xff]
    %v1206 = vld [vmem:[%s51 + $0x18] sm:$0xff]
    %v1207 = vld [vmem:[%s51 + $0x20] sm:$0xff]
    %v1208 = vld [vmem:[%s51 + $0x28] sm:$0xff]
    %v1209 = vld [vmem:[%s51 + $0x30] sm:$0xff]
    %v1210 = vld [vmem:[%s51 + $0x38] sm:$0xff]
    %v1211 = vld [vmem:[%s51 + $0x40] sm:$0xff]
    %v1212 = vld [vmem:[%s51 + $0x48] sm:$0xff]
    %v1213 = vld [vmem:[%s51 + $0x50] sm:$0xff]
    %v1214 = vld [vmem:[%s51 + $0x58] sm:$0xff]
    %v1215 = vld [vmem:[%s51 + $0x60] sm:$0xff]
    %v1216 = vld [vmem:[%s51 + $0x68] sm:$0xff]
    %v1217 = vld [vmem:[%s51 + $0x70] sm:$0xff]
    %v1218 = vld [vmem:[%s51 + $0x78] sm:$0xff]
    %v1219 = vld [vmem:[%s51 + $0x80] sm:$0xff]
    %v1220 = vld [vmem:[%s51 + $0x88] sm:$0xff]
    %v1221 = vld [vmem:[%s51 + $0x90] sm:$0xff]
    %v1222 = vld [vmem:[%s51 + $0x98] sm:$0xff]
    %v1223 = vld [vmem:[%s51 + $0xa0] sm:$0xff]
    %v1224 = vld [vmem:[%s51 + $0xa8] sm:$0xff]
    %v1225 = vld [vmem:[%s51 + $0xb0] sm:$0xff]
    %v1226 = vld [vmem:[%s51 + $0xb8] sm:$0xff]
    %v1227 = vld [vmem:[%s51 + $0xc0] sm:$0xff]
    %v1228 = vld [vmem:[%s51 + $0xc8] sm:$0xff]
    %v1229 = vld [vmem:[%s51 + $0xd0] sm:$0xff]
    %v1230 = vld [vmem:[%s51 + $0xd8] sm:$0xff]
    %v1231 = vld [vmem:[%s51 + $0xe0] sm:$0xff]
    %v1232 = vld [vmem:[%s51 + $0xe8] sm:$0xff]
    %v1233 = vld [vmem:[%s51 + $0xf0] sm:$0xff]
    %v1234 = vld [vmem:[%s51 + $0xf8] sm:$0xff]
    %v1235 = vld [vmem:[%s53] sm:$0x3]
    %v1237 = vlaneseq
    %v1238 = vshrl.u32 %v1237, 7
    %v1239 = vsub.s32 0, %v1238
    %v1240 = vrot.slane %v1166, %v1239
    %v1241 = vlaneseq
    %v1242 = vshrl.u32 %v1241, 7
    %v1243 = vsub.s32 1, %v1242
    %v1244 = vrot.slane %v1166, %v1243
    %v1247 = vmul.f32 %v1164, %v1240
    %v1248 = vmul.f32 %v1165, %v1244
    %v1250 = vlaneseq
    %v1251 = vshrl.u32 %v1250, 7
    %v1252 = vsub.s32 0, %v1251
    %v1253 = vrot.slane %v1167, %v1252
    %v1254 = vlaneseq
    %v1255 = vshrl.u32 %v1254, 7
    %v1256 = vsub.s32 1, %v1255
    %v1257 = vrot.slane %v1167, %v1256
    %v1260 = vadd.f32 %v1247, %v1253
    %v1261 = vadd.f32 %v1248, %v1257
    %v1262 = vxor.u32 %v1260, 2147483648
    %v1263 = vxor.u32 %v1261, 2147483648
    %v1264 = vmul.f32 %v1262, 1.442695
    %v1265 = vpow.pop %v1264
    %v1266 = vmul.f32 %v1263, 1.442695
    %v1267 = vpow.pop %v1266
    %v1268 = vadd.f32 %v1265, 1.0
    %v1269 = vadd.f32 %v1267, 1.0
    %v1270 = vrcp.pop %v1268
    %v1271 = vmul.f32 1.0, %v1270
    %v1272 = vrcp.pop %v1269
    %v1273 = vmul.f32 1.0, %v1272
    %v1274 = vmul.f32 %v1260, %v1271
    %v1275 = vmul.f32 %v1261, %v1273
    %v1276 = vpack.c.bf16 %v1274, %v1274
    %v1277 = vpack.c.bf16 %v1275, %v1275
    %v1279 = vlaneseq
    %v1280 = vshrl.u32 %v1279, 7
    %v1281 = vsub.s32 0, %v1280
    %v1282 = vrot.slane %v1200, %v1281
    %v1283 = vlaneseq
    %v1284 = vshrl.u32 %v1283, 7
    %v1285 = vsub.s32 1, %v1284
    %v1286 = vrot.slane %v1200, %v1285
    %v1321 = vunpack.c.l.b16 %v1168
    %v1322 = vunpack.c.h.b16 %v1168
    %v1323 = vunpack.c.l.b16 %v1169
    %v1324 = vunpack.c.h.b16 %v1169
    %v1325 = vunpack.c.l.b16 %v1170
    %v1326 = vunpack.c.h.b16 %v1170
    %v1327 = vunpack.c.l.b16 %v1171
    %v1328 = vunpack.c.h.b16 %v1171
    %v1329 = vunpack.c.l.b16 %v1172
    %v1330 = vunpack.c.h.b16 %v1172
    %v1331 = vunpack.c.l.b16 %v1173
    %v1332 = vunpack.c.h.b16 %v1173
    %v1333 = vunpack.c.l.b16 %v1174
    %v1334 = vunpack.c.h.b16 %v1174
    %v1335 = vunpack.c.l.b16 %v1175
    %v1336 = vunpack.c.h.b16 %v1175
    %v1337 = vunpack.c.l.b16 %v1176
    %v1338 = vunpack.c.h.b16 %v1176
    %v1339 = vunpack.c.l.b16 %v1177
    %v1340 = vunpack.c.h.b16 %v1177
    %v1341 = vunpack.c.l.b16 %v1178
    %v1342 = vunpack.c.h.b16 %v1178
    %v1343 = vunpack.c.l.b16 %v1179
    %v1344 = vunpack.c.h.b16 %v1179
    %v1345 = vunpack.c.l.b16 %v1180
    %v1346 = vunpack.c.h.b16 %v1180
    %v1347 = vunpack.c.l.b16 %v1181
    %v1348 = vunpack.c.h.b16 %v1181
    %v1349 = vunpack.c.l.b16 %v1182
    %v1350 = vunpack.c.h.b16 %v1182
    %v1351 = vunpack.c.l.b16 %v1183
    %v1352 = vunpack.c.h.b16 %v1183
    %v1353 = vunpack.c.l.b16 %v1184
    %v1354 = vunpack.c.h.b16 %v1184
    %v1355 = vunpack.c.l.b16 %v1185
    %v1356 = vunpack.c.h.b16 %v1185
    %v1357 = vunpack.c.l.b16 %v1186
    %v1358 = vunpack.c.h.b16 %v1186
    %v1359 = vunpack.c.l.b16 %v1187
    %v1360 = vunpack.c.h.b16 %v1187
    %v1361 = vunpack.c.l.b16 %v1188
    %v1362 = vunpack.c.h.b16 %v1188
    %v1363 = vunpack.c.l.b16 %v1189
    %v1364 = vunpack.c.h.b16 %v1189
    %v1365 = vunpack.c.l.b16 %v1190
    %v1366 = vunpack.c.h.b16 %v1190
    %v1367 = vunpack.c.l.b16 %v1191
    %v1368 = vunpack.c.h.b16 %v1191
    %v1369 = vunpack.c.l.b16 %v1192
    %v1370 = vunpack.c.h.b16 %v1192
    %v1371 = vunpack.c.l.b16 %v1193
    %v1372 = vunpack.c.h.b16 %v1193
    %v1373 = vunpack.c.l.b16 %v1194
    %v1374 = vunpack.c.h.b16 %v1194
    %v1375 = vunpack.c.l.b16 %v1195
    %v1376 = vunpack.c.h.b16 %v1195
    %v1377 = vunpack.c.l.b16 %v1196
    %v1378 = vunpack.c.h.b16 %v1196
    %v1379 = vunpack.c.l.b16 %v1197
    %v1380 = vunpack.c.h.b16 %v1197
    %v1381 = vunpack.c.l.b16 %v1198
    %v1382 = vunpack.c.h.b16 %v1198
    %v1383 = vunpack.c.l.b16 %v1199
    %v1384 = vunpack.c.h.b16 %v1199
    %v1385 = vpack.c.b16 %v1323, %v1321
    %v1386 = vpack.c.b16 %v1324, %v1322
    %v1387 = vpack.c.b16 %v1327, %v1325
    %v1388 = vpack.c.b16 %v1328, %v1326
    %v1389 = vpack.c.b16 %v1331, %v1329
    %v1390 = vpack.c.b16 %v1332, %v1330
    %v1391 = vpack.c.b16 %v1335, %v1333
    %v1392 = vpack.c.b16 %v1336, %v1334
    %v1393 = vpack.c.b16 %v1339, %v1337
    %v1394 = vpack.c.b16 %v1340, %v1338
    %v1395 = vpack.c.b16 %v1343, %v1341
    %v1396 = vpack.c.b16 %v1344, %v1342
    %v1397 = vpack.c.b16 %v1347, %v1345
    %v1398 = vpack.c.b16 %v1348, %v1346
    %v1399 = vpack.c.b16 %v1351, %v1349
    %v1400 = vpack.c.b16 %v1352, %v1350
    %v1401 = vpack.c.b16 %v1355, %v1353
    %v1402 = vpack.c.b16 %v1356, %v1354
    %v1403 = vpack.c.b16 %v1359, %v1357
    %v1404 = vpack.c.b16 %v1360, %v1358
    %v1405 = vpack.c.b16 %v1363, %v1361
    %v1406 = vpack.c.b16 %v1364, %v1362
    %v1407 = vpack.c.b16 %v1367, %v1365
    %v1408 = vpack.c.b16 %v1368, %v1366
    %v1409 = vpack.c.b16 %v1371, %v1369
    %v1410 = vpack.c.b16 %v1372, %v1370
    %v1411 = vpack.c.b16 %v1375, %v1373
    %v1412 = vpack.c.b16 %v1376, %v1374
    %v1413 = vpack.c.b16 %v1379, %v1377
    %v1414 = vpack.c.b16 %v1380, %v1378
    %v1415 = vpack.c.b16 %v1383, %v1381
    %v1416 = vpack.c.b16 %v1384, %v1382
    %1449 = vmatprep.subr.bf16.mxu0 %v1400
    %1450 = vmatpush1.bf16.msra.mxu0 %v1399
    %1451 = vmatprep.subr.bf16.mxu0 %v1398
    %1452 = vmatpush1.bf16.msra.mxu0 %v1397
    %1453 = vmatprep.subr.bf16.mxu0 %v1396
    %1454 = vmatpush1.bf16.msra.mxu0 %v1395
    %1455 = vmatprep.subr.bf16.mxu0 %v1394
    %1456 = vmatpush1.bf16.msra.mxu0 %v1393
    %1457 = vmatprep.subr.bf16.mxu0 %v1392
    %1458 = vmatpush1.bf16.msra.mxu0 %v1391
    %1459 = vmatprep.subr.bf16.mxu0 %v1390
    %1460 = vmatpush1.bf16.msra.mxu0 %v1389
    %1461 = vmatprep.subr.bf16.mxu0 %v1388
    %1462 = vmatpush1.bf16.msra.mxu0 %v1387
    %1463 = vmatprep.subr.bf16.mxu0 %v1386
    %1464 = vmatpush1.bf16.msra.mxu0 %v1385
    %1465 = vmatprep.subr.bf16.mxu0 %v1416
    %1466 = vmatpush2.bf16.msra.mxu0 %v1415
    %1467 = vmatprep.subr.bf16.mxu0 %v1414
    %1468 = vmatpush2.bf16.msra.mxu0 %v1413
    %1469 = vmatprep.subr.bf16.mxu0 %v1412
    %1470 = vmatpush2.bf16.msra.mxu0 %v1411
    %1471 = vmatprep.subr.bf16.mxu0 %v1410
    %1472 = vmatpush2.bf16.msra.mxu0 %v1409
    %1473 = vmatprep.subr.bf16.mxu0 %v1408
    %1474 = vmatpush2.bf16.msra.mxu0 %v1407
    %1475 = vmatprep.subr.bf16.mxu0 %v1406
    %1476 = vmatpush2.bf16.msra.mxu0 %v1405
    %1477 = vmatprep.subr.bf16.mxu0 %v1404
    %1478 = vmatpush2.bf16.msra.mxu0 %v1403
    %1479 = vmatprep.subr.bf16.mxu0 %v1402
    %1480 = vmatpush2.bf16.msra.mxu0 %v1401
    %1481 = vmatprep.mubr.bf16.mxu0 %v1277
    %1482 = vmatmul.mubr.bf16.gmra.mxu0 %v1276
    %v1483 = vpop.f32.mrf.mxu0
    %v1484 = vadd.f32 %v1282, %v1483
    %v1485 = vpop.f32.mrf.mxu0
    %v1486 = vadd.f32 %v1286, %v1485
    %v1487 = vpop.f32.mrf.mxu0
    %v1488 = vpop.f32.mrf.mxu0
    %1489 = vdwg.mxu0
    %v1491 = vlaneseq
    %v1492 = vshrl.u32 %v1491, 7
    %v1493 = vsub.s32 0, %v1492
    %v1494 = vrot.slane %v1201, %v1493
    %v1495 = vlaneseq
    %v1496 = vshrl.u32 %v1495, 7
    %v1497 = vsub.s32 1, %v1496
    %v1498 = vrot.slane %v1201, %v1497
    %v1501 = vmul.f32 %v1484, %v1494
    %v1502 = vmul.f32 %v1486, %v1498
    %v1504 = vlaneseq
    %v1505 = vshrl.u32 %v1504, 7
    %v1506 = vsub.s32 0, %v1505
    %v1507 = vrot.slane %v1202, %v1506
    %v1508 = vlaneseq
    %v1509 = vshrl.u32 %v1508, 7
    %v1510 = vsub.s32 1, %v1509
    %v1511 = vrot.slane %v1202, %v1510
    %v1514 = vadd.f32 %v1501, %v1507
    %v1515 = vadd.f32 %v1502, %v1511
    %v1516 = vxor.u32 %v1514, 2147483648
    %v1517 = vxor.u32 %v1515, 2147483648
    %v1518 = vmul.f32 %v1516, 1.442695
    %v1519 = vpow.pop %v1518
    %v1520 = vmul.f32 %v1517, 1.442695
    %v1521 = vpow.pop %v1520
    %v1522 = vadd.f32 %v1519, 1.0
    %v1523 = vadd.f32 %v1521, 1.0
    %v1524 = vrcp.pop %v1522
    %v1525 = vmul.f32 1.0, %v1524
    %v1526 = vrcp.pop %v1523
    %v1527 = vmul.f32 1.0, %v1526
    %v1528 = vmul.f32 %v1514, %v1525
    %v1529 = vmul.f32 %v1515, %v1527
    %v1530 = vpack.c.bf16 %v1528, %v1528
    %v1531 = vpack.c.bf16 %v1529, %v1529
    %v1533 = vlaneseq
    %v1534 = vshrl.u32 %v1533, 7
    %v1535 = vsub.s32 0, %v1534
    %v1536 = vrot.slane %v1235, %v1535
    %v1537 = vlaneseq
    %v1538 = vshrl.u32 %v1537, 7
    %v1539 = vsub.s32 1, %v1538
    %v1540 = vrot.slane %v1235, %v1539
    %v1575 = vunpack.c.l.b16 %v1203
    %v1576 = vunpack.c.h.b16 %v1203
    %v1577 = vunpack.c.l.b16 %v1204
    %v1578 = vunpack.c.h.b16 %v1204
    %v1579 = vunpack.c.l.b16 %v1205
    %v1580 = vunpack.c.h.b16 %v1205
    %v1581 = vunpack.c.l.b16 %v1206
    %v1582 = vunpack.c.h.b16 %v1206
    %v1583 = vunpack.c.l.b16 %v1207
    %v1584 = vunpack.c.h.b16 %v1207
    %v1585 = vunpack.c.l.b16 %v1208
    %v1586 = vunpack.c.h.b16 %v1208
    %v1587 = vunpack.c.l.b16 %v1209
    %v1588 = vunpack.c.h.b16 %v1209
    %v1589 = vunpack.c.l.b16 %v1210
    %v1590 = vunpack.c.h.b16 %v1210
    %v1591 = vunpack.c.l.b16 %v1211
    %v1592 = vunpack.c.h.b16 %v1211
    %v1593 = vunpack.c.l.b16 %v1212
    %v1594 = vunpack.c.h.b16 %v1212
    %v1595 = vunpack.c.l.b16 %v1213
    %v1596 = vunpack.c.h.b16 %v1213
    %v1597 = vunpack.c.l.b16 %v1214
    %v1598 = vunpack.c.h.b16 %v1214
    %v1599 = vunpack.c.l.b16 %v1215
    %v1600 = vunpack.c.h.b16 %v1215
    %v1601 = vunpack.c.l.b16 %v1216
    %v1602 = vunpack.c.h.b16 %v1216
    %v1603 = vunpack.c.l.b16 %v1217
    %v1604 = vunpack.c.h.b16 %v1217
    %v1605 = vunpack.c.l.b16 %v1218
    %v1606 = vunpack.c.h.b16 %v1218
    %v1607 = vunpack.c.l.b16 %v1219
    %v1608 = vunpack.c.h.b16 %v1219
    %v1609 = vunpack.c.l.b16 %v1220
    %v1610 = vunpack.c.h.b16 %v1220
    %v1611 = vunpack.c.l.b16 %v1221
    %v1612 = vunpack.c.h.b16 %v1221
    %v1613 = vunpack.c.l.b16 %v1222
    %v1614 = vunpack.c.h.b16 %v1222
    %v1615 = vunpack.c.l.b16 %v1223
    %v1616 = vunpack.c.h.b16 %v1223
    %v1617 = vunpack.c.l.b16 %v1224
    %v1618 = vunpack.c.h.b16 %v1224
    %v1619 = vunpack.c.l.b16 %v1225
    %v1620 = vunpack.c.h.b16 %v1225
    %v1621 = vunpack.c.l.b16 %v1226
    %v1622 = vunpack.c.h.b16 %v1226
    %v1623 = vunpack.c.l.b16 %v1227
    %v1624 = vunpack.c.h.b16 %v1227
    %v1625 = vunpack.c.l.b16 %v1228
    %v1626 = vunpack.c.h.b16 %v1228
    %v1627 = vunpack.c.l.b16 %v1229
    %v1628 = vunpack.c.h.b16 %v1229
    %v1629 = vunpack.c.l.b16 %v1230
    %v1630 = vunpack.c.h.b16 %v1230
    %v1631 = vunpack.c.l.b16 %v1231
    %v1632 = vunpack.c.h.b16 %v1231
    %v1633 = vunpack.c.l.b16 %v1232
    %v1634 = vunpack.c.h.b16 %v1232
    %v1635 = vunpack.c.l.b16 %v1233
    %v1636 = vunpack.c.h.b16 %v1233
    %v1637 = vunpack.c.l.b16 %v1234
    %v1638 = vunpack.c.h.b16 %v1234
    %v1639 = vpack.c.b16 %v1577, %v1575
    %v1640 = vpack.c.b16 %v1578, %v1576
    %v1641 = vpack.c.b16 %v1581, %v1579
    %v1642 = vpack.c.b16 %v1582, %v1580
    %v1643 = vpack.c.b16 %v1585, %v1583
    %v1644 = vpack.c.b16 %v1586, %v1584
    %v1645 = vpack.c.b16 %v1589, %v1587
    %v1646 = vpack.c.b16 %v1590, %v1588
    %v1647 = vpack.c.b16 %v1593, %v1591
    %v1648 = vpack.c.b16 %v1594, %v1592
    %v1649 = vpack.c.b16 %v1597, %v1595
    %v1650 = vpack.c.b16 %v1598, %v1596
    %v1651 = vpack.c.b16 %v1601, %v1599
    %v1652 = vpack.c.b16 %v1602, %v1600
    %v1653 = vpack.c.b16 %v1605, %v1603
    %v1654 = vpack.c.b16 %v1606, %v1604
    %v1655 = vpack.c.b16 %v1609, %v1607
    %v1656 = vpack.c.b16 %v1610, %v1608
    %v1657 = vpack.c.b16 %v1613, %v1611
    %v1658 = vpack.c.b16 %v1614, %v1612
    %v1659 = vpack.c.b16 %v1617, %v1615
    %v1660 = vpack.c.b16 %v1618, %v1616
    %v1661 = vpack.c.b16 %v1621, %v1619
    %v1662 = vpack.c.b16 %v1622, %v1620
    %v1663 = vpack.c.b16 %v1625, %v1623
    %v1664 = vpack.c.b16 %v1626, %v1624
    %v1665 = vpack.c.b16 %v1629, %v1627
    %v1666 = vpack.c.b16 %v1630, %v1628
    %v1667 = vpack.c.b16 %v1633, %v1631
    %v1668 = vpack.c.b16 %v1634, %v1632
    %v1669 = vpack.c.b16 %v1637, %v1635
    %v1670 = vpack.c.b16 %v1638, %v1636
    %1703 = vmatprep.subr.bf16.mxu0 %v1654
    %1704 = vmatpush1.bf16.msra.mxu0 %v1653
    %1705 = vmatprep.subr.bf16.mxu0 %v1652
    %1706 = vmatpush1.bf16.msra.mxu0 %v1651
    %1707 = vmatprep.subr.bf16.mxu0 %v1650
    %1708 = vmatpush1.bf16.msra.mxu0 %v1649
    %1709 = vmatprep.subr.bf16.mxu0 %v1648
    %1710 = vmatpush1.bf16.msra.mxu0 %v1647
    %1711 = vmatprep.subr.bf16.mxu0 %v1646
    %1712 = vmatpush1.bf16.msra.mxu0 %v1645
    %1713 = vmatprep.subr.bf16.mxu0 %v1644
    %1714 = vmatpush1.bf16.msra.mxu0 %v1643
    %1715 = vmatprep.subr.bf16.mxu0 %v1642
    %1716 = vmatpush1.bf16.msra.mxu0 %v1641
    %1717 = vmatprep.subr.bf16.mxu0 %v1640
    %1718 = vmatpush1.bf16.msra.mxu0 %v1639
    %1719 = vmatprep.subr.bf16.mxu0 %v1670
    %1720 = vmatpush2.bf16.msra.mxu0 %v1669
    %1721 = vmatprep.subr.bf16.mxu0 %v1668
    %1722 = vmatpush2.bf16.msra.mxu0 %v1667
    %1723 = vmatprep.subr.bf16.mxu0 %v1666
    %1724 = vmatpush2.bf16.msra.mxu0 %v1665
    %1725 = vmatprep.subr.bf16.mxu0 %v1664
    %1726 = vmatpush2.bf16.msra.mxu0 %v1663
    %1727 = vmatprep.subr.bf16.mxu0 %v1662
    %1728 = vmatpush2.bf16.msra.mxu0 %v1661
    %1729 = vmatprep.subr.bf16.mxu0 %v1660
    %1730 = vmatpush2.bf16.msra.mxu0 %v1659
    %1731 = vmatprep.subr.bf16.mxu0 %v1658
    %1732 = vmatpush2.bf16.msra.mxu0 %v1657
    %1733 = vmatprep.subr.bf16.mxu0 %v1656
    %1734 = vmatpush2.bf16.msra.mxu0 %v1655
    %1735 = vmatprep.mubr.bf16.mxu0 %v1531
    %1736 = vmatmul.mubr.bf16.gmra.mxu0 %v1530
    %v1737 = vpop.f32.mrf.mxu0
    %v1738 = vadd.f32 %v1536, %v1737
    %v1739 = vpop.f32.mrf.mxu0
    %v1740 = vadd.f32 %v1540, %v1739
    %v1741 = vpop.f32.mrf.mxu0
    %v1742 = vpop.f32.mrf.mxu0
    %1743 = vdwg.mxu0
    %v1744 = vadd.f32 %v1738, %v1164
    %v1745 = vadd.f32 %v1740, %v1165
    %v1746 = vld [vmem:[%s55] sm:$0x3]
    %v1747 = vld [vmem:[%s57] sm:$0x3]
    %v1748 = vld [vmem:[%s59] sm:$0xf]
    %v1749 = vld [vmem:[%s59 + $0x4] sm:$0xf]
    %v1750 = vld [vmem:[%s59 + $0x8] sm:$0xf]
    %v1751 = vld [vmem:[%s59 + $0xc] sm:$0xf]
    %v1752 = vld [vmem:[%s59 + $0x10] sm:$0xf]
    %v1753 = vld [vmem:[%s59 + $0x14] sm:$0xf]
    %v1754 = vld [vmem:[%s59 + $0x18] sm:$0xf]
    %v1755 = vld [vmem:[%s59 + $0x1c] sm:$0xf]
    %v1756 = vld [vmem:[%s59 + $0x20] sm:$0xf]
    %v1757 = vld [vmem:[%s59 + $0x24] sm:$0xf]
    %v1758 = vld [vmem:[%s59 + $0x28] sm:$0xf]
    %v1759 = vld [vmem:[%s59 + $0x2c] sm:$0xf]
    %v1760 = vld [vmem:[%s59 + $0x30] sm:$0xf]
    %v1761 = vld [vmem:[%s59 + $0x34] sm:$0xf]
    %v1762 = vld [vmem:[%s59 + $0x38] sm:$0xf]
    %v1763 = vld [vmem:[%s59 + $0x3c] sm:$0xf]
    %v1764 = vld [vmem:[%s59 + $0x40] sm:$0xf]
    %v1765 = vld [vmem:[%s59 + $0x44] sm:$0xf]
    %v1766 = vld [vmem:[%s59 + $0x48] sm:$0xf]
    %v1767 = vld [vmem:[%s59 + $0x4c] sm:$0xf]
    %v1768 = vld [vmem:[%s59 + $0x50] sm:$0xf]
    %v1769 = vld [vmem:[%s59 + $0x54] sm:$0xf]
    %v1770 = vld [vmem:[%s59 + $0x58] sm:$0xf]
    %v1771 = vld [vmem:[%s59 + $0x5c] sm:$0xf]
    %v1772 = vld [vmem:[%s59 + $0x60] sm:$0xf]
    %v1773 = vld [vmem:[%s59 + $0x64] sm:$0xf]
    %v1774 = vld [vmem:[%s59 + $0x68] sm:$0xf]
    %v1775 = vld [vmem:[%s59 + $0x6c] sm:$0xf]
    %v1776 = vld [vmem:[%s59 + $0x70] sm:$0xf]
    %v1777 = vld [vmem:[%s59 + $0x74] sm:$0xf]
    %v1778 = vld [vmem:[%s59 + $0x78] sm:$0xf]
    %v1779 = vld [vmem:[%s59 + $0x7c] sm:$0xf]
    %v1780 = vld [vmem:[%s61] sm:$0x1]
    %v1782 = vlaneseq
    %v1783 = vshrl.u32 %v1782, 7
    %v1784 = vsub.s32 0, %v1783
    %v1785 = vrot.slane %v1746, %v1784
    %v1786 = vlaneseq
    %v1787 = vshrl.u32 %v1786, 7
    %v1788 = vsub.s32 1, %v1787
    %v1789 = vrot.slane %v1746, %v1788
    %v1792 = vmul.f32 %v1744, %v1785
    %v1793 = vmul.f32 %v1745, %v1789
    %v1795 = vlaneseq
    %v1796 = vshrl.u32 %v1795, 7
    %v1797 = vsub.s32 0, %v1796
    %v1798 = vrot.slane %v1747, %v1797
    %v1799 = vlaneseq
    %v1800 = vshrl.u32 %v1799, 7
    %v1801 = vsub.s32 1, %v1800
    %v1802 = vrot.slane %v1747, %v1801
    %v1805 = vadd.f32 %v1792, %v1798
    %v1806 = vadd.f32 %v1793, %v1802
    %v1807 = vxor.u32 %v1805, 2147483648
    %v1808 = vxor.u32 %v1806, 2147483648
    %v1809 = vmul.f32 %v1807, 1.442695
    %v1810 = vpow.pop %v1809
    %v1811 = vmul.f32 %v1808, 1.442695
    %v1812 = vpow.pop %v1811
    %v1813 = vadd.f32 %v1810, 1.0
    %v1814 = vadd.f32 %v1812, 1.0
    %v1815 = vrcp.pop %v1813
    %v1816 = vmul.f32 1.0, %v1815
    %v1817 = vrcp.pop %v1814
    %v1818 = vmul.f32 1.0, %v1817
    %v1819 = vmul.f32 %v1805, %v1816
    %v1820 = vmul.f32 %v1806, %v1818
    %v1821 = vpack.c.bf16 %v1819, %v1819
    %v1822 = vpack.c.bf16 %v1820, %v1820
    %v1824 = vlaneseq
    %v1825 = vshrl.u32 %v1824, 7
    %v1826 = vsub.s32 0, %v1825
    %v1827 = vrot.slane %v1780, %v1826
    %v1861 = vunpack.c.l.b16 %v1748
    %v1862 = vunpack.c.l.b16 %v1749
    %v1863 = vunpack.c.l.b16 %v1750
    %v1864 = vunpack.c.l.b16 %v1751
    %v1865 = vunpack.c.l.b16 %v1752
    %v1866 = vunpack.c.l.b16 %v1753
    %v1867 = vunpack.c.l.b16 %v1754
    %v1868 = vunpack.c.l.b16 %v1755
    %v1869 = vunpack.c.l.b16 %v1756
    %v1870 = vunpack.c.l.b16 %v1757
    %v1871 = vunpack.c.l.b16 %v1758
    %v1872 = vunpack.c.l.b16 %v1759
    %v1873 = vunpack.c.l.b16 %v1760
    %v1874 = vunpack.c.l.b16 %v1761
    %v1875 = vunpack.c.l.b16 %v1762
    %v1876 = vunpack.c.l.b16 %v1763
    %v1877 = vunpack.c.l.b16 %v1764
    %v1878 = vunpack.c.l.b16 %v1765
    %v1879 = vunpack.c.l.b16 %v1766
    %v1880 = vunpack.c.l.b16 %v1767
    %v1881 = vunpack.c.l.b16 %v1768
    %v1882 = vunpack.c.l.b16 %v1769
    %v1883 = vunpack.c.l.b16 %v1770
    %v1884 = vunpack.c.l.b16 %v1771
    %v1885 = vunpack.c.l.b16 %v1772
    %v1886 = vunpack.c.l.b16 %v1773
    %v1887 = vunpack.c.l.b16 %v1774
    %v1888 = vunpack.c.l.b16 %v1775
    %v1889 = vunpack.c.l.b16 %v1776
    %v1890 = vunpack.c.l.b16 %v1777
    %v1891 = vunpack.c.l.b16 %v1778
    %v1892 = vunpack.c.l.b16 %v1779
    %v1893 = vpack.c.b16 %v1862, %v1861
    %v1894 = vpack.c.b16 %v1864, %v1863
    %v1895 = vpack.c.b16 %v1866, %v1865
    %v1896 = vpack.c.b16 %v1868, %v1867
    %v1897 = vpack.c.b16 %v1870, %v1869
    %v1898 = vpack.c.b16 %v1872, %v1871
    %v1899 = vpack.c.b16 %v1874, %v1873
    %v1900 = vpack.c.b16 %v1876, %v1875
    %v1901 = vpack.c.b16 %v1878, %v1877
    %v1902 = vpack.c.b16 %v1880, %v1879
    %v1903 = vpack.c.b16 %v1882, %v1881
    %v1904 = vpack.c.b16 %v1884, %v1883
    %v1905 = vpack.c.b16 %v1886, %v1885
    %v1906 = vpack.c.b16 %v1888, %v1887
    %v1907 = vpack.c.b16 %v1890, %v1889
    %v1908 = vpack.c.b16 %v1892, %v1891
    %1925 = vmatprep.subr.bf16.mxu0 0
    %1926 = vmatpush1.bf16.msra.mxu0 %v1900
    %1927 = vmatprep.subr.bf16.mxu0 0
    %1928 = vmatpush1.bf16.msra.mxu0 %v1899
    %1929 = vmatprep.subr.bf16.mxu0 0
    %1930 = vmatpush1.bf16.msra.mxu0 %v1898
    %1931 = vmatprep.subr.bf16.mxu0 0
    %1932 = vmatpush1.bf16.msra.mxu0 %v1897
    %1933 = vmatprep.subr.bf16.mxu0 0
    %1934 = vmatpush1.bf16.msra.mxu0 %v1896
    %1935 = vmatprep.subr.bf16.mxu0 0
    %1936 = vmatpush1.bf16.msra.mxu0 %v1895
    %1937 = vmatprep.subr.bf16.mxu0 0
    %1938 = vmatpush1.bf16.msra.mxu0 %v1894
    %1939 = vmatprep.subr.bf16.mxu0 0
    %1940 = vmatpush1.bf16.msra.mxu0 %v1893
    %1941 = vmatprep.subr.bf16.mxu0 0
    %1942 = vmatpush2.bf16.msra.mxu0 %v1908
    %1943 = vmatprep.subr.bf16.mxu0 0
    %1944 = vmatpush2.bf16.msra.mxu0 %v1907
    %1945 = vmatprep.subr.bf16.mxu0 0
    %1946 = vmatpush2.bf16.msra.mxu0 %v1906
    %1947 = vmatprep.subr.bf16.mxu0 0
    %1948 = vmatpush2.bf16.msra.mxu0 %v1905
    %1949 = vmatprep.subr.bf16.mxu0 0
    %1950 = vmatpush2.bf16.msra.mxu0 %v1904
    %1951 = vmatprep.subr.bf16.mxu0 0
    %1952 = vmatpush2.bf16.msra.mxu0 %v1903
    %1953 = vmatprep.subr.bf16.mxu0 0
    %1954 = vmatpush2.bf16.msra.mxu0 %v1902
    %1955 = vmatprep.subr.bf16.mxu0 0
    %1956 = vmatpush2.bf16.msra.mxu0 %v1901
    %1957 = vmatprep.mubr.bf16.mxu0 %v1822
    %1958 = vmatmul.mubr.bf16.gmra.mxu0 %v1821
    %v1959 = vpop.f32.mrf.mxu0
    %v1960 = vadd.f32 %v1827, %v1959
    %v1961 = vpop.f32.mrf.mxu0
    %v1962 = vpop.f32.mrf.mxu0
    %v1963 = vpop.f32.mrf.mxu0
    %1964 = vdwg.mxu0
    %vm1965 = vcmask 19456
    %1966 = vst.msk [vmem:[#allocation2] sm:$0xf] %vm1965, %v1960
    // Predicated region
    $region126: #{_lambda_.13} parent=1 // pred_check
      _
    $region127: #{_lambda_.13} parent=1 // pred_check_branch
      %1968 = sbr.rel (0) target = $region129
    $region128: #{_lambda_.13} parent=1 // pred_region
      %s1970 = ssub.s32 64, 64
      %1971 = vsyncadd [#allocation3], %s1970
      %s1973 = sshll.u32 [#allocation2], 4
      %s1974 = int_to_ptr.vmem [resolvable:$true] %s1973
      %1976 = dma.vmem_to_hbm [thread:$0]  %s1974, 64, %s63, [#allocation3]
    $region129: #{_lambda_.13} parent=1 // pred_fallthru
      _
    // Predicated region
    $region130: #{_lambda_.13} parent=1 // pred_check
      _
    $region131: #{_lambda_.13} parent=1 // pred_check_branch
      %1978 = sbr.rel (0) target = $region133
    $region132: #{_lambda_.13} parent=1 // pred_region
      %1979 = dma.done [#allocation3], 64
    $region133: #{_lambda_.13} parent=1 // pred_fallthru
      _
    %1980 = vsyncpa [#allocation3], 1

</llo_original>
